<compile_context>
chip_gen: v6e
topology: v6e:2x2x1
jax: 0.10.0
libtpu: 0.0.40
codegen_flags: <defaults>
</compile_context>

<pallas_src>
import math

import numpy as np
import jax
import jax.numpy as jnp
from jax.experimental import pallas as pl
from jax.experimental.pallas import tpu as pltpu


# -----------------------------------------------------------------------------
# Deterministic weight init: NumPy port of bilinear_upsample_initializer +
# icnr_init from the PyTorch module (no randomness involved).
# -----------------------------------------------------------------------------
def bilinear_upsample_initializer_np(x):
    cc = x.shape[2] // 2
    cr = x.shape[3] // 2
    for i in range(x.shape[2]):
        for j in range(x.shape[3]):
            x[..., i, j] = math.hypot(cc - i, cr - j)
    y = 1.0 - x / x.sum(axis=(2, 3), keepdims=True)
    y = y / y.sum(axis=(2, 3), keepdims=True)
    return y


def icnr_init_np(weight_shape, upscale_factor=2):
    # weight_shape: (out_ch, in_ch, kh, kw) -- PyTorch OIHW conv weight
    new_shape = [weight_shape[0] // upscale_factor ** 2] + list(weight_shape[1:])
    sub = np.zeros(new_shape, dtype=np.float32)
    sub = bilinear_upsample_initializer_np(sub)
    sub = np.transpose(sub, (1, 0, 2, 3))
    sub = sub.reshape(sub.shape[0], sub.shape[1], -1)
    kernel = np.tile(sub, (1, 1, upscale_factor ** 2))
    transposed_shape = [weight_shape[1], weight_shape[0]] + list(weight_shape[2:])
    kernel = kernel.reshape(transposed_shape)
    kernel = np.transpose(kernel, (1, 0, 2, 3))
    return kernel.astype(np.float32)


# -----------------------------------------------------------------------------
# Wrapper-side weight folding.
#   smat[j, dw, ws, r*w + j] = 1  when ws = w + dw - 1 in [0, W)
#     (conv column tap dw, zero column padding, and pixel-shuffle column
#      interleave, all in one 0/1 matrix)
#   m_fold[co, i, dh, ci*W + ws, r*w + j]
#     = sum_{j, dw} weight[co*r^2 + i*r + j, ci, dh, dw] * smat[j, dw, ws, r*w+j]
#   emat[i, r*h + i, h] = 1   (pixel-shuffle row interleave)
# -----------------------------------------------------------------------------
def _fold_weights(weight_oihw, H, W, r):
    C = int(weight_oihw.shape[1])
    Cout = int(weight_oihw.shape[0]) // (r * r)

    smat = np.zeros((r, 3, W, r * W), np.float32)
    for j in range(r):
        for dw in range(3):
            for w in range(W):
                ws = w + dw - 1
                if 0 <= ws < W:
                    smat[j, dw, ws, r * w + j] = 1.0

    wr = jnp.asarray(weight_oihw, jnp.float32).reshape(Cout, r, r, C, 3, 3)
    # indices: o=co, i, j, c=ci, a=dh, b=dw, w=ws, k=output column
    m_fold = jnp.einsum('oijcab,jbwk->oiacwk', wr, jnp.asarray(smat),
                        precision=jax.lax.Precision.HIGHEST)
    m_fold = m_fold.reshape(Cout, r, 3, C * W, r * W)

    emat = np.zeros((r, r * H, H), np.float32)
    for i in range(r):
        emat[i, r * np.arange(H) + i, np.arange(H)] = 1.0
    return m_fold, jnp.asarray(emat)


# -----------------------------------------------------------------------------
# Fused Pallas kernel: 3x3 'same' conv (bias free) + PixelShuffle(r).
# One grid step = one image (all shuffled output channels).
# -----------------------------------------------------------------------------
def _conv_shuffle_kernel(x_ref, m_ref, emat_ref, o_ref, xp_ref):
    # x_ref    (1, C, H, W)             VMEM  one NCHW image (W on lanes)
    # m_ref    (Cout, r, 3, C*W, r*W)   VMEM  folded conv-weight x column-structure
    # emat_ref (r, r*H, H)              VMEM  0/1 pixel-shuffle row interleave
    # o_ref    (1, Cout, r*H, r*W)      VMEM  shuffled output for this image
    # xp_ref   (H+2, C*W)               VMEM  scratch: row-padded, lane-packed input
    C, H, W = x_ref.shape[1], x_ref.shape[2], x_ref.shape[3]
    Cout = o_ref.shape[1]
    r = emat_ref.shape[0]

    # --- in-kernel 'same' row padding + channel->lane packing (C small copies) ---
    zrow = jnp.zeros((1, C * W), jnp.float32)
    xp_ref[0:1, :] = zrow
    xp_ref[H + 1:H + 2, :] = zrow
    for ci in range(C):
        xp_ref[1:H + 1, ci * W:(ci + 1) * W] = x_ref[0, ci].astype(jnp.float32)

    # Hoist the 3 row-shifted LHS views (sublane-only slices), reused by every
    # (co, i) output plane.
    lhs = [xp_ref[dh:dh + H, :] for dh in range(3)]

    for co in range(Cout):
        plane = None
        for i in range(r):                       # sub-pixel row offset
            rows = None
            for dh in range(3):                  # conv row tap
                # Channel + column-tap + column-interleave contraction, one MXU
                # matmul with K = C*W.  HIGHEST keeps f32 parity with the XLA conv.
                part = jnp.dot(lhs[dh], m_ref[co, i, dh],
                               preferred_element_type=jnp.float32,
                               precision=jax.lax.Precision.HIGHEST)
                rows = part if rows is None else rows + part
            # Pixel-shuffle row interleave (0/1 matrix, rows h -> r*h + i).
            shuffled = jnp.dot(emat_ref[i], rows,
                               preferred_element_type=jnp.float32,
                               precision=jax.lax.Precision.HIGHEST)
            plane = shuffled if plane is None else plane + shuffled
        o_ref[0, co] = plane.astype(o_ref.dtype)


def depth_to_space_upsample2d(x_nchw, weight_oihw, scale_factor=2):
    """Forward pass of DepthToSpaceUpsample2d: pixel_shuffle(conv3x3(x)), fused."""
    N, C, H, W = x_nchw.shape
    r = int(scale_factor)
    assert C % (r * r) == 0
    Cout = C // (r * r)
    assert weight_oihw.shape == (C, C, 3, 3)

    m_fold, emat = _fold_weights(weight_oihw, H, W, r)

    # VMEM budget derived from the actual block sizes (double-buffer everything,
    # generous headroom) instead of a fixed constant.
    in_item = jnp.dtype(x_nchw.dtype).itemsize
    block_bytes = (
        2 * C * H * W * in_item                          # input block (x2 buffers)
        + 2 * Cout * r * 3 * (C * W) * (r * W) * 4       # folded weights
        + 2 * r * (r * H) * H * 4                        # row-interleave matrices
        + 2 * Cout * (r * H) * (r * W) * in_item         # output block (x2 buffers)
        + (H + 2) * (C * W) * 4                          # padded scratch
    )
    vmem_limit = int(min(64 * 1024 * 1024, max(16 * 1024 * 1024, 4 * block_bytes)))

    return pl.pallas_call(
        _conv_shuffle_kernel,
        out_shape=jax.ShapeDtypeStruct((N, Cout, r * H, r * W), x_nchw.dtype),
        grid=(N,),
        in_specs=[
            pl.BlockSpec((1, C, H, W), lambda n: (n, 0, 0, 0)),
            pl.BlockSpec((Cout, r, 3, C * W, r * W), lambda n: (0, 0, 0, 0, 0)),
            pl.BlockSpec((r, r * H, H), lambda n: (0, 0, 0)),
        ],
        out_specs=pl.BlockSpec((1, Cout, r * H, r * W), lambda n: (n, 0, 0, 0)),
        scratch_shapes=[pltpu.VMEM((H + 2, C * W), jnp.float32)],
        compiler_params=pltpu.CompilerParams(
            dimension_semantics=("parallel",),
            vmem_limit_bytes=vmem_limit,
        ),
    )(x_nchw, m_fold, emat)


# -----------------------------------------------------------------------------
# Pure-JAX reference (only used for the self-check below).
# -----------------------------------------------------------------------------
def _pixel_shuffle_nchw_ref(x, r):
    N, C, H, W = x.shape
    Co = C // (r * r)
    x = x.reshape(N, Co, r, r, H, W)
    x = jnp.transpose(x, (0, 1, 4, 2, 5, 3))
    return x.reshape(N, Co, H * r, W * r)


if __name__ == "__main__":
    in_channels = 4
    scale_factor = 2
    N, H, W = 2, 16, 16

    # Deterministic parameters per the module's __init__ (ICNR + bilinear init).
    weight = jnp.asarray(
        icnr_init_np((in_channels, in_channels, 3, 3), upscale_factor=scale_factor)
    )

    key = jax.random.PRNGKey(0)
    x = jax.random.normal(key, (N, in_channels, H, W), dtype=jnp.float32)

    out = depth_to_space_upsample2d(x, weight, scale_factor)
    out = jax.block_until_ready(out)
    assert out.shape == (N, in_channels // scale_factor ** 2,
                         H * scale_factor, W * scale_factor), out.shape

    # Reference check: XLA conv (f32 precision) + standalone pixel shuffle.
    # Both sides run at HIGHEST precision; remaining differences are pure f32
    # reassociation, so a tight 1e-4 tolerance is used (real indexing/shuffle
    # bugs give O(0.1-1) errors).
    ref_conv = jax.lax.conv_general_dilated(
        x, weight, window_strides=(1, 1), padding="SAME",
        dimension_numbers=("NCHW", "OIHW", "NCHW"),
        precision=jax.lax.Precision.HIGHEST)
    ref = _pixel_shuffle_nchw_ref(ref_conv, scale_factor)
    np.testing.assert_allclose(np.asarray(out), np.asarray(ref),
                               atol=1e-4, rtol=1e-4)

    print("KERNEL_OK")
</pallas_src>

<mosaic_0001>
module attributes {stable_mosaic.version = 11 : i64} {
  func.func @_conv_shuffle_kernel(%arg0: i32, %arg1: memref<1x4x16x16xf32, #tpu.memory_space<vmem>>, %arg2: memref<1x2x3x64x32xf32, #tpu.memory_space<vmem>>, %arg3: memref<2x32x16xf32, #tpu.memory_space<vmem>>, %arg4: memref<1x1x32x32xf32, #tpu.memory_space<vmem>>, %arg5: memref<18x64xf32, #tpu.memory_space<vmem>>) attributes {dimension_semantics = [#tpu.dimension_semantics<parallel>], iteration_bounds = array<i64: 2>, scalar_prefetch = 0 : i64, scratch_operands = 1 : i64, tpu.core_type = #tpu.core_type<tc>, window_params = [{transform_indices = @transform_0, window_bounds = array<i64: 1, 4, 16, 16>}, {pipeline_mode = #tpu.pipeline_mode<synchronous>, transform_indices = @transform_1, window_bounds = array<i64: 1, 2, 3, 64, 32>}, {pipeline_mode = #tpu.pipeline_mode<synchronous>, transform_indices = @transform_2, window_bounds = array<i64: 2, 32, 16>}, {transform_indices = @transform_3, window_bounds = array<i64: 1, 1, 32, 32>}]} {
    %cst = arith.constant 0.000000e+00 : f32
    %0 = vector.broadcast %cst : f32 to vector<1x64xf32>
    %c0 = arith.constant 0 : index
    %c0_0 = arith.constant 0 : index
    %1 = vector.load %arg5[%c0, %c0_0] : memref<18x64xf32, #tpu.memory_space<vmem>>, vector<1x64xf32>
    tpu.vector_store %arg5[%c0, %c0_0], %0 {strides = array<i32>} : memref<18x64xf32, #tpu.memory_space<vmem>>, vector<1x64xf32>,
    %c17 = arith.constant 17 : index
    %c0_1 = arith.constant 0 : index
    %2 = vector.load %arg5[%c17, %c0_1] : memref<18x64xf32, #tpu.memory_space<vmem>>, vector<1x64xf32>
    tpu.vector_store %arg5[%c17, %c0_1], %0 {strides = array<i32>} : memref<18x64xf32, #tpu.memory_space<vmem>>, vector<1x64xf32>,
    %c0_2 = arith.constant 0 : index
    %c0_3 = arith.constant 0 : index
    %c0_4 = arith.constant 0 : index
    %c0_5 = arith.constant 0 : index
    %3 = vector.load %arg1[%c0_2, %c0_3, %c0_4, %c0_5] : memref<1x4x16x16xf32, #tpu.memory_space<vmem>>, vector<1x1x16x16xf32>
    %4 = vector.shape_cast %3 : vector<1x1x16x16xf32> to vector<16x16xf32>
    %c1 = arith.constant 1 : index
    %c0_6 = arith.constant 0 : index
    %5 = vector.load %arg5[%c1, %c0_6] : memref<18x64xf32, #tpu.memory_space<vmem>>, vector<16x16xf32>
    tpu.vector_store %arg5[%c1, %c0_6], %4 {strides = array<i32>} : memref<18x64xf32, #tpu.memory_space<vmem>>, vector<16x16xf32>,
    %c0_7 = arith.constant 0 : index
    %c1_8 = arith.constant 1 : index
    %c0_9 = arith.constant 0 : index
    %c0_10 = arith.constant 0 : index
    %6 = vector.load %arg1[%c0_7, %c1_8, %c0_9, %c0_10] : memref<1x4x16x16xf32, #tpu.memory_space<vmem>>, vector<1x1x16x16xf32>
    %7 = vector.shape_cast %6 : vector<1x1x16x16xf32> to vector<16x16xf32>
    %c1_11 = arith.constant 1 : index
    %c16 = arith.constant 16 : index
    %8 = vector.load %arg5[%c1_11, %c16] : memref<18x64xf32, #tpu.memory_space<vmem>>, vector<16x16xf32>
    tpu.vector_store %arg5[%c1_11, %c16], %7 {strides = array<i32>} : memref<18x64xf32, #tpu.memory_space<vmem>>, vector<16x16xf32>,
    %c0_12 = arith.constant 0 : index
    %c2 = arith.constant 2 : index
    %c0_13 = arith.constant 0 : index
    %c0_14 = arith.constant 0 : index
    %9 = vector.load %arg1[%c0_12, %c2, %c0_13, %c0_14] : memref<1x4x16x16xf32, #tpu.memory_space<vmem>>, vector<1x1x16x16xf32>
    %10 = vector.shape_cast %9 : vector<1x1x16x16xf32> to vector<16x16xf32>
    %c1_15 = arith.constant 1 : index
    %c32 = arith.constant 32 : index
    %11 = vector.load %arg5[%c1_15, %c32] : memref<18x64xf32, #tpu.memory_space<vmem>>, vector<16x16xf32>
    tpu.vector_store %arg5[%c1_15, %c32], %10 {strides = array<i32>} : memref<18x64xf32, #tpu.memory_space<vmem>>, vector<16x16xf32>,
    %c0_16 = arith.constant 0 : index
    %c3 = arith.constant 3 : index
    %c0_17 = arith.constant 0 : index
    %c0_18 = arith.constant 0 : index
    %12 = vector.load %arg1[%c0_16, %c3, %c0_17, %c0_18] : memref<1x4x16x16xf32, #tpu.memory_space<vmem>>, vector<1x1x16x16xf32>
    %13 = vector.shape_cast %12 : vector<1x1x16x16xf32> to vector<16x16xf32>
    %c1_19 = arith.constant 1 : index
    %c48 = arith.constant 48 : index
    %14 = vector.load %arg5[%c1_19, %c48] : memref<18x64xf32, #tpu.memory_space<vmem>>, vector<16x16xf32>
    tpu.vector_store %arg5[%c1_19, %c48], %13 {strides = array<i32>} : memref<18x64xf32, #tpu.memory_space<vmem>>, vector<16x16xf32>,
    %c0_20 = arith.constant 0 : index
    %c0_21 = arith.constant 0 : index
    %15 = vector.load %arg5[%c0_20, %c0_21] : memref<18x64xf32, #tpu.memory_space<vmem>>, vector<16x64xf32>
    %c1_22 = arith.constant 1 : index
    %c0_23 = arith.constant 0 : index
    %16 = vector.load %arg5[%c1_22, %c0_23] : memref<18x64xf32, #tpu.memory_space<vmem>>, vector<16x64xf32>
    %c2_24 = arith.constant 2 : index
    %c0_25 = arith.constant 0 : index
    %17 = vector.load %arg5[%c2_24, %c0_25] : memref<18x64xf32, #tpu.memory_space<vmem>>, vector<16x64xf32>
    %c0_26 = arith.constant 0 : index
    %c0_27 = arith.constant 0 : index
    %c0_28 = arith.constant 0 : index
    %c0_29 = arith.constant 0 : index
    %c0_30 = arith.constant 0 : index
    %18 = vector.load %arg2[%c0_26, %c0_27, %c0_28, %c0_29, %c0_30] : memref<1x2x3x64x32xf32, #tpu.memory_space<vmem>>, vector<1x1x1x64x32xf32>
    %19 = vector.shape_cast %18 : vector<1x1x1x64x32xf32> to vector<64x32xf32>
    %cst_31 = arith.constant dense<0.000000e+00> : vector<16x32xf32>
    %20 = tpu.matmul %15, %19, %cst_31 {dimension_numbers = #tpu.dot_dimension_numbers<[1], [0], [0], [1], [0, 0, 1, 1], [], []>, precision = #tpu.contract_precision<fp32>} : vector<16x64xf32>, vector<64x32xf32>, vector<16x32xf32> -> vector<16x32xf32>
    %c0_32 = arith.constant 0 : index
    %c0_33 = arith.constant 0 : index
    %c1_34 = arith.constant 1 : index
    %c0_35 = arith.constant 0 : index
    %c0_36 = arith.constant 0 : index
    %21 = vector.load %arg2[%c0_32, %c0_33, %c1_34, %c0_35, %c0_36] : memref<1x2x3x64x32xf32, #tpu.memory_space<vmem>>, vector<1x1x1x64x32xf32>
    %22 = vector.shape_cast %21 : vector<1x1x1x64x32xf32> to vector<64x32xf32>
    %cst_37 = arith.constant dense<0.000000e+00> : vector<16x32xf32>
    %23 = tpu.matmul %16, %22, %cst_37 {dimension_numbers = #tpu.dot_dimension_numbers<[1], [0], [0], [1], [0, 0, 1, 1], [], []>, precision = #tpu.contract_precision<fp32>} : vector<16x64xf32>, vector<64x32xf32>, vector<16x32xf32> -> vector<16x32xf32>
    %24 = arith.addf %20, %23 : vector<16x32xf32>
    %c0_38 = arith.constant 0 : index
    %c0_39 = arith.constant 0 : index
    %c2_40 = arith.constant 2 : index
    %c0_41 = arith.constant 0 : index
    %c0_42 = arith.constant 0 : index
    %25 = vector.load %arg2[%c0_38, %c0_39, %c2_40, %c0_41, %c0_42] : memref<1x2x3x64x32xf32, #tpu.memory_space<vmem>>, vector<1x1x1x64x32xf32>
    %26 = vector.shape_cast %25 : vector<1x1x1x64x32xf32> to vector<64x32xf32>
    %cst_43 = arith.constant dense<0.000000e+00> : vector<16x32xf32>
    %27 = tpu.matmul %17, %26, %cst_43 {dimension_numbers = #tpu.dot_dimension_numbers<[1], [0], [0], [1], [0, 0, 1, 1], [], []>, precision = #tpu.contract_precision<fp32>} : vector<16x64xf32>, vector<64x32xf32>, vector<16x32xf32> -> vector<16x32xf32>
    %28 = arith.addf %24, %27 : vector<16x32xf32>
    %c0_44 = arith.constant 0 : index
    %c0_45 = arith.constant 0 : index
    %c0_46 = arith.constant 0 : index
    %29 = vector.load %arg3[%c0_44, %c0_45, %c0_46] : memref<2x32x16xf32, #tpu.memory_space<vmem>>, vector<1x32x16xf32>
    %30 = vector.shape_cast %29 : vector<1x32x16xf32> to vector<32x16xf32>
    %cst_47 = arith.constant dense<0.000000e+00> : vector<32x32xf32>
    %31 = tpu.matmul %30, %28, %cst_47 {dimension_numbers = #tpu.dot_dimension_numbers<[1], [0], [0], [1], [0, 0, 1, 1], [], []>, precision = #tpu.contract_precision<fp32>} : vector<32x16xf32>, vector<16x32xf32>, vector<32x32xf32> -> vector<32x32xf32>
    %c0_48 = arith.constant 0 : index
    %c1_49 = arith.constant 1 : index
    %c0_50 = arith.constant 0 : index
    %c0_51 = arith.constant 0 : index
    %c0_52 = arith.constant 0 : index
    %32 = vector.load %arg2[%c0_48, %c1_49, %c0_50, %c0_51, %c0_52] : memref<1x2x3x64x32xf32, #tpu.memory_space<vmem>>, vector<1x1x1x64x32xf32>
    %33 = vector.shape_cast %32 : vector<1x1x1x64x32xf32> to vector<64x32xf32>
    %cst_53 = arith.constant dense<0.000000e+00> : vector<16x32xf32>
    %34 = tpu.matmul %15, %33, %cst_53 {dimension_numbers = #tpu.dot_dimension_numbers<[1], [0], [0], [1], [0, 0, 1, 1], [], []>, precision = #tpu.contract_precision<fp32>} : vector<16x64xf32>, vector<64x32xf32>, vector<16x32xf32> -> vector<16x32xf32>
    %c0_54 = arith.constant 0 : index
    %c1_55 = arith.constant 1 : index
    %c1_56 = arith.constant 1 : index
    %c0_57 = arith.constant 0 : index
    %c0_58 = arith.constant 0 : index
    %35 = vector.load %arg2[%c0_54, %c1_55, %c1_56, %c0_57, %c0_58] : memref<1x2x3x64x32xf32, #tpu.memory_space<vmem>>, vector<1x1x1x64x32xf32>
    %36 = vector.shape_cast %35 : vector<1x1x1x64x32xf32> to vector<64x32xf32>
    %cst_59 = arith.constant dense<0.000000e+00> : vector<16x32xf32>
    %37 = tpu.matmul %16, %36, %cst_59 {dimension_numbers = #tpu.dot_dimension_numbers<[1], [0], [0], [1], [0, 0, 1, 1], [], []>, precision = #tpu.contract_precision<fp32>} : vector<16x64xf32>, vector<64x32xf32>, vector<16x32xf32> -> vector<16x32xf32>
    %38 = arith.addf %34, %37 : vector<16x32xf32>
    %c0_60 = arith.constant 0 : index
    %c1_61 = arith.constant 1 : index
    %c2_62 = arith.constant 2 : index
    %c0_63 = arith.constant 0 : index
    %c0_64 = arith.constant 0 : index
    %39 = vector.load %arg2[%c0_60, %c1_61, %c2_62, %c0_63, %c0_64] : memref<1x2x3x64x32xf32, #tpu.memory_space<vmem>>, vector<1x1x1x64x32xf32>
    %40 = vector.shape_cast %39 : vector<1x1x1x64x32xf32> to vector<64x32xf32>
    %cst_65 = arith.constant dense<0.000000e+00> : vector<16x32xf32>
    %41 = tpu.matmul %17, %40, %cst_65 {dimension_numbers = #tpu.dot_dimension_numbers<[1], [0], [0], [1], [0, 0, 1, 1], [], []>, precision = #tpu.contract_precision<fp32>} : vector<16x64xf32>, vector<64x32xf32>, vector<16x32xf32> -> vector<16x32xf32>
    %42 = arith.addf %38, %41 : vector<16x32xf32>
    %c1_66 = arith.constant 1 : index
    %c0_67 = arith.constant 0 : index
    %c0_68 = arith.constant 0 : index
    %43 = vector.load %arg3[%c1_66, %c0_67, %c0_68] : memref<2x32x16xf32, #tpu.memory_space<vmem>>, vector<1x32x16xf32>
    %44 = vector.shape_cast %43 : vector<1x32x16xf32> to vector<32x16xf32>
    %cst_69 = arith.constant dense<0.000000e+00> : vector<32x32xf32>
    %45 = tpu.matmul %44, %42, %cst_69 {dimension_numbers = #tpu.dot_dimension_numbers<[1], [0], [0], [1], [0, 0, 1, 1], [], []>, precision = #tpu.contract_precision<fp32>} : vector<32x16xf32>, vector<16x32xf32>, vector<32x32xf32> -> vector<32x32xf32>
    %46 = arith.addf %31, %45 : vector<32x32xf32>
    %c0_70 = arith.constant 0 : index
    %c0_71 = arith.constant 0 : index
    %c0_72 = arith.constant 0 : index
    %c0_73 = arith.constant 0 : index
    %47 = vector.load %arg4[%c0_70, %c0_71, %c0_72, %c0_73] : memref<1x1x32x32xf32, #tpu.memory_space<vmem>>, vector<1x1x32x32xf32>
    %48 = vector.shape_cast %47 : vector<1x1x32x32xf32> to vector<32x32xf32>
    %49 = vector.shape_cast %46 : vector<32x32xf32> to vector<1x1x32x32xf32>
    tpu.vector_store %arg4[%c0_70, %c0_71, %c0_72, %c0_73], %49 {strides = array<i32>} : memref<1x1x32x32xf32, #tpu.memory_space<vmem>>, vector<1x1x32x32xf32>,
    return
  }
  func.func @transform_0(%arg0: i32) -> (i32, i32, i32, i32) {
    %c0_i32 = arith.constant 0 : i32
    %c0_i32_0 = arith.constant 0 : i32
    %c0_i32_1 = arith.constant 0 : i32
    %c0_i32_2 = arith.constant 0 : i32
    return %arg0, %c0_i32, %c0_i32_0, %c0_i32_1 : i32, i32, i32, i32
  }
  func.func @transform_1(%arg0: i32) -> (i32, i32, i32, i32, i32) {
    %c0_i32 = arith.constant 0 : i32
    %c0_i32_0 = arith.constant 0 : i32
    %c0_i32_1 = arith.constant 0 : i32
    %c0_i32_2 = arith.constant 0 : i32
    %c0_i32_3 = arith.constant 0 : i32
    %c0_i32_4 = arith.constant 0 : i32
    return %c0_i32, %c0_i32_0, %c0_i32_1, %c0_i32_2, %c0_i32_3 : i32, i32, i32, i32, i32
  }
  func.func @transform_2(%arg0: i32) -> (i32, i32, i32) {
    %c0_i32 = arith.constant 0 : i32
    %c0_i32_0 = arith.constant 0 : i32
    %c0_i32_1 = arith.constant 0 : i32
    %c0_i32_2 = arith.constant 0 : i32
    return %c0_i32, %c0_i32_0, %c0_i32_1 : i32, i32, i32
  }
  func.func @transform_3(%arg0: i32) -> (i32, i32, i32, i32) {
    %c0_i32 = arith.constant 0 : i32
    %c0_i32_0 = arith.constant 0 : i32
    %c0_i32_1 = arith.constant 0 : i32
    %c0_i32_2 = arith.constant 0 : i32
    return %arg0, %c0_i32, %c0_i32_0, %c0_i32_1 : i32, i32, i32, i32
  }
}

</mosaic_0001>

<llo_original>
// kernel: tpu_custom_call.1
$region0: #{tpu_custom_call.1}
  #allocation0 [shape = 'u32[]', space=smem, size = 0x4, offset = 0x4, fixed_abs, tag = 'smem constant byte address 0x4 - core index']
  #allocation1 [shape = 'u32[144,128]{1,0:T(1,128)}', space=vmem, size = 0x12000, scoped, tag = 'internal scratch']
  #allocation2 [shape = 'f32[18,64]{1,0:T(8,128)}', space=vmem, size = 0x3000, scoped, tag = 'scratch operand']
  %s0 = inlined_call_operand.vmem [shape: f32[2,4,16,16], index: 0, kind: input, shape index: {}]
  %s1 = inlined_call_operand.vmem [shape: f32[1,2,3,64,32], index: 1, kind: input, shape index: {}]
  %s2 = inlined_call_operand.vmem [shape: f32[2,32,16], index: 2, kind: input, shape index: {}]
  %s3 = inlined_call_operand.hbm [shape: f32[2,1,32,32], index: 3, kind: output, shape index: {}]
  %s4 = sld [smem:[#allocation0]]
  $region45: #{tpu_custom_call.1} parent=0
    _
  %s6 = ssub.s32 1, %s4
  %s7 = scalar_select 0, %s6, %s4
  $region1: #{tpu_custom_call.1} parent=0
    #allocation3 [shape = 'u8[32768]{0}', space=vmem, size = 0x8000, scoped, tag = 'output window, operand 0']
    #allocation4 [shape = 's32[2]{0}', space=sflag, size = 0x8, scoped, tag = 'scoped memory for tpu_custom_call.1']
    %8 = vsyncpa [#allocation4], 0
    %s9 = scalar_lea.sflag [#allocation4], 1
    %10 = vsyncpa %s9, 0
    loop: start=0, step=1, limit=4
    $region2: #{tpu_custom_call.1} parent=1 // loop_pre_header
      _
    $region3: #{tpu_custom_call.1} parent=1 // loop_header
      %s12 = sphi 0, %s16
      %p13 = scmp.ge.s32.totalorder %s12, 4
      %s22 = sphi 0, %s24
      %s25 = sphi 0, %s22
      %s26 = sphi 0, %s25
      %s42 = sphi 0, %s26
      %s46 = sphi 0, %s46
      %s48 = sphi 0, %s46
      %s49 = sphi 0, %s48
      %s63 = sphi 0, %s49
      %s67 = sphi 0, %s67
      %s69 = sphi 0, %s67
      %s70 = sphi 0, %s69
      %s84 = sphi 0, %s70
      %s90 = sphi 0, %s92
      %s93 = sphi 0, %s90
      %s94 = sphi 0, %s93
      %s110 = sphi 0, %s94
    $region4: #{tpu_custom_call.1} parent=1 // loop_header_branch
      %15 = sbr.rel (%p13) target = $region8
    $region5: #{tpu_custom_call.1} parent=1 // loop_body
      %s17 = ssub.s32 %s12, 1
      %s18 = ssub.s32 %s12, 2
      %s19 = sadd.s32 %s12, 1
      %s20 = ssub.s32 %s12, %s19
      %p21 = scmp.eq.s32.totalorder %s20, 0
      %s23 = sadd.s32 %s22, 1
      %s24 = scalar_select %p21, %s22, %s23
      %p27 = pneg %p21
      %p28 = scmp.eq.s32.totalorder %s12, 1
      %p29 = por %p27, %p28
      %p30 = scmp.ne.s32.totalorder %s22, %s25
      %p31 = scmp.eq.s32.totalorder %s12, 0
      %p32 = por %p30, %p31
      %p33 = scmp.ne.s32.totalorder %s22, %s25
      %p34 = scmp.eq.s32.totalorder %s17, 1
      %p35 = por %p33, %p34
      %p36 = scmp.ne.s32.totalorder %s25, %s26
      %p37 = scmp.eq.s32.totalorder %s17, 0
      %p38 = por %p36, %p37
      %p39 = scmp.ne.s32.totalorder %s25, %s26
      %p40 = scmp.eq.s32.totalorder %s18, 1
      %p41 = por %p39, %p40
      %p43 = scmp.ne.s32.totalorder %s26, %s42
      %p44 = scmp.eq.s32.totalorder %s18, 0
      %p45 = por %p43, %p44
      %s47 = sadd.s32 %s46, 1
      %p50 = scmp.eq.s32.totalorder %s12, 1
      %p51 = scmp.ne.s32.totalorder %s46, %s48
      %p52 = scmp.eq.s32.totalorder %s12, 0
      %p53 = por %p51, %p52
      %p54 = scmp.ne.s32.totalorder %s46, %s48
      %p55 = scmp.eq.s32.totalorder %s17, 1
      %p56 = por %p54, %p55
      %p57 = scmp.ne.s32.totalorder %s48, %s49
      %p58 = scmp.eq.s32.totalorder %s17, 0
      %p59 = por %p57, %p58
      %p60 = scmp.ne.s32.totalorder %s48, %s49
      %p61 = scmp.eq.s32.totalorder %s18, 1
      %p62 = por %p60, %p61
      %p64 = scmp.ne.s32.totalorder %s49, %s63
      %p65 = scmp.eq.s32.totalorder %s18, 0
      %p66 = por %p64, %p65
      %s68 = sadd.s32 %s67, 1
      %p71 = scmp.eq.s32.totalorder %s12, 1
      %p72 = scmp.ne.s32.totalorder %s67, %s69
      %p73 = scmp.eq.s32.totalorder %s12, 0
      %p74 = por %p72, %p73
      %p75 = scmp.ne.s32.totalorder %s67, %s69
      %p76 = scmp.eq.s32.totalorder %s17, 1
      %p77 = por %p75, %p76
      %p78 = scmp.ne.s32.totalorder %s69, %s70
      %p79 = scmp.eq.s32.totalorder %s17, 0
      %p80 = por %p78, %p79
      %p81 = scmp.ne.s32.totalorder %s69, %s70
      %p82 = scmp.eq.s32.totalorder %s18, 1
      %p83 = por %p81, %p82
      %p85 = scmp.ne.s32.totalorder %s70, %s84
      %p86 = scmp.eq.s32.totalorder %s18, 0
      %p87 = por %p85, %p86
      %s88 = ssub.s32 %s12, %s19
      %p89 = scmp.eq.s32.totalorder %s88, 0
      %s91 = sadd.s32 %s90, 1
      %s92 = scalar_select %p89, %s90, %s91
      %p95 = pneg %p89
      %p96 = scmp.eq.s32.totalorder %s12, 1
      %p97 = por %p95, %p96
      %p98 = scmp.ne.s32.totalorder %s90, %s93
      %p99 = scmp.eq.s32.totalorder %s12, 0
      %p100 = por %p98, %p99
      %p101 = scmp.ne.s32.totalorder %s90, %s93
      %p102 = scmp.eq.s32.totalorder %s17, 1
      %p103 = por %p101, %p102
      %p104 = scmp.ne.s32.totalorder %s93, %s94
      %p105 = scmp.eq.s32.totalorder %s17, 0
      %p106 = por %p104, %p105
      %p107 = scmp.ne.s32.totalorder %s93, %s94
      %p108 = scmp.eq.s32.totalorder %s18, 1
      %p109 = por %p107, %p108
      %p111 = scmp.ne.s32.totalorder %s94, %s110
      %p112 = scmp.eq.s32.totalorder %s18, 0
      %p113 = por %p111, %p112
      %p114 = scmp.le.s32.totalorder 1, %s12
      %p115 = scmp.lt.s32.totalorder %s12, 3
      %p116 = pnand %p114, %p115
      %p117 = pneg %p116
      // Predicated region
      $region9: #{tpu_custom_call.1} parent=5 // pred_check
        _
      $region10: #{tpu_custom_call.1} parent=5 // pred_check_branch
        %119 = sbr.rel (%p116) target = $region12
      $region11: #{tpu_custom_call.1} parent=5 // pred_region
        %s120 = ssub.s32 %s12, 1
        // Predicated region
        $region13: #{tpu_custom_call.1} parent=11 // pred_check
          %p121 = pneg %p59
        $region14: #{tpu_custom_call.1} parent=11 // pred_check_branch
          %123 = sbr.rel (%p121) target = $region16
        $region15: #{tpu_custom_call.1} parent=11 // pred_region
          _
        $region16: #{tpu_custom_call.1} parent=11 // pred_fallthru
          _
        // Predicated region
        $region17: #{tpu_custom_call.1} parent=11 // pred_check
          %p124 = pneg %p80
        $region18: #{tpu_custom_call.1} parent=11 // pred_check_branch
          %126 = sbr.rel (%p124) target = $region20
        $region19: #{tpu_custom_call.1} parent=11 // pred_region
          _
        $region20: #{tpu_custom_call.1} parent=11 // pred_fallthru
          _
      $region12: #{tpu_custom_call.1} parent=5 // pred_fallthru
        _
      %p127 = scmp.lt.s32.totalorder %s12, 2
      // Predicated region
      $region21: #{tpu_custom_call.1} parent=5 // pred_check
        %p128 = pneg %p127
      $region22: #{tpu_custom_call.1} parent=5 // pred_check_branch
        %130 = sbr.rel (%p128) target = $region24
      $region23: #{tpu_custom_call.1} parent=5 // pred_region
        // Predicated region
        $region25: #{tpu_custom_call.1} parent=23 // pred_check
          %p131 = pneg %p32
        $region26: #{tpu_custom_call.1} parent=23 // pred_check_branch
          %133 = sbr.rel (%p131) target = $region28
        $region27: #{tpu_custom_call.1} parent=23 // pred_region
          %p134 = scmp.lt.s32.totalorder %s12, 1
          %s135 = scalar_select %p134, %s12, 1
          %s136 = smul.addr %s135, 8
          %s137 = smul.addr %s136, 8
          %s138 = scalar_lea.vmem %s0, %s137
        $region28: #{tpu_custom_call.1} parent=23 // pred_fallthru
          _
      $region24: #{tpu_custom_call.1} parent=5 // pred_fallthru
        _
      %p139 = scmp.le.s32.totalorder 1, %s12
      %p140 = scmp.lt.s32.totalorder %s12, 3
      %p141 = pnand %p139, %p140
      %p142 = pneg %p141
      // Predicated region
      $region29: #{tpu_custom_call.1} parent=5 // pred_check
        _
      $region30: #{tpu_custom_call.1} parent=5 // pred_check_branch
        %144 = sbr.rel (%p141) target = $region32
      $region31: #{tpu_custom_call.1} parent=5 // pred_region
        %s145 = ssub.s32 %s12, 1
        %p146 = scmp.lt.s32.totalorder %s17, 1
        %s147 = scalar_select %p146, %s17, 1
        %s148 = smul.addr %s147, 8
        %s149 = smul.addr %s148, 8
        %s150 = scalar_lea.vmem %s0, %s149
        %p151 = pneg %p38
        %p152 = pneg %p35
        %p153 = pneg %p59
        %p154 = pneg %p56
        %p155 = pneg %p80
        %p156 = pneg %p77
        %p157 = pneg %p106
        %p158 = pneg %p103
        %s159 = sand.u32 %s93, 1
        %s160 = scalar_lea.sflag [#allocation4], %s159
        %s161 = sand.u32 %s93, 1
        %s162 = smul.addr %s161, 32
        %s163 = scalar_lea.vmem [#allocation3], %s162
        %p164 = scmp.lt.s32.totalorder %s17, 1
        %s165 = scalar_select %p164, %s17, 1
        %s166 = smul.addr %s165, 8
        %s167 = smul.addr %s166, 8
        %s168 = scalar_lea.vmem %s0, %s167
        %vm169 = vcmask 516096
        %170 = vst.msk [vmem:[#allocation2] sm:$0x1] %vm169, 0.0
        %171 = vst.msk [vmem:[#allocation2 + $0x11] sm:$0x1] %vm169, 0.0
        %v172 = vld [vmem:[%s168] sm:$0xff]
        %v173 = vld [vmem:[%s168 + $0x8] sm:$0xff]
        %vm174 = vcmask 130048
        %175 = vst.msk [vmem:[#allocation2 + $0x1] sm:$0xff] %vm174, %v172
        %176 = vst.msk [vmem:[#allocation2 + $0x9] sm:$0xff] %vm174, %v173
        %s177 = scalar_lea.vmem %s168, 16
        %v178 = vld [vmem:[%s177] sm:$0xff]
        %v179 = vld [vmem:[%s177 + $0x8] sm:$0xff]
        %182 = vrot.lane.b32.xlu0 %v178, 16
        %v183 = vpop.permute.xlu0 %182
        %184 = vrot.lane.b32.xlu0 %v179, 16
        %v185 = vpop.permute.xlu0 %184
        %vm188 = vcmask 261248
        %189 = vst.msk [vmem:[#allocation2 + $0x1] sm:$0xff] %vm188, %v183
        %190 = vst.msk [vmem:[#allocation2 + $0x9] sm:$0xff] %vm188, %v185
        %s191 = scalar_lea.vmem %s168, 32
        %v192 = vld [vmem:[%s191] sm:$0xff]
        %v193 = vld [vmem:[%s191 + $0x8] sm:$0xff]
        %196 = vrot.lane.b32.xlu0 %v192, 32
        %v197 = vpop.permute.xlu0 %196
        %198 = vrot.lane.b32.xlu0 %v193, 32
        %v199 = vpop.permute.xlu0 %198
        %vm202 = vcmask 392448
        %203 = vst.msk [vmem:[#allocation2 + $0x1] sm:$0xff] %vm202, %v197
        %204 = vst.msk [vmem:[#allocation2 + $0x9] sm:$0xff] %vm202, %v199
        %s205 = scalar_lea.vmem %s168, 48
        %v206 = vld [vmem:[%s205] sm:$0xff]
        %v207 = vld [vmem:[%s205 + $0x8] sm:$0xff]
        %210 = vrot.lane.b32.xlu0 %v206, 48
        %v211 = vpop.permute.xlu0 %210
        %212 = vrot.lane.b32.xlu0 %v207, 48
        %v213 = vpop.permute.xlu0 %212
        %vm216 = vcmask 523648
        %217 = vst.msk [vmem:[#allocation2 + $0x1] sm:$0xff] %vm216, %v211
        %218 = vst.msk [vmem:[#allocation2 + $0x9] sm:$0xff] %vm216, %v213
        %v219 = vld [vmem:[#allocation2] sm:$0xff]
        %v220 = vld [vmem:[#allocation2 + $0x8] sm:$0xff]
        %v221 = vld [vmem:[#allocation2 + $0x1] sm:$0xff]
        %v222 = vld [vmem:[#allocation2 + $0x9] sm:$0xff]
        %v223 = vld [vmem:[#allocation2 + $0x2] sm:$0xff]
        %v224 = vld [vmem:[#allocation2 + $0xa] sm:$0xff]
        %v225 = vld [vmem:[%s1] sm:$0xff]
        %v226 = vld [vmem:[%s1 + $0x8] sm:$0xff]
        %v227 = vld [vmem:[%s1 + $0x10] sm:$0xff]
        %v228 = vld [vmem:[%s1 + $0x18] sm:$0xff]
        %v229 = vld [vmem:[%s1 + $0x20] sm:$0xff]
        %v230 = vld [vmem:[%s1 + $0x28] sm:$0xff]
        %v231 = vld [vmem:[%s1 + $0x30] sm:$0xff]
        %v232 = vld [vmem:[%s1 + $0x38] sm:$0xff]
        %s233 = scalar_lea.vmem %s1, 64
        %v234 = vld [vmem:[%s233] sm:$0xff]
        %v235 = vld [vmem:[%s233 + $0x8] sm:$0xff]
        %v236 = vld [vmem:[%s233 + $0x10] sm:$0xff]
        %v237 = vld [vmem:[%s233 + $0x18] sm:$0xff]
        %v238 = vld [vmem:[%s233 + $0x20] sm:$0xff]
        %v239 = vld [vmem:[%s233 + $0x28] sm:$0xff]
        %v240 = vld [vmem:[%s233 + $0x30] sm:$0xff]
        %v241 = vld [vmem:[%s233 + $0x38] sm:$0xff]
        %vm242 = vcmask 523264
        %v244 = vsel %vm242, %v221, 0
        %v247 = vsel %vm242, %v222, 0
        %249 = vmatprep.subr.mxu0 0.0
        %250 = vmatpush1.msra.mxu0 0.0
        %251 = vmatprep.subr.mxu0 0.0
        %252 = vmatpush1.msra.mxu0 0.0
        %253 = vmatprep.subr.mxu0 0.0
        %254 = vmatpush1.msra.mxu0 0.0
        %255 = vmatprep.subr.mxu0 0.0
        %256 = vmatpush1.msra.mxu0 0.0
        %257 = vmatprep.subr.mxu0 0.0
        %258 = vmatpush1.msra.mxu0 0.0
        %259 = vmatprep.subr.mxu0 0.0
        %260 = vmatpush1.msra.mxu0 0.0
        %261 = vmatprep.subr.mxu0 0.0
        %262 = vmatpush1.msra.mxu0 0.0
        %263 = vmatprep.subr.mxu0 0.0
        %264 = vmatpush1.msra.mxu0 0.0
        %265 = vmatprep.subr.mxu0 0.0
        %v266 = vand.u32 %v241, 4294901760
        %267 = vmatpush1.msra.mxu0 %v266
        %268 = vmatprep.subr.mxu0 0.0
        %v269 = vand.u32 %v240, 4294901760
        %270 = vmatpush1.msra.mxu0 %v269
        %271 = vmatprep.subr.mxu0 0.0
        %v272 = vand.u32 %v239, 4294901760
        %273 = vmatpush1.msra.mxu0 %v272
        %274 = vmatprep.subr.mxu0 0.0
        %v275 = vand.u32 %v238, 4294901760
        %276 = vmatpush1.msra.mxu0 %v275
        %277 = vmatprep.subr.mxu0 0.0
        %v278 = vand.u32 %v237, 4294901760
        %279 = vmatpush1.msra.mxu0 %v278
        %280 = vmatprep.subr.mxu0 0.0
        %v281 = vand.u32 %v236, 4294901760
        %282 = vmatpush1.msra.mxu0 %v281
        %283 = vmatprep.subr.mxu0 0.0
        %v284 = vand.u32 %v235, 4294901760
        %285 = vmatpush1.msra.mxu0 %v284
        %286 = vmatprep.subr.mxu0 0.0
        %v287 = vand.u32 %v234, 4294901760
        %288 = vmatpush1.msra.mxu0 %v287
        %289 = vmatprep.subr.mxu0 0.0
        %290 = vmatpush2.msra.mxu0 0.0
        %291 = vmatprep.subr.mxu0 0.0
        %292 = vmatpush2.msra.mxu0 0.0
        %293 = vmatprep.subr.mxu0 0.0
        %294 = vmatpush2.msra.mxu0 0.0
        %295 = vmatprep.subr.mxu0 0.0
        %296 = vmatpush2.msra.mxu0 0.0
        %297 = vmatprep.subr.mxu0 0.0
        %298 = vmatpush2.msra.mxu0 0.0
        %299 = vmatprep.subr.mxu0 0.0
        %300 = vmatpush2.msra.mxu0 0.0
        %301 = vmatprep.subr.mxu0 0.0
        %302 = vmatpush2.msra.mxu0 0.0
        %303 = vmatprep.subr.mxu0 0.0
        %304 = vmatpush2.msra.mxu0 0.0
        %305 = vmatprep.subr.mxu0 0.0
        %306 = vmatpush2.msra.mxu0 0.0
        %307 = vmatprep.subr.mxu0 0.0
        %308 = vmatpush2.msra.mxu0 0.0
        %309 = vmatprep.subr.mxu0 0.0
        %310 = vmatpush2.msra.mxu0 0.0
        %311 = vmatprep.subr.mxu0 0.0
        %312 = vmatpush2.msra.mxu0 0.0
        %313 = vmatprep.subr.mxu0 0.0
        %314 = vmatpush2.msra.mxu0 0.0
        %315 = vmatprep.subr.mxu0 0.0
        %316 = vmatpush2.msra.mxu0 0.0
        %317 = vmatprep.subr.mxu0 0.0
        %318 = vmatpush2.msra.mxu0 0.0
        %319 = vmatprep.subr.mxu0 0.0
        %320 = vmatpush2.msra.mxu0 0.0
        %321 = vmatprep.mubr.f32.mxu0 0.0
        %v322 = vand.u32 %v244, 4294901760
        %v323 = vsub.f32 %v244, %v322
        %v324 = vand.u32 %v323, 4294901760
        %v325 = vsub.f32 %v323, %v324
        %v326 = vand.u32 %v325, 4294901760
        %327 = vmatmul.mubr.f32.gmra.mxu0 %v326
        %v328 = vpop.f32.mrf.mxu0
        %v329 = vadd.f32 0.0, %v328
        %v330 = vpop.f32.mrf.mxu0
        %331 = vmatprep.mubr.f32.mxu0 0.0
        %v332 = vand.u32 %v247, 4294901760
        %v333 = vsub.f32 %v247, %v332
        %v334 = vand.u32 %v333, 4294901760
        %v335 = vsub.f32 %v333, %v334
        %v336 = vand.u32 %v335, 4294901760
        %337 = vmatmul.mubr.f32.gmra.mxu0 %v336
        %v338 = vpop.f32.mrf.mxu0
        %v339 = vadd.f32 0.0, %v338
        %v340 = vpop.f32.mrf.mxu0
        %341 = vdwg.mxu0
        %342 = vmatprep.subr.mxu0 0.0
        %343 = vmatpush1.msra.mxu0 0.0
        %344 = vmatprep.subr.mxu0 0.0
        %345 = vmatpush1.msra.mxu0 0.0
        %346 = vmatprep.subr.mxu0 0.0
        %347 = vmatpush1.msra.mxu0 0.0
        %348 = vmatprep.subr.mxu0 0.0
        %349 = vmatpush1.msra.mxu0 0.0
        %350 = vmatprep.subr.mxu0 0.0
        %351 = vmatpush1.msra.mxu0 0.0
        %352 = vmatprep.subr.mxu0 0.0
        %353 = vmatpush1.msra.mxu0 0.0
        %354 = vmatprep.subr.mxu0 0.0
        %355 = vmatpush1.msra.mxu0 0.0
        %356 = vmatprep.subr.mxu0 0.0
        %357 = vmatpush1.msra.mxu0 0.0
        %358 = vmatprep.subr.mxu0 0.0
        %v359 = vand.u32 %v241, 4294901760
        %v360 = vsub.f32 %v241, %v359
        %v361 = vand.u32 %v360, 4294901760
        %v362 = vsub.f32 %v360, %v361
        %v363 = vand.u32 %v362, 4294901760
        %364 = vmatpush1.msra.mxu0 %v363
        %365 = vmatprep.subr.mxu0 0.0
        %v366 = vand.u32 %v240, 4294901760
        %v367 = vsub.f32 %v240, %v366
        %v368 = vand.u32 %v367, 4294901760
        %v369 = vsub.f32 %v367, %v368
        %v370 = vand.u32 %v369, 4294901760
        %371 = vmatpush1.msra.mxu0 %v370
        %372 = vmatprep.subr.mxu0 0.0
        %v373 = vand.u32 %v239, 4294901760
        %v374 = vsub.f32 %v239, %v373
        %v375 = vand.u32 %v374, 4294901760
        %v376 = vsub.f32 %v374, %v375
        %v377 = vand.u32 %v376, 4294901760
        %378 = vmatpush1.msra.mxu0 %v377
        %379 = vmatprep.subr.mxu0 0.0
        %v380 = vand.u32 %v238, 4294901760
        %v381 = vsub.f32 %v238, %v380
        %v382 = vand.u32 %v381, 4294901760
        %v383 = vsub.f32 %v381, %v382
        %v384 = vand.u32 %v383, 4294901760
        %385 = vmatpush1.msra.mxu0 %v384
        %386 = vmatprep.subr.mxu0 0.0
        %v387 = vand.u32 %v237, 4294901760
        %v388 = vsub.f32 %v237, %v387
        %v389 = vand.u32 %v388, 4294901760
        %v390 = vsub.f32 %v388, %v389
        %v391 = vand.u32 %v390, 4294901760
        %392 = vmatpush1.msra.mxu0 %v391
        %393 = vmatprep.subr.mxu0 0.0
        %v394 = vand.u32 %v236, 4294901760
        %v395 = vsub.f32 %v236, %v394
        %v396 = vand.u32 %v395, 4294901760
        %v397 = vsub.f32 %v395, %v396
        %v398 = vand.u32 %v397, 4294901760
        %399 = vmatpush1.msra.mxu0 %v398
        %400 = vmatprep.subr.mxu0 0.0
        %v401 = vand.u32 %v235, 4294901760
        %v402 = vsub.f32 %v235, %v401
        %v403 = vand.u32 %v402, 4294901760
        %v404 = vsub.f32 %v402, %v403
        %v405 = vand.u32 %v404, 4294901760
        %406 = vmatpush1.msra.mxu0 %v405
        %407 = vmatprep.subr.mxu0 0.0
        %v408 = vand.u32 %v234, 4294901760
        %v409 = vsub.f32 %v234, %v408
        %v410 = vand.u32 %v409, 4294901760
        %v411 = vsub.f32 %v409, %v410
        %v412 = vand.u32 %v411, 4294901760
        %413 = vmatpush1.msra.mxu0 %v412
        %414 = vmatprep.subr.mxu0 0.0
        %415 = vmatpush2.msra.mxu0 0.0
        %416 = vmatprep.subr.mxu0 0.0
        %417 = vmatpush2.msra.mxu0 0.0
        %418 = vmatprep.subr.mxu0 0.0
        %419 = vmatpush2.msra.mxu0 0.0
        %420 = vmatprep.subr.mxu0 0.0
        %421 = vmatpush2.msra.mxu0 0.0
        %422 = vmatprep.subr.mxu0 0.0
        %423 = vmatpush2.msra.mxu0 0.0
        %424 = vmatprep.subr.mxu0 0.0
        %425 = vmatpush2.msra.mxu0 0.0
        %426 = vmatprep.subr.mxu0 0.0
        %427 = vmatpush2.msra.mxu0 0.0
        %428 = vmatprep.subr.mxu0 0.0
        %429 = vmatpush2.msra.mxu0 0.0
        %430 = vmatprep.subr.mxu0 0.0
        %431 = vmatpush2.msra.mxu0 0.0
        %432 = vmatprep.subr.mxu0 0.0
        %433 = vmatpush2.msra.mxu0 0.0
        %434 = vmatprep.subr.mxu0 0.0
        %435 = vmatpush2.msra.mxu0 0.0
        %436 = vmatprep.subr.mxu0 0.0
        %437 = vmatpush2.msra.mxu0 0.0
        %438 = vmatprep.subr.mxu0 0.0
        %439 = vmatpush2.msra.mxu0 0.0
        %440 = vmatprep.subr.mxu0 0.0
        %441 = vmatpush2.msra.mxu0 0.0
        %442 = vmatprep.subr.mxu0 0.0
        %443 = vmatpush2.msra.mxu0 0.0
        %444 = vmatprep.subr.mxu0 0.0
        %445 = vmatpush2.msra.mxu0 0.0
        %446 = vmatprep.mubr.f32.mxu0 0.0
        %v447 = vand.u32 %v244, 4294901760
        %448 = vmatmul.mubr.f32.gmra.mxu0 %v447
        %v449 = vpop.f32.mrf.mxu0
        %v450 = vadd.f32 %v329, %v449
        %v451 = vpop.f32.mrf.mxu0
        %452 = vmatprep.mubr.f32.mxu0 0.0
        %v453 = vand.u32 %v247, 4294901760
        %454 = vmatmul.mubr.f32.gmra.mxu0 %v453
        %v455 = vpop.f32.mrf.mxu0
        %v456 = vadd.f32 %v339, %v455
        %v457 = vpop.f32.mrf.mxu0
        %458 = vdwg.mxu0
        %459 = vmatprep.subr.mxu0 0.0
        %460 = vmatpush1.msra.mxu0 0.0
        %461 = vmatprep.subr.mxu0 0.0
        %462 = vmatpush1.msra.mxu0 0.0
        %463 = vmatprep.subr.mxu0 0.0
        %464 = vmatpush1.msra.mxu0 0.0
        %465 = vmatprep.subr.mxu0 0.0
        %466 = vmatpush1.msra.mxu0 0.0
        %467 = vmatprep.subr.mxu0 0.0
        %468 = vmatpush1.msra.mxu0 0.0
        %469 = vmatprep.subr.mxu0 0.0
        %470 = vmatpush1.msra.mxu0 0.0
        %471 = vmatprep.subr.mxu0 0.0
        %472 = vmatpush1.msra.mxu0 0.0
        %473 = vmatprep.subr.mxu0 0.0
        %474 = vmatpush1.msra.mxu0 0.0
        %475 = vmatprep.subr.mxu0 0.0
        %v476 = vand.u32 %v241, 4294901760
        %v477 = vsub.f32 %v241, %v476
        %478 = vmatpush1.msra.mxu0 %v477
        %479 = vmatprep.subr.mxu0 0.0
        %v480 = vand.u32 %v240, 4294901760
        %v481 = vsub.f32 %v240, %v480
        %482 = vmatpush1.msra.mxu0 %v481
        %483 = vmatprep.subr.mxu0 0.0
        %v484 = vand.u32 %v239, 4294901760
        %v485 = vsub.f32 %v239, %v484
        %486 = vmatpush1.msra.mxu0 %v485
        %487 = vmatprep.subr.mxu0 0.0
        %v488 = vand.u32 %v238, 4294901760
        %v489 = vsub.f32 %v238, %v488
        %490 = vmatpush1.msra.mxu0 %v489
        %491 = vmatprep.subr.mxu0 0.0
        %v492 = vand.u32 %v237, 4294901760
        %v493 = vsub.f32 %v237, %v492
        %494 = vmatpush1.msra.mxu0 %v493
        %495 = vmatprep.subr.mxu0 0.0
        %v496 = vand.u32 %v236, 4294901760
        %v497 = vsub.f32 %v236, %v496
        %498 = vmatpush1.msra.mxu0 %v497
        %499 = vmatprep.subr.mxu0 0.0
        %v500 = vand.u32 %v235, 4294901760
        %v501 = vsub.f32 %v235, %v500
        %502 = vmatpush1.msra.mxu0 %v501
        %503 = vmatprep.subr.mxu0 0.0
        %v504 = vand.u32 %v234, 4294901760
        %v505 = vsub.f32 %v234, %v504
        %506 = vmatpush1.msra.mxu0 %v505
        %507 = vmatprep.subr.mxu0 0.0
        %508 = vmatpush2.msra.mxu0 0.0
        %509 = vmatprep.subr.mxu0 0.0
        %510 = vmatpush2.msra.mxu0 0.0
        %511 = vmatprep.subr.mxu0 0.0
        %512 = vmatpush2.msra.mxu0 0.0
        %513 = vmatprep.subr.mxu0 0.0
        %514 = vmatpush2.msra.mxu0 0.0
        %515 = vmatprep.subr.mxu0 0.0
        %516 = vmatpush2.msra.mxu0 0.0
        %517 = vmatprep.subr.mxu0 0.0
        %518 = vmatpush2.msra.mxu0 0.0
        %519 = vmatprep.subr.mxu0 0.0
        %520 = vmatpush2.msra.mxu0 0.0
        %521 = vmatprep.subr.mxu0 0.0
        %522 = vmatpush2.msra.mxu0 0.0
        %523 = vmatprep.subr.mxu0 0.0
        %524 = vmatpush2.msra.mxu0 0.0
        %525 = vmatprep.subr.mxu0 0.0
        %526 = vmatpush2.msra.mxu0 0.0
        %527 = vmatprep.subr.mxu0 0.0
        %528 = vmatpush2.msra.mxu0 0.0
        %529 = vmatprep.subr.mxu0 0.0
        %530 = vmatpush2.msra.mxu0 0.0
        %531 = vmatprep.subr.mxu0 0.0
        %532 = vmatpush2.msra.mxu0 0.0
        %533 = vmatprep.subr.mxu0 0.0
        %534 = vmatpush2.msra.mxu0 0.0
        %535 = vmatprep.subr.mxu0 0.0
        %536 = vmatpush2.msra.mxu0 0.0
        %537 = vmatprep.subr.mxu0 0.0
        %538 = vmatpush2.msra.mxu0 0.0
        %539 = vmatprep.mubr.f32.mxu0 0.0
        %v540 = vand.u32 %v244, 4294901760
        %v541 = vsub.f32 %v244, %v540
        %542 = vmatmul.mubr.f32.gmra.mxu0 %v541
        %v543 = vpop.f32.mrf.mxu0
        %v544 = vadd.f32 %v450, %v543
        %v545 = vpop.f32.mrf.mxu0
        %546 = vmatprep.mubr.f32.mxu0 0.0
        %v547 = vand.u32 %v247, 4294901760
        %v548 = vsub.f32 %v247, %v547
        %549 = vmatmul.mubr.f32.gmra.mxu0 %v548
        %v550 = vpop.f32.mrf.mxu0
        %v551 = vadd.f32 %v456, %v550
        %v552 = vpop.f32.mrf.mxu0
        %553 = vdwg.mxu0
        %554 = vmatprep.subr.mxu0 0.0
        %555 = vmatpush1.msra.mxu0 0.0
        %556 = vmatprep.subr.mxu0 0.0
        %557 = vmatpush1.msra.mxu0 0.0
        %558 = vmatprep.subr.mxu0 0.0
        %559 = vmatpush1.msra.mxu0 0.0
        %560 = vmatprep.subr.mxu0 0.0
        %561 = vmatpush1.msra.mxu0 0.0
        %562 = vmatprep.subr.mxu0 0.0
        %563 = vmatpush1.msra.mxu0 0.0
        %564 = vmatprep.subr.mxu0 0.0
        %565 = vmatpush1.msra.mxu0 0.0
        %566 = vmatprep.subr.mxu0 0.0
        %567 = vmatpush1.msra.mxu0 0.0
        %568 = vmatprep.subr.mxu0 0.0
        %569 = vmatpush1.msra.mxu0 0.0
        %570 = vmatprep.subr.mxu0 0.0
        %v571 = vand.u32 %v241, 4294901760
        %572 = vmatpush1.msra.mxu0 %v571
        %573 = vmatprep.subr.mxu0 0.0
        %v574 = vand.u32 %v240, 4294901760
        %575 = vmatpush1.msra.mxu0 %v574
        %576 = vmatprep.subr.mxu0 0.0
        %v577 = vand.u32 %v239, 4294901760
        %578 = vmatpush1.msra.mxu0 %v577
        %579 = vmatprep.subr.mxu0 0.0
        %v580 = vand.u32 %v238, 4294901760
        %581 = vmatpush1.msra.mxu0 %v580
        %582 = vmatprep.subr.mxu0 0.0
        %v583 = vand.u32 %v237, 4294901760
        %584 = vmatpush1.msra.mxu0 %v583
        %585 = vmatprep.subr.mxu0 0.0
        %v586 = vand.u32 %v236, 4294901760
        %587 = vmatpush1.msra.mxu0 %v586
        %588 = vmatprep.subr.mxu0 0.0
        %v589 = vand.u32 %v235, 4294901760
        %590 = vmatpush1.msra.mxu0 %v589
        %591 = vmatprep.subr.mxu0 0.0
        %v592 = vand.u32 %v234, 4294901760
        %593 = vmatpush1.msra.mxu0 %v592
        %594 = vmatprep.subr.mxu0 0.0
        %595 = vmatpush2.msra.mxu0 0.0
        %596 = vmatprep.subr.mxu0 0.0
        %597 = vmatpush2.msra.mxu0 0.0
        %598 = vmatprep.subr.mxu0 0.0
        %599 = vmatpush2.msra.mxu0 0.0
        %600 = vmatprep.subr.mxu0 0.0
        %601 = vmatpush2.msra.mxu0 0.0
        %602 = vmatprep.subr.mxu0 0.0
        %603 = vmatpush2.msra.mxu0 0.0
        %604 = vmatprep.subr.mxu0 0.0
        %605 = vmatpush2.msra.mxu0 0.0
        %606 = vmatprep.subr.mxu0 0.0
        %607 = vmatpush2.msra.mxu0 0.0
        %608 = vmatprep.subr.mxu0 0.0
        %609 = vmatpush2.msra.mxu0 0.0
        %610 = vmatprep.subr.mxu0 0.0
        %611 = vmatpush2.msra.mxu0 0.0
        %612 = vmatprep.subr.mxu0 0.0
        %613 = vmatpush2.msra.mxu0 0.0
        %614 = vmatprep.subr.mxu0 0.0
        %615 = vmatpush2.msra.mxu0 0.0
        %616 = vmatprep.subr.mxu0 0.0
        %617 = vmatpush2.msra.mxu0 0.0
        %618 = vmatprep.subr.mxu0 0.0
        %619 = vmatpush2.msra.mxu0 0.0
        %620 = vmatprep.subr.mxu0 0.0
        %621 = vmatpush2.msra.mxu0 0.0
        %622 = vmatprep.subr.mxu0 0.0
        %623 = vmatpush2.msra.mxu0 0.0
        %624 = vmatprep.subr.mxu0 0.0
        %625 = vmatpush2.msra.mxu0 0.0
        %626 = vmatprep.mubr.f32.mxu0 0.0
        %v627 = vand.u32 %v244, 4294901760
        %v628 = vsub.f32 %v244, %v627
        %v629 = vand.u32 %v628, 4294901760
        %630 = vmatmul.mubr.f32.gmra.mxu0 %v629
        %v631 = vpop.f32.mrf.mxu0
        %v632 = vadd.f32 %v544, %v631
        %v633 = vpop.f32.mrf.mxu0
        %634 = vmatprep.mubr.f32.mxu0 0.0
        %v635 = vand.u32 %v247, 4294901760
        %v636 = vsub.f32 %v247, %v635
        %v637 = vand.u32 %v636, 4294901760
        %638 = vmatmul.mubr.f32.gmra.mxu0 %v637
        %v639 = vpop.f32.mrf.mxu0
        %v640 = vadd.f32 %v551, %v639
        %v641 = vpop.f32.mrf.mxu0
        %642 = vdwg.mxu0
        %643 = vmatprep.subr.mxu0 0.0
        %644 = vmatpush1.msra.mxu0 0.0
        %645 = vmatprep.subr.mxu0 0.0
        %646 = vmatpush1.msra.mxu0 0.0
        %647 = vmatprep.subr.mxu0 0.0
        %648 = vmatpush1.msra.mxu0 0.0
        %649 = vmatprep.subr.mxu0 0.0
        %650 = vmatpush1.msra.mxu0 0.0
        %651 = vmatprep.subr.mxu0 0.0
        %652 = vmatpush1.msra.mxu0 0.0
        %653 = vmatprep.subr.mxu0 0.0
        %654 = vmatpush1.msra.mxu0 0.0
        %655 = vmatprep.subr.mxu0 0.0
        %656 = vmatpush1.msra.mxu0 0.0
        %657 = vmatprep.subr.mxu0 0.0
        %658 = vmatpush1.msra.mxu0 0.0
        %659 = vmatprep.subr.mxu0 0.0
        %v660 = vand.u32 %v241, 4294901760
        %v661 = vsub.f32 %v241, %v660
        %v662 = vand.u32 %v661, 4294901760
        %663 = vmatpush1.msra.mxu0 %v662
        %664 = vmatprep.subr.mxu0 0.0
        %v665 = vand.u32 %v240, 4294901760
        %v666 = vsub.f32 %v240, %v665
        %v667 = vand.u32 %v666, 4294901760
        %668 = vmatpush1.msra.mxu0 %v667
        %669 = vmatprep.subr.mxu0 0.0
        %v670 = vand.u32 %v239, 4294901760
        %v671 = vsub.f32 %v239, %v670
        %v672 = vand.u32 %v671, 4294901760
        %673 = vmatpush1.msra.mxu0 %v672
        %674 = vmatprep.subr.mxu0 0.0
        %v675 = vand.u32 %v238, 4294901760
        %v676 = vsub.f32 %v238, %v675
        %v677 = vand.u32 %v676, 4294901760
        %678 = vmatpush1.msra.mxu0 %v677
        %679 = vmatprep.subr.mxu0 0.0
        %v680 = vand.u32 %v237, 4294901760
        %v681 = vsub.f32 %v237, %v680
        %v682 = vand.u32 %v681, 4294901760
        %683 = vmatpush1.msra.mxu0 %v682
        %684 = vmatprep.subr.mxu0 0.0
        %v685 = vand.u32 %v236, 4294901760
        %v686 = vsub.f32 %v236, %v685
        %v687 = vand.u32 %v686, 4294901760
        %688 = vmatpush1.msra.mxu0 %v687
        %689 = vmatprep.subr.mxu0 0.0
        %v690 = vand.u32 %v235, 4294901760
        %v691 = vsub.f32 %v235, %v690
        %v692 = vand.u32 %v691, 4294901760
        %693 = vmatpush1.msra.mxu0 %v692
        %694 = vmatprep.subr.mxu0 0.0
        %v695 = vand.u32 %v234, 4294901760
        %v696 = vsub.f32 %v234, %v695
        %v697 = vand.u32 %v696, 4294901760
        %698 = vmatpush1.msra.mxu0 %v697
        %699 = vmatprep.subr.mxu0 0.0
        %700 = vmatpush2.msra.mxu0 0.0
        %701 = vmatprep.subr.mxu0 0.0
        %702 = vmatpush2.msra.mxu0 0.0
        %703 = vmatprep.subr.mxu0 0.0
        %704 = vmatpush2.msra.mxu0 0.0
        %705 = vmatprep.subr.mxu0 0.0
        %706 = vmatpush2.msra.mxu0 0.0
        %707 = vmatprep.subr.mxu0 0.0
        %708 = vmatpush2.msra.mxu0 0.0
        %709 = vmatprep.subr.mxu0 0.0
        %710 = vmatpush2.msra.mxu0 0.0
        %711 = vmatprep.subr.mxu0 0.0
        %712 = vmatpush2.msra.mxu0 0.0
        %713 = vmatprep.subr.mxu0 0.0
        %714 = vmatpush2.msra.mxu0 0.0
        %715 = vmatprep.subr.mxu0 0.0
        %716 = vmatpush2.msra.mxu0 0.0
        %717 = vmatprep.subr.mxu0 0.0
        %718 = vmatpush2.msra.mxu0 0.0
        %719 = vmatprep.subr.mxu0 0.0
        %720 = vmatpush2.msra.mxu0 0.0
        %721 = vmatprep.subr.mxu0 0.0
        %722 = vmatpush2.msra.mxu0 0.0
        %723 = vmatprep.subr.mxu0 0.0
        %724 = vmatpush2.msra.mxu0 0.0
        %725 = vmatprep.subr.mxu0 0.0
        %726 = vmatpush2.msra.mxu0 0.0
        %727 = vmatprep.subr.mxu0 0.0
        %728 = vmatpush2.msra.mxu0 0.0
        %729 = vmatprep.subr.mxu0 0.0
        %730 = vmatpush2.msra.mxu0 0.0
        %731 = vmatprep.mubr.f32.mxu0 0.0
        %v732 = vand.u32 %v244, 4294901760
        %733 = vmatmul.mubr.f32.gmra.mxu0 %v732
        %v734 = vpop.f32.mrf.mxu0
        %v735 = vadd.f32 %v632, %v734
        %v736 = vpop.f32.mrf.mxu0
        %737 = vmatprep.mubr.f32.mxu0 0.0
        %v738 = vand.u32 %v247, 4294901760
        %739 = vmatmul.mubr.f32.gmra.mxu0 %v738
        %v740 = vpop.f32.mrf.mxu0
        %v741 = vadd.f32 %v640, %v740
        %v742 = vpop.f32.mrf.mxu0
        %743 = vdwg.mxu0
        %744 = vmatprep.subr.mxu0 0.0
        %745 = vmatpush1.msra.mxu0 0.0
        %746 = vmatprep.subr.mxu0 0.0
        %747 = vmatpush1.msra.mxu0 0.0
        %748 = vmatprep.subr.mxu0 0.0
        %749 = vmatpush1.msra.mxu0 0.0
        %750 = vmatprep.subr.mxu0 0.0
        %751 = vmatpush1.msra.mxu0 0.0
        %752 = vmatprep.subr.mxu0 0.0
        %753 = vmatpush1.msra.mxu0 0.0
        %754 = vmatprep.subr.mxu0 0.0
        %755 = vmatpush1.msra.mxu0 0.0
        %756 = vmatprep.subr.mxu0 0.0
        %757 = vmatpush1.msra.mxu0 0.0
        %758 = vmatprep.subr.mxu0 0.0
        %759 = vmatpush1.msra.mxu0 0.0
        %760 = vmatprep.subr.mxu0 0.0
        %v761 = vand.u32 %v241, 4294901760
        %762 = vmatpush1.msra.mxu0 %v761
        %763 = vmatprep.subr.mxu0 0.0
        %v764 = vand.u32 %v240, 4294901760
        %765 = vmatpush1.msra.mxu0 %v764
        %766 = vmatprep.subr.mxu0 0.0
        %v767 = vand.u32 %v239, 4294901760
        %768 = vmatpush1.msra.mxu0 %v767
        %769 = vmatprep.subr.mxu0 0.0
        %v770 = vand.u32 %v238, 4294901760
        %771 = vmatpush1.msra.mxu0 %v770
        %772 = vmatprep.subr.mxu0 0.0
        %v773 = vand.u32 %v237, 4294901760
        %774 = vmatpush1.msra.mxu0 %v773
        %775 = vmatprep.subr.mxu0 0.0
        %v776 = vand.u32 %v236, 4294901760
        %777 = vmatpush1.msra.mxu0 %v776
        %778 = vmatprep.subr.mxu0 0.0
        %v779 = vand.u32 %v235, 4294901760
        %780 = vmatpush1.msra.mxu0 %v779
        %781 = vmatprep.subr.mxu0 0.0
        %v782 = vand.u32 %v234, 4294901760
        %783 = vmatpush1.msra.mxu0 %v782
        %784 = vmatprep.subr.mxu0 0.0
        %785 = vmatpush2.msra.mxu0 0.0
        %786 = vmatprep.subr.mxu0 0.0
        %787 = vmatpush2.msra.mxu0 0.0
        %788 = vmatprep.subr.mxu0 0.0
        %789 = vmatpush2.msra.mxu0 0.0
        %790 = vmatprep.subr.mxu0 0.0
        %791 = vmatpush2.msra.mxu0 0.0
        %792 = vmatprep.subr.mxu0 0.0
        %793 = vmatpush2.msra.mxu0 0.0
        %794 = vmatprep.subr.mxu0 0.0
        %795 = vmatpush2.msra.mxu0 0.0
        %796 = vmatprep.subr.mxu0 0.0
        %797 = vmatpush2.msra.mxu0 0.0
        %798 = vmatprep.subr.mxu0 0.0
        %799 = vmatpush2.msra.mxu0 0.0
        %800 = vmatprep.subr.mxu0 0.0
        %801 = vmatpush2.msra.mxu0 0.0
        %802 = vmatprep.subr.mxu0 0.0
        %803 = vmatpush2.msra.mxu0 0.0
        %804 = vmatprep.subr.mxu0 0.0
        %805 = vmatpush2.msra.mxu0 0.0
        %806 = vmatprep.subr.mxu0 0.0
        %807 = vmatpush2.msra.mxu0 0.0
        %808 = vmatprep.subr.mxu0 0.0
        %809 = vmatpush2.msra.mxu0 0.0
        %810 = vmatprep.subr.mxu0 0.0
        %811 = vmatpush2.msra.mxu0 0.0
        %812 = vmatprep.subr.mxu0 0.0
        %813 = vmatpush2.msra.mxu0 0.0
        %814 = vmatprep.subr.mxu0 0.0
        %815 = vmatpush2.msra.mxu0 0.0
        %816 = vmatprep.mubr.f32.mxu0 0.0
        %v817 = vand.u32 %v244, 4294901760
        %818 = vmatmul.mubr.f32.gmra.mxu0 %v817
        %v819 = vpop.f32.mrf.mxu0
        %v820 = vadd.f32 %v735, %v819
        %v821 = vpop.f32.mrf.mxu0
        %822 = vmatprep.mubr.f32.mxu0 0.0
        %v823 = vand.u32 %v247, 4294901760
        %824 = vmatmul.mubr.f32.gmra.mxu0 %v823
        %v825 = vpop.f32.mrf.mxu0
        %v826 = vadd.f32 %v741, %v825
        %v827 = vpop.f32.mrf.mxu0
        %828 = vdwg.mxu0
        %v830 = vsel %vm242, %v219, 0
        %v833 = vsel %vm242, %v220, 0
        %835 = vmatprep.subr.mxu0 0.0
        %836 = vmatpush1.msra.mxu0 0.0
        %837 = vmatprep.subr.mxu0 0.0
        %838 = vmatpush1.msra.mxu0 0.0
        %839 = vmatprep.subr.mxu0 0.0
        %840 = vmatpush1.msra.mxu0 0.0
        %841 = vmatprep.subr.mxu0 0.0
        %842 = vmatpush1.msra.mxu0 0.0
        %843 = vmatprep.subr.mxu0 0.0
        %844 = vmatpush1.msra.mxu0 0.0
        %845 = vmatprep.subr.mxu0 0.0
        %846 = vmatpush1.msra.mxu0 0.0
        %847 = vmatprep.subr.mxu0 0.0
        %848 = vmatpush1.msra.mxu0 0.0
        %849 = vmatprep.subr.mxu0 0.0
        %850 = vmatpush1.msra.mxu0 0.0
        %851 = vmatprep.subr.mxu0 0.0
        %v852 = vand.u32 %v232, 4294901760
        %853 = vmatpush1.msra.mxu0 %v852
        %854 = vmatprep.subr.mxu0 0.0
        %v855 = vand.u32 %v231, 4294901760
        %856 = vmatpush1.msra.mxu0 %v855
        %857 = vmatprep.subr.mxu0 0.0
        %v858 = vand.u32 %v230, 4294901760
        %859 = vmatpush1.msra.mxu0 %v858
        %860 = vmatprep.subr.mxu0 0.0
        %v861 = vand.u32 %v229, 4294901760
        %862 = vmatpush1.msra.mxu0 %v861
        %863 = vmatprep.subr.mxu0 0.0
        %v864 = vand.u32 %v228, 4294901760
        %865 = vmatpush1.msra.mxu0 %v864
        %866 = vmatprep.subr.mxu0 0.0
        %v867 = vand.u32 %v227, 4294901760
        %868 = vmatpush1.msra.mxu0 %v867
        %869 = vmatprep.subr.mxu0 0.0
        %v870 = vand.u32 %v226, 4294901760
        %871 = vmatpush1.msra.mxu0 %v870
        %872 = vmatprep.subr.mxu0 0.0
        %v873 = vand.u32 %v225, 4294901760
        %874 = vmatpush1.msra.mxu0 %v873
        %875 = vmatprep.subr.mxu0 0.0
        %876 = vmatpush2.msra.mxu0 0.0
        %877 = vmatprep.subr.mxu0 0.0
        %878 = vmatpush2.msra.mxu0 0.0
        %879 = vmatprep.subr.mxu0 0.0
        %880 = vmatpush2.msra.mxu0 0.0
        %881 = vmatprep.subr.mxu0 0.0
        %882 = vmatpush2.msra.mxu0 0.0
        %883 = vmatprep.subr.mxu0 0.0
        %884 = vmatpush2.msra.mxu0 0.0
        %885 = vmatprep.subr.mxu0 0.0
        %886 = vmatpush2.msra.mxu0 0.0
        %887 = vmatprep.subr.mxu0 0.0
        %888 = vmatpush2.msra.mxu0 0.0
        %889 = vmatprep.subr.mxu0 0.0
        %890 = vmatpush2.msra.mxu0 0.0
        %891 = vmatprep.subr.mxu0 0.0
        %892 = vmatpush2.msra.mxu0 0.0
        %893 = vmatprep.subr.mxu0 0.0
        %894 = vmatpush2.msra.mxu0 0.0
        %895 = vmatprep.subr.mxu0 0.0
        %896 = vmatpush2.msra.mxu0 0.0
        %897 = vmatprep.subr.mxu0 0.0
        %898 = vmatpush2.msra.mxu0 0.0
        %899 = vmatprep.subr.mxu0 0.0
        %900 = vmatpush2.msra.mxu0 0.0
        %901 = vmatprep.subr.mxu0 0.0
        %902 = vmatpush2.msra.mxu0 0.0
        %903 = vmatprep.subr.mxu0 0.0
        %904 = vmatpush2.msra.mxu0 0.0
        %905 = vmatprep.subr.mxu0 0.0
        %906 = vmatpush2.msra.mxu0 0.0
        %907 = vmatprep.mubr.f32.mxu0 0.0
        %v908 = vand.u32 %v830, 4294901760
        %v909 = vsub.f32 %v830, %v908
        %v910 = vand.u32 %v909, 4294901760
        %v911 = vsub.f32 %v909, %v910
        %v912 = vand.u32 %v911, 4294901760
        %913 = vmatmul.mubr.f32.gmra.mxu0 %v912
        %v914 = vpop.f32.mrf.mxu0
        %v915 = vadd.f32 %v820, %v914
        %v916 = vpop.f32.mrf.mxu0
        %917 = vmatprep.mubr.f32.mxu0 0.0
        %v918 = vand.u32 %v833, 4294901760
        %v919 = vsub.f32 %v833, %v918
        %v920 = vand.u32 %v919, 4294901760
        %v921 = vsub.f32 %v919, %v920
        %v922 = vand.u32 %v921, 4294901760
        %923 = vmatmul.mubr.f32.gmra.mxu0 %v922
        %v924 = vpop.f32.mrf.mxu0
        %v925 = vadd.f32 %v826, %v924
        %v926 = vpop.f32.mrf.mxu0
        %927 = vdwg.mxu0
        %928 = vmatprep.subr.mxu0 0.0
        %929 = vmatpush1.msra.mxu0 0.0
        %930 = vmatprep.subr.mxu0 0.0
        %931 = vmatpush1.msra.mxu0 0.0
        %932 = vmatprep.subr.mxu0 0.0
        %933 = vmatpush1.msra.mxu0 0.0
        %934 = vmatprep.subr.mxu0 0.0
        %935 = vmatpush1.msra.mxu0 0.0
        %936 = vmatprep.subr.mxu0 0.0
        %937 = vmatpush1.msra.mxu0 0.0
        %938 = vmatprep.subr.mxu0 0.0
        %939 = vmatpush1.msra.mxu0 0.0
        %940 = vmatprep.subr.mxu0 0.0
        %941 = vmatpush1.msra.mxu0 0.0
        %942 = vmatprep.subr.mxu0 0.0
        %943 = vmatpush1.msra.mxu0 0.0
        %944 = vmatprep.subr.mxu0 0.0
        %v945 = vand.u32 %v232, 4294901760
        %v946 = vsub.f32 %v232, %v945
        %v947 = vand.u32 %v946, 4294901760
        %v948 = vsub.f32 %v946, %v947
        %v949 = vand.u32 %v948, 4294901760
        %950 = vmatpush1.msra.mxu0 %v949
        %951 = vmatprep.subr.mxu0 0.0
        %v952 = vand.u32 %v231, 4294901760
        %v953 = vsub.f32 %v231, %v952
        %v954 = vand.u32 %v953, 4294901760
        %v955 = vsub.f32 %v953, %v954
        %v956 = vand.u32 %v955, 4294901760
        %957 = vmatpush1.msra.mxu0 %v956
        %958 = vmatprep.subr.mxu0 0.0
        %v959 = vand.u32 %v230, 4294901760
        %v960 = vsub.f32 %v230, %v959
        %v961 = vand.u32 %v960, 4294901760
        %v962 = vsub.f32 %v960, %v961
        %v963 = vand.u32 %v962, 4294901760
        %964 = vmatpush1.msra.mxu0 %v963
        %965 = vmatprep.subr.mxu0 0.0
        %v966 = vand.u32 %v229, 4294901760
        %v967 = vsub.f32 %v229, %v966
        %v968 = vand.u32 %v967, 4294901760
        %v969 = vsub.f32 %v967, %v968
        %v970 = vand.u32 %v969, 4294901760
        %971 = vmatpush1.msra.mxu0 %v970
        %972 = vmatprep.subr.mxu0 0.0
        %v973 = vand.u32 %v228, 4294901760
        %v974 = vsub.f32 %v228, %v973
        %v975 = vand.u32 %v974, 4294901760
        %v976 = vsub.f32 %v974, %v975
        %v977 = vand.u32 %v976, 4294901760
        %978 = vmatpush1.msra.mxu0 %v977
        %979 = vmatprep.subr.mxu0 0.0
        %v980 = vand.u32 %v227, 4294901760
        %v981 = vsub.f32 %v227, %v980
        %v982 = vand.u32 %v981, 4294901760
        %v983 = vsub.f32 %v981, %v982
        %v984 = vand.u32 %v983, 4294901760
        %985 = vmatpush1.msra.mxu0 %v984
        %986 = vmatprep.subr.mxu0 0.0
        %v987 = vand.u32 %v226, 4294901760
        %v988 = vsub.f32 %v226, %v987
        %v989 = vand.u32 %v988, 4294901760
        %v990 = vsub.f32 %v988, %v989
        %v991 = vand.u32 %v990, 4294901760
        %992 = vmatpush1.msra.mxu0 %v991
        %993 = vmatprep.subr.mxu0 0.0
        %v994 = vand.u32 %v225, 4294901760
        %v995 = vsub.f32 %v225, %v994
        %v996 = vand.u32 %v995, 4294901760
        %v997 = vsub.f32 %v995, %v996
        %v998 = vand.u32 %v997, 4294901760
        %999 = vmatpush1.msra.mxu0 %v998
        %1000 = vmatprep.subr.mxu0 0.0
        %1001 = vmatpush2.msra.mxu0 0.0
        %1002 = vmatprep.subr.mxu0 0.0
        %1003 = vmatpush2.msra.mxu0 0.0
        %1004 = vmatprep.subr.mxu0 0.0
        %1005 = vmatpush2.msra.mxu0 0.0
        %1006 = vmatprep.subr.mxu0 0.0
        %1007 = vmatpush2.msra.mxu0 0.0
        %1008 = vmatprep.subr.mxu0 0.0
        %1009 = vmatpush2.msra.mxu0 0.0
        %1010 = vmatprep.subr.mxu0 0.0
        %1011 = vmatpush2.msra.mxu0 0.0
        %1012 = vmatprep.subr.mxu0 0.0
        %1013 = vmatpush2.msra.mxu0 0.0
        %1014 = vmatprep.subr.mxu0 0.0
        %1015 = vmatpush2.msra.mxu0 0.0
        %1016 = vmatprep.subr.mxu0 0.0
        %1017 = vmatpush2.msra.mxu0 0.0
        %1018 = vmatprep.subr.mxu0 0.0
        %1019 = vmatpush2.msra.mxu0 0.0
        %1020 = vmatprep.subr.mxu0 0.0
        %1021 = vmatpush2.msra.mxu0 0.0
        %1022 = vmatprep.subr.mxu0 0.0
        %1023 = vmatpush2.msra.mxu0 0.0
        %1024 = vmatprep.subr.mxu0 0.0
        %1025 = vmatpush2.msra.mxu0 0.0
        %1026 = vmatprep.subr.mxu0 0.0
        %1027 = vmatpush2.msra.mxu0 0.0
        %1028 = vmatprep.subr.mxu0 0.0
        %1029 = vmatpush2.msra.mxu0 0.0
        %1030 = vmatprep.subr.mxu0 0.0
        %1031 = vmatpush2.msra.mxu0 0.0
        %1032 = vmatprep.mubr.f32.mxu0 0.0
        %v1033 = vand.u32 %v830, 4294901760
        %1034 = vmatmul.mubr.f32.gmra.mxu0 %v1033
        %v1035 = vpop.f32.mrf.mxu0
        %v1036 = vadd.f32 %v915, %v1035
        %v1037 = vpop.f32.mrf.mxu0
        %1038 = vmatprep.mubr.f32.mxu0 0.0
        %v1039 = vand.u32 %v833, 4294901760
        %1040 = vmatmul.mubr.f32.gmra.mxu0 %v1039
        %v1041 = vpop.f32.mrf.mxu0
        %v1042 = vadd.f32 %v925, %v1041
        %v1043 = vpop.f32.mrf.mxu0
        %1044 = vdwg.mxu0
        %1045 = vmatprep.subr.mxu0 0.0
        %1046 = vmatpush1.msra.mxu0 0.0
        %1047 = vmatprep.subr.mxu0 0.0
        %1048 = vmatpush1.msra.mxu0 0.0
        %1049 = vmatprep.subr.mxu0 0.0
        %1050 = vmatpush1.msra.mxu0 0.0
        %1051 = vmatprep.subr.mxu0 0.0
        %1052 = vmatpush1.msra.mxu0 0.0
        %1053 = vmatprep.subr.mxu0 0.0
        %1054 = vmatpush1.msra.mxu0 0.0
        %1055 = vmatprep.subr.mxu0 0.0
        %1056 = vmatpush1.msra.mxu0 0.0
        %1057 = vmatprep.subr.mxu0 0.0
        %1058 = vmatpush1.msra.mxu0 0.0
        %1059 = vmatprep.subr.mxu0 0.0
        %1060 = vmatpush1.msra.mxu0 0.0
        %1061 = vmatprep.subr.mxu0 0.0
        %v1062 = vand.u32 %v232, 4294901760
        %v1063 = vsub.f32 %v232, %v1062
        %1064 = vmatpush1.msra.mxu0 %v1063
        %1065 = vmatprep.subr.mxu0 0.0
        %v1066 = vand.u32 %v231, 4294901760
        %v1067 = vsub.f32 %v231, %v1066
        %1068 = vmatpush1.msra.mxu0 %v1067
        %1069 = vmatprep.subr.mxu0 0.0
        %v1070 = vand.u32 %v230, 4294901760
        %v1071 = vsub.f32 %v230, %v1070
        %1072 = vmatpush1.msra.mxu0 %v1071
        %1073 = vmatprep.subr.mxu0 0.0
        %v1074 = vand.u32 %v229, 4294901760
        %v1075 = vsub.f32 %v229, %v1074
        %1076 = vmatpush1.msra.mxu0 %v1075
        %1077 = vmatprep.subr.mxu0 0.0
        %v1078 = vand.u32 %v228, 4294901760
        %v1079 = vsub.f32 %v228, %v1078
        %1080 = vmatpush1.msra.mxu0 %v1079
        %1081 = vmatprep.subr.mxu0 0.0
        %v1082 = vand.u32 %v227, 4294901760
        %v1083 = vsub.f32 %v227, %v1082
        %1084 = vmatpush1.msra.mxu0 %v1083
        %1085 = vmatprep.subr.mxu0 0.0
        %v1086 = vand.u32 %v226, 4294901760
        %v1087 = vsub.f32 %v226, %v1086
        %1088 = vmatpush1.msra.mxu0 %v1087
        %1089 = vmatprep.subr.mxu0 0.0
        %v1090 = vand.u32 %v225, 4294901760
        %v1091 = vsub.f32 %v225, %v1090
        %1092 = vmatpush1.msra.mxu0 %v1091
        %1093 = vmatprep.subr.mxu0 0.0
        %1094 = vmatpush2.msra.mxu0 0.0
        %1095 = vmatprep.subr.mxu0 0.0
        %1096 = vmatpush2.msra.mxu0 0.0
        %1097 = vmatprep.subr.mxu0 0.0
        %1098 = vmatpush2.msra.mxu0 0.0
        %1099 = vmatprep.subr.mxu0 0.0
        %1100 = vmatpush2.msra.mxu0 0.0
        %1101 = vmatprep.subr.mxu0 0.0
        %1102 = vmatpush2.msra.mxu0 0.0
        %1103 = vmatprep.subr.mxu0 0.0
        %1104 = vmatpush2.msra.mxu0 0.0
        %1105 = vmatprep.subr.mxu0 0.0
        %1106 = vmatpush2.msra.mxu0 0.0
        %1107 = vmatprep.subr.mxu0 0.0
        %1108 = vmatpush2.msra.mxu0 0.0
        %1109 = vmatprep.subr.mxu0 0.0
        %1110 = vmatpush2.msra.mxu0 0.0
        %1111 = vmatprep.subr.mxu0 0.0
        %1112 = vmatpush2.msra.mxu0 0.0
        %1113 = vmatprep.subr.mxu0 0.0
        %1114 = vmatpush2.msra.mxu0 0.0
        %1115 = vmatprep.subr.mxu0 0.0
        %1116 = vmatpush2.msra.mxu0 0.0
        %1117 = vmatprep.subr.mxu0 0.0
        %1118 = vmatpush2.msra.mxu0 0.0
        %1119 = vmatprep.subr.mxu0 0.0
        %1120 = vmatpush2.msra.mxu0 0.0
        %1121 = vmatprep.subr.mxu0 0.0
        %1122 = vmatpush2.msra.mxu0 0.0
        %1123 = vmatprep.subr.mxu0 0.0
        %1124 = vmatpush2.msra.mxu0 0.0
        %1125 = vmatprep.mubr.f32.mxu0 0.0
        %v1126 = vand.u32 %v830, 4294901760
        %v1127 = vsub.f32 %v830, %v1126
        %1128 = vmatmul.mubr.f32.gmra.mxu0 %v1127
        %v1129 = vpop.f32.mrf.mxu0
        %v1130 = vadd.f32 %v1036, %v1129
        %v1131 = vpop.f32.mrf.mxu0
        %1132 = vmatprep.mubr.f32.mxu0 0.0
        %v1133 = vand.u32 %v833, 4294901760
        %v1134 = vsub.f32 %v833, %v1133
        %1135 = vmatmul.mubr.f32.gmra.mxu0 %v1134
        %v1136 = vpop.f32.mrf.mxu0
        %v1137 = vadd.f32 %v1042, %v1136
        %v1138 = vpop.f32.mrf.mxu0
        %1139 = vdwg.mxu0
        %1140 = vmatprep.subr.mxu0 0.0
        %1141 = vmatpush1.msra.mxu0 0.0
        %1142 = vmatprep.subr.mxu0 0.0
        %1143 = vmatpush1.msra.mxu0 0.0
        %1144 = vmatprep.subr.mxu0 0.0
        %1145 = vmatpush1.msra.mxu0 0.0
        %1146 = vmatprep.subr.mxu0 0.0
        %1147 = vmatpush1.msra.mxu0 0.0
        %1148 = vmatprep.subr.mxu0 0.0
        %1149 = vmatpush1.msra.mxu0 0.0
        %1150 = vmatprep.subr.mxu0 0.0
        %1151 = vmatpush1.msra.mxu0 0.0
        %1152 = vmatprep.subr.mxu0 0.0
        %1153 = vmatpush1.msra.mxu0 0.0
        %1154 = vmatprep.subr.mxu0 0.0
        %1155 = vmatpush1.msra.mxu0 0.0
        %1156 = vmatprep.subr.mxu0 0.0
        %v1157 = vand.u32 %v232, 4294901760
        %1158 = vmatpush1.msra.mxu0 %v1157
        %1159 = vmatprep.subr.mxu0 0.0
        %v1160 = vand.u32 %v231, 4294901760
        %1161 = vmatpush1.msra.mxu0 %v1160
        %1162 = vmatprep.subr.mxu0 0.0
        %v1163 = vand.u32 %v230, 4294901760
        %1164 = vmatpush1.msra.mxu0 %v1163
        %1165 = vmatprep.subr.mxu0 0.0
        %v1166 = vand.u32 %v229, 4294901760
        %1167 = vmatpush1.msra.mxu0 %v1166
        %1168 = vmatprep.subr.mxu0 0.0
        %v1169 = vand.u32 %v228, 4294901760
        %1170 = vmatpush1.msra.mxu0 %v1169
        %1171 = vmatprep.subr.mxu0 0.0
        %v1172 = vand.u32 %v227, 4294901760
        %1173 = vmatpush1.msra.mxu0 %v1172
        %1174 = vmatprep.subr.mxu0 0.0
        %v1175 = vand.u32 %v226, 4294901760
        %1176 = vmatpush1.msra.mxu0 %v1175
        %1177 = vmatprep.subr.mxu0 0.0
        %v1178 = vand.u32 %v225, 4294901760
        %1179 = vmatpush1.msra.mxu0 %v1178
        %1180 = vmatprep.subr.mxu0 0.0
        %1181 = vmatpush2.msra.mxu0 0.0
        %1182 = vmatprep.subr.mxu0 0.0
        %1183 = vmatpush2.msra.mxu0 0.0
        %1184 = vmatprep.subr.mxu0 0.0
        %1185 = vmatpush2.msra.mxu0 0.0
        %1186 = vmatprep.subr.mxu0 0.0
        %1187 = vmatpush2.msra.mxu0 0.0
        %1188 = vmatprep.subr.mxu0 0.0
        %1189 = vmatpush2.msra.mxu0 0.0
        %1190 = vmatprep.subr.mxu0 0.0
        %1191 = vmatpush2.msra.mxu0 0.0
        %1192 = vmatprep.subr.mxu0 0.0
        %1193 = vmatpush2.msra.mxu0 0.0
        %1194 = vmatprep.subr.mxu0 0.0
        %1195 = vmatpush2.msra.mxu0 0.0
        %1196 = vmatprep.subr.mxu0 0.0
        %1197 = vmatpush2.msra.mxu0 0.0
        %1198 = vmatprep.subr.mxu0 0.0
        %1199 = vmatpush2.msra.mxu0 0.0
        %1200 = vmatprep.subr.mxu0 0.0
        %1201 = vmatpush2.msra.mxu0 0.0
        %1202 = vmatprep.subr.mxu0 0.0
        %1203 = vmatpush2.msra.mxu0 0.0
        %1204 = vmatprep.subr.mxu0 0.0
        %1205 = vmatpush2.msra.mxu0 0.0
        %1206 = vmatprep.subr.mxu0 0.0
        %1207 = vmatpush2.msra.mxu0 0.0
        %1208 = vmatprep.subr.mxu0 0.0
        %1209 = vmatpush2.msra.mxu0 0.0
        %1210 = vmatprep.subr.mxu0 0.0
        %1211 = vmatpush2.msra.mxu0 0.0
        %1212 = vmatprep.mubr.f32.mxu0 0.0
        %v1213 = vand.u32 %v830, 4294901760
        %v1214 = vsub.f32 %v830, %v1213
        %v1215 = vand.u32 %v1214, 4294901760
        %1216 = vmatmul.mubr.f32.gmra.mxu0 %v1215
        %v1217 = vpop.f32.mrf.mxu0
        %v1218 = vadd.f32 %v1130, %v1217
        %v1219 = vpop.f32.mrf.mxu0
        %1220 = vmatprep.mubr.f32.mxu0 0.0
        %v1221 = vand.u32 %v833, 4294901760
        %v1222 = vsub.f32 %v833, %v1221
        %v1223 = vand.u32 %v1222, 4294901760
        %1224 = vmatmul.mubr.f32.gmra.mxu0 %v1223
        %v1225 = vpop.f32.mrf.mxu0
        %v1226 = vadd.f32 %v1137, %v1225
        %v1227 = vpop.f32.mrf.mxu0
        %1228 = vdwg.mxu0
        %1229 = vmatprep.subr.mxu0 0.0
        %1230 = vmatpush1.msra.mxu0 0.0
        %1231 = vmatprep.subr.mxu0 0.0
        %1232 = vmatpush1.msra.mxu0 0.0
        %1233 = vmatprep.subr.mxu0 0.0
        %1234 = vmatpush1.msra.mxu0 0.0
        %1235 = vmatprep.subr.mxu0 0.0
        %1236 = vmatpush1.msra.mxu0 0.0
        %1237 = vmatprep.subr.mxu0 0.0
        %1238 = vmatpush1.msra.mxu0 0.0
        %1239 = vmatprep.subr.mxu0 0.0
        %1240 = vmatpush1.msra.mxu0 0.0
        %1241 = vmatprep.subr.mxu0 0.0
        %1242 = vmatpush1.msra.mxu0 0.0
        %1243 = vmatprep.subr.mxu0 0.0
        %1244 = vmatpush1.msra.mxu0 0.0
        %1245 = vmatprep.subr.mxu0 0.0
        %v1246 = vand.u32 %v232, 4294901760
        %v1247 = vsub.f32 %v232, %v1246
        %v1248 = vand.u32 %v1247, 4294901760
        %1249 = vmatpush1.msra.mxu0 %v1248
        %1250 = vmatprep.subr.mxu0 0.0
        %v1251 = vand.u32 %v231, 4294901760
        %v1252 = vsub.f32 %v231, %v1251
        %v1253 = vand.u32 %v1252, 4294901760
        %1254 = vmatpush1.msra.mxu0 %v1253
        %1255 = vmatprep.subr.mxu0 0.0
        %v1256 = vand.u32 %v230, 4294901760
        %v1257 = vsub.f32 %v230, %v1256
        %v1258 = vand.u32 %v1257, 4294901760
        %1259 = vmatpush1.msra.mxu0 %v1258
        %1260 = vmatprep.subr.mxu0 0.0
        %v1261 = vand.u32 %v229, 4294901760
        %v1262 = vsub.f32 %v229, %v1261
        %v1263 = vand.u32 %v1262, 4294901760
        %1264 = vmatpush1.msra.mxu0 %v1263
        %1265 = vmatprep.subr.mxu0 0.0
        %v1266 = vand.u32 %v228, 4294901760
        %v1267 = vsub.f32 %v228, %v1266
        %v1268 = vand.u32 %v1267, 4294901760
        %1269 = vmatpush1.msra.mxu0 %v1268
        %1270 = vmatprep.subr.mxu0 0.0
        %v1271 = vand.u32 %v227, 4294901760
        %v1272 = vsub.f32 %v227, %v1271
        %v1273 = vand.u32 %v1272, 4294901760
        %1274 = vmatpush1.msra.mxu0 %v1273
        %1275 = vmatprep.subr.mxu0 0.0
        %v1276 = vand.u32 %v226, 4294901760
        %v1277 = vsub.f32 %v226, %v1276
        %v1278 = vand.u32 %v1277, 4294901760
        %1279 = vmatpush1.msra.mxu0 %v1278
        %1280 = vmatprep.subr.mxu0 0.0
        %v1281 = vand.u32 %v225, 4294901760
        %v1282 = vsub.f32 %v225, %v1281
        %v1283 = vand.u32 %v1282, 4294901760
        %1284 = vmatpush1.msra.mxu0 %v1283
        %1285 = vmatprep.subr.mxu0 0.0
        %1286 = vmatpush2.msra.mxu0 0.0
        %1287 = vmatprep.subr.mxu0 0.0
        %1288 = vmatpush2.msra.mxu0 0.0
        %1289 = vmatprep.subr.mxu0 0.0
        %1290 = vmatpush2.msra.mxu0 0.0
        %1291 = vmatprep.subr.mxu0 0.0
        %1292 = vmatpush2.msra.mxu0 0.0
        %1293 = vmatprep.subr.mxu0 0.0
        %1294 = vmatpush2.msra.mxu0 0.0
        %1295 = vmatprep.subr.mxu0 0.0
        %1296 = vmatpush2.msra.mxu0 0.0
        %1297 = vmatprep.subr.mxu0 0.0
        %1298 = vmatpush2.msra.mxu0 0.0
        %1299 = vmatprep.subr.mxu0 0.0
        %1300 = vmatpush2.msra.mxu0 0.0
        %1301 = vmatprep.subr.mxu0 0.0
        %1302 = vmatpush2.msra.mxu0 0.0
        %1303 = vmatprep.subr.mxu0 0.0
        %1304 = vmatpush2.msra.mxu0 0.0
        %1305 = vmatprep.subr.mxu0 0.0
        %1306 = vmatpush2.msra.mxu0 0.0
        %1307 = vmatprep.subr.mxu0 0.0
        %1308 = vmatpush2.msra.mxu0 0.0
        %1309 = vmatprep.subr.mxu0 0.0
        %1310 = vmatpush2.msra.mxu0 0.0
        %1311 = vmatprep.subr.mxu0 0.0
        %1312 = vmatpush2.msra.mxu0 0.0
        %1313 = vmatprep.subr.mxu0 0.0
        %1314 = vmatpush2.msra.mxu0 0.0
        %1315 = vmatprep.subr.mxu0 0.0
        %1316 = vmatpush2.msra.mxu0 0.0
        %1317 = vmatprep.mubr.f32.mxu0 0.0
        %v1318 = vand.u32 %v830, 4294901760
        %1319 = vmatmul.mubr.f32.gmra.mxu0 %v1318
        %v1320 = vpop.f32.mrf.mxu0
        %v1321 = vadd.f32 %v1218, %v1320
        %v1322 = vpop.f32.mrf.mxu0
        %1323 = vmatprep.mubr.f32.mxu0 0.0
        %v1324 = vand.u32 %v833, 4294901760
        %1325 = vmatmul.mubr.f32.gmra.mxu0 %v1324
        %v1326 = vpop.f32.mrf.mxu0
        %v1327 = vadd.f32 %v1226, %v1326
        %v1328 = vpop.f32.mrf.mxu0
        %1329 = vdwg.mxu0
        %1330 = vmatprep.subr.mxu0 0.0
        %1331 = vmatpush1.msra.mxu0 0.0
        %1332 = vmatprep.subr.mxu0 0.0
        %1333 = vmatpush1.msra.mxu0 0.0
        %1334 = vmatprep.subr.mxu0 0.0
        %1335 = vmatpush1.msra.mxu0 0.0
        %1336 = vmatprep.subr.mxu0 0.0
        %1337 = vmatpush1.msra.mxu0 0.0
        %1338 = vmatprep.subr.mxu0 0.0
        %1339 = vmatpush1.msra.mxu0 0.0
        %1340 = vmatprep.subr.mxu0 0.0
        %1341 = vmatpush1.msra.mxu0 0.0
        %1342 = vmatprep.subr.mxu0 0.0
        %1343 = vmatpush1.msra.mxu0 0.0
        %1344 = vmatprep.subr.mxu0 0.0
        %1345 = vmatpush1.msra.mxu0 0.0
        %1346 = vmatprep.subr.mxu0 0.0
        %v1347 = vand.u32 %v232, 4294901760
        %1348 = vmatpush1.msra.mxu0 %v1347
        %1349 = vmatprep.subr.mxu0 0.0
        %v1350 = vand.u32 %v231, 4294901760
        %1351 = vmatpush1.msra.mxu0 %v1350
        %1352 = vmatprep.subr.mxu0 0.0
        %v1353 = vand.u32 %v230, 4294901760
        %1354 = vmatpush1.msra.mxu0 %v1353
        %1355 = vmatprep.subr.mxu0 0.0
        %v1356 = vand.u32 %v229, 4294901760
        %1357 = vmatpush1.msra.mxu0 %v1356
        %1358 = vmatprep.subr.mxu0 0.0
        %v1359 = vand.u32 %v228, 4294901760
        %1360 = vmatpush1.msra.mxu0 %v1359
        %1361 = vmatprep.subr.mxu0 0.0
        %v1362 = vand.u32 %v227, 4294901760
        %1363 = vmatpush1.msra.mxu0 %v1362
        %1364 = vmatprep.subr.mxu0 0.0
        %v1365 = vand.u32 %v226, 4294901760
        %1366 = vmatpush1.msra.mxu0 %v1365
        %1367 = vmatprep.subr.mxu0 0.0
        %v1368 = vand.u32 %v225, 4294901760
        %1369 = vmatpush1.msra.mxu0 %v1368
        %1370 = vmatprep.subr.mxu0 0.0
        %1371 = vmatpush2.msra.mxu0 0.0
        %1372 = vmatprep.subr.mxu0 0.0
        %1373 = vmatpush2.msra.mxu0 0.0
        %1374 = vmatprep.subr.mxu0 0.0
        %1375 = vmatpush2.msra.mxu0 0.0
        %1376 = vmatprep.subr.mxu0 0.0
        %1377 = vmatpush2.msra.mxu0 0.0
        %1378 = vmatprep.subr.mxu0 0.0
        %1379 = vmatpush2.msra.mxu0 0.0
        %1380 = vmatprep.subr.mxu0 0.0
        %1381 = vmatpush2.msra.mxu0 0.0
        %1382 = vmatprep.subr.mxu0 0.0
        %1383 = vmatpush2.msra.mxu0 0.0
        %1384 = vmatprep.subr.mxu0 0.0
        %1385 = vmatpush2.msra.mxu0 0.0
        %1386 = vmatprep.subr.mxu0 0.0
        %1387 = vmatpush2.msra.mxu0 0.0
        %1388 = vmatprep.subr.mxu0 0.0
        %1389 = vmatpush2.msra.mxu0 0.0
        %1390 = vmatprep.subr.mxu0 0.0
        %1391 = vmatpush2.msra.mxu0 0.0
        %1392 = vmatprep.subr.mxu0 0.0
        %1393 = vmatpush2.msra.mxu0 0.0
        %1394 = vmatprep.subr.mxu0 0.0
        %1395 = vmatpush2.msra.mxu0 0.0
        %1396 = vmatprep.subr.mxu0 0.0
        %1397 = vmatpush2.msra.mxu0 0.0
        %1398 = vmatprep.subr.mxu0 0.0
        %1399 = vmatpush2.msra.mxu0 0.0
        %1400 = vmatprep.subr.mxu0 0.0
        %1401 = vmatpush2.msra.mxu0 0.0
        %1402 = vmatprep.mubr.f32.mxu0 0.0
        %v1403 = vand.u32 %v830, 4294901760
        %1404 = vmatmul.mubr.f32.gmra.mxu0 %v1403
        %v1405 = vpop.f32.mrf.mxu0
        %v1406 = vadd.f32 %v1321, %v1405
        %v1407 = vpop.f32.mrf.mxu0
        %1408 = vmatprep.mubr.f32.mxu0 0.0
        %v1409 = vand.u32 %v833, 4294901760
        %1410 = vmatmul.mubr.f32.gmra.mxu0 %v1409
        %v1411 = vpop.f32.mrf.mxu0
        %v1412 = vadd.f32 %v1327, %v1411
        %v1413 = vpop.f32.mrf.mxu0
        %1414 = vdwg.mxu0
        %s1415 = scalar_lea.vmem %s1, 128
        %v1416 = vld [vmem:[%s1415] sm:$0xff]
        %v1417 = vld [vmem:[%s1415 + $0x8] sm:$0xff]
        %v1418 = vld [vmem:[%s1415 + $0x10] sm:$0xff]
        %v1419 = vld [vmem:[%s1415 + $0x18] sm:$0xff]
        %v1420 = vld [vmem:[%s1415 + $0x20] sm:$0xff]
        %v1421 = vld [vmem:[%s1415 + $0x28] sm:$0xff]
        %v1422 = vld [vmem:[%s1415 + $0x30] sm:$0xff]
        %v1423 = vld [vmem:[%s1415 + $0x38] sm:$0xff]
        %v1425 = vsel %vm242, %v223, 0
        %v1428 = vsel %vm242, %v224, 0
        %1430 = vmatprep.subr.mxu0 0.0
        %1431 = vmatpush1.msra.mxu0 0.0
        %1432 = vmatprep.subr.mxu0 0.0
        %1433 = vmatpush1.msra.mxu0 0.0
        %1434 = vmatprep.subr.mxu0 0.0
        %1435 = vmatpush1.msra.mxu0 0.0
        %1436 = vmatprep.subr.mxu0 0.0
        %1437 = vmatpush1.msra.mxu0 0.0
        %1438 = vmatprep.subr.mxu0 0.0
        %1439 = vmatpush1.msra.mxu0 0.0
        %1440 = vmatprep.subr.mxu0 0.0
        %1441 = vmatpush1.msra.mxu0 0.0
        %1442 = vmatprep.subr.mxu0 0.0
        %1443 = vmatpush1.msra.mxu0 0.0
        %1444 = vmatprep.subr.mxu0 0.0
        %1445 = vmatpush1.msra.mxu0 0.0
        %1446 = vmatprep.subr.mxu0 0.0
        %v1447 = vand.u32 %v1423, 4294901760
        %1448 = vmatpush1.msra.mxu0 %v1447
        %1449 = vmatprep.subr.mxu0 0.0
        %v1450 = vand.u32 %v1422, 4294901760
        %1451 = vmatpush1.msra.mxu0 %v1450
        %1452 = vmatprep.subr.mxu0 0.0
        %v1453 = vand.u32 %v1421, 4294901760
        %1454 = vmatpush1.msra.mxu0 %v1453
        %1455 = vmatprep.subr.mxu0 0.0
        %v1456 = vand.u32 %v1420, 4294901760
        %1457 = vmatpush1.msra.mxu0 %v1456
        %1458 = vmatprep.subr.mxu0 0.0
        %v1459 = vand.u32 %v1419, 4294901760
        %1460 = vmatpush1.msra.mxu0 %v1459
        %1461 = vmatprep.subr.mxu0 0.0
        %v1462 = vand.u32 %v1418, 4294901760
        %1463 = vmatpush1.msra.mxu0 %v1462
        %1464 = vmatprep.subr.mxu0 0.0
        %v1465 = vand.u32 %v1417, 4294901760
        %1466 = vmatpush1.msra.mxu0 %v1465
        %1467 = vmatprep.subr.mxu0 0.0
        %v1468 = vand.u32 %v1416, 4294901760
        %1469 = vmatpush1.msra.mxu0 %v1468
        %1470 = vmatprep.subr.mxu0 0.0
        %1471 = vmatpush2.msra.mxu0 0.0
        %1472 = vmatprep.subr.mxu0 0.0
        %1473 = vmatpush2.msra.mxu0 0.0
        %1474 = vmatprep.subr.mxu0 0.0
        %1475 = vmatpush2.msra.mxu0 0.0
        %1476 = vmatprep.subr.mxu0 0.0
        %1477 = vmatpush2.msra.mxu0 0.0
        %1478 = vmatprep.subr.mxu0 0.0
        %1479 = vmatpush2.msra.mxu0 0.0
        %1480 = vmatprep.subr.mxu0 0.0
        %1481 = vmatpush2.msra.mxu0 0.0
        %1482 = vmatprep.subr.mxu0 0.0
        %1483 = vmatpush2.msra.mxu0 0.0
        %1484 = vmatprep.subr.mxu0 0.0
        %1485 = vmatpush2.msra.mxu0 0.0
        %1486 = vmatprep.subr.mxu0 0.0
        %1487 = vmatpush2.msra.mxu0 0.0
        %1488 = vmatprep.subr.mxu0 0.0
        %1489 = vmatpush2.msra.mxu0 0.0
        %1490 = vmatprep.subr.mxu0 0.0
        %1491 = vmatpush2.msra.mxu0 0.0
        %1492 = vmatprep.subr.mxu0 0.0
        %1493 = vmatpush2.msra.mxu0 0.0
        %1494 = vmatprep.subr.mxu0 0.0
        %1495 = vmatpush2.msra.mxu0 0.0
        %1496 = vmatprep.subr.mxu0 0.0
        %1497 = vmatpush2.msra.mxu0 0.0
        %1498 = vmatprep.subr.mxu0 0.0
        %1499 = vmatpush2.msra.mxu0 0.0
        %1500 = vmatprep.subr.mxu0 0.0
        %1501 = vmatpush2.msra.mxu0 0.0
        %1502 = vmatprep.mubr.f32.mxu0 0.0
        %v1503 = vand.u32 %v1425, 4294901760
        %v1504 = vsub.f32 %v1425, %v1503
        %v1505 = vand.u32 %v1504, 4294901760
        %v1506 = vsub.f32 %v1504, %v1505
        %v1507 = vand.u32 %v1506, 4294901760
        %1508 = vmatmul.mubr.f32.gmra.mxu0 %v1507
        %v1509 = vpop.f32.mrf.mxu0
        %v1510 = vadd.f32 0.0, %v1509
        %v1511 = vpop.f32.mrf.mxu0
        %1512 = vmatprep.mubr.f32.mxu0 0.0
        %v1513 = vand.u32 %v1428, 4294901760
        %v1514 = vsub.f32 %v1428, %v1513
        %v1515 = vand.u32 %v1514, 4294901760
        %v1516 = vsub.f32 %v1514, %v1515
        %v1517 = vand.u32 %v1516, 4294901760
        %1518 = vmatmul.mubr.f32.gmra.mxu0 %v1517
        %v1519 = vpop.f32.mrf.mxu0
        %v1520 = vadd.f32 0.0, %v1519
        %v1521 = vpop.f32.mrf.mxu0
        %1522 = vdwg.mxu0
        %1523 = vmatprep.subr.mxu0 0.0
        %1524 = vmatpush1.msra.mxu0 0.0
        %1525 = vmatprep.subr.mxu0 0.0
        %1526 = vmatpush1.msra.mxu0 0.0
        %1527 = vmatprep.subr.mxu0 0.0
        %1528 = vmatpush1.msra.mxu0 0.0
        %1529 = vmatprep.subr.mxu0 0.0
        %1530 = vmatpush1.msra.mxu0 0.0
        %1531 = vmatprep.subr.mxu0 0.0
        %1532 = vmatpush1.msra.mxu0 0.0
        %1533 = vmatprep.subr.mxu0 0.0
        %1534 = vmatpush1.msra.mxu0 0.0
        %1535 = vmatprep.subr.mxu0 0.0
        %1536 = vmatpush1.msra.mxu0 0.0
        %1537 = vmatprep.subr.mxu0 0.0
        %1538 = vmatpush1.msra.mxu0 0.0
        %1539 = vmatprep.subr.mxu0 0.0
        %v1540 = vand.u32 %v1423, 4294901760
        %v1541 = vsub.f32 %v1423, %v1540
        %v1542 = vand.u32 %v1541, 4294901760
        %v1543 = vsub.f32 %v1541, %v1542
        %v1544 = vand.u32 %v1543, 4294901760
        %1545 = vmatpush1.msra.mxu0 %v1544
        %1546 = vmatprep.subr.mxu0 0.0
        %v1547 = vand.u32 %v1422, 4294901760
        %v1548 = vsub.f32 %v1422, %v1547
        %v1549 = vand.u32 %v1548, 4294901760
        %v1550 = vsub.f32 %v1548, %v1549
        %v1551 = vand.u32 %v1550, 4294901760
        %1552 = vmatpush1.msra.mxu0 %v1551
        %1553 = vmatprep.subr.mxu0 0.0
        %v1554 = vand.u32 %v1421, 4294901760
        %v1555 = vsub.f32 %v1421, %v1554
        %v1556 = vand.u32 %v1555, 4294901760
        %v1557 = vsub.f32 %v1555, %v1556
        %v1558 = vand.u32 %v1557, 4294901760
        %1559 = vmatpush1.msra.mxu0 %v1558
        %1560 = vmatprep.subr.mxu0 0.0
        %v1561 = vand.u32 %v1420, 4294901760
        %v1562 = vsub.f32 %v1420, %v1561
        %v1563 = vand.u32 %v1562, 4294901760
        %v1564 = vsub.f32 %v1562, %v1563
        %v1565 = vand.u32 %v1564, 4294901760
        %1566 = vmatpush1.msra.mxu0 %v1565
        %1567 = vmatprep.subr.mxu0 0.0
        %v1568 = vand.u32 %v1419, 4294901760
        %v1569 = vsub.f32 %v1419, %v1568
        %v1570 = vand.u32 %v1569, 4294901760
        %v1571 = vsub.f32 %v1569, %v1570
        %v1572 = vand.u32 %v1571, 4294901760
        %1573 = vmatpush1.msra.mxu0 %v1572
        %1574 = vmatprep.subr.mxu0 0.0
        %v1575 = vand.u32 %v1418, 4294901760
        %v1576 = vsub.f32 %v1418, %v1575
        %v1577 = vand.u32 %v1576, 4294901760
        %v1578 = vsub.f32 %v1576, %v1577
        %v1579 = vand.u32 %v1578, 4294901760
        %1580 = vmatpush1.msra.mxu0 %v1579
        %1581 = vmatprep.subr.mxu0 0.0
        %v1582 = vand.u32 %v1417, 4294901760
        %v1583 = vsub.f32 %v1417, %v1582
        %v1584 = vand.u32 %v1583, 4294901760
        %v1585 = vsub.f32 %v1583, %v1584
        %v1586 = vand.u32 %v1585, 4294901760
        %1587 = vmatpush1.msra.mxu0 %v1586
        %1588 = vmatprep.subr.mxu0 0.0
        %v1589 = vand.u32 %v1416, 4294901760
        %v1590 = vsub.f32 %v1416, %v1589
        %v1591 = vand.u32 %v1590, 4294901760
        %v1592 = vsub.f32 %v1590, %v1591
        %v1593 = vand.u32 %v1592, 4294901760
        %1594 = vmatpush1.msra.mxu0 %v1593
        %1595 = vmatprep.subr.mxu0 0.0
        %1596 = vmatpush2.msra.mxu0 0.0
        %1597 = vmatprep.subr.mxu0 0.0
        %1598 = vmatpush2.msra.mxu0 0.0
        %1599 = vmatprep.subr.mxu0 0.0
        %1600 = vmatpush2.msra.mxu0 0.0
        %1601 = vmatprep.subr.mxu0 0.0
        %1602 = vmatpush2.msra.mxu0 0.0
        %1603 = vmatprep.subr.mxu0 0.0
        %1604 = vmatpush2.msra.mxu0 0.0
        %1605 = vmatprep.subr.mxu0 0.0
        %1606 = vmatpush2.msra.mxu0 0.0
        %1607 = vmatprep.subr.mxu0 0.0
        %1608 = vmatpush2.msra.mxu0 0.0
        %1609 = vmatprep.subr.mxu0 0.0
        %1610 = vmatpush2.msra.mxu0 0.0
        %1611 = vmatprep.subr.mxu0 0.0
        %1612 = vmatpush2.msra.mxu0 0.0
        %1613 = vmatprep.subr.mxu0 0.0
        %1614 = vmatpush2.msra.mxu0 0.0
        %1615 = vmatprep.subr.mxu0 0.0
        %1616 = vmatpush2.msra.mxu0 0.0
        %1617 = vmatprep.subr.mxu0 0.0
        %1618 = vmatpush2.msra.mxu0 0.0
        %1619 = vmatprep.subr.mxu0 0.0
        %1620 = vmatpush2.msra.mxu0 0.0
        %1621 = vmatprep.subr.mxu0 0.0
        %1622 = vmatpush2.msra.mxu0 0.0
        %1623 = vmatprep.subr.mxu0 0.0
        %1624 = vmatpush2.msra.mxu0 0.0
        %1625 = vmatprep.subr.mxu0 0.0
        %1626 = vmatpush2.msra.mxu0 0.0
        %1627 = vmatprep.mubr.f32.mxu0 0.0
        %v1628 = vand.u32 %v1425, 4294901760
        %1629 = vmatmul.mubr.f32.gmra.mxu0 %v1628
        %v1630 = vpop.f32.mrf.mxu0
        %v1631 = vadd.f32 %v1510, %v1630
        %v1632 = vpop.f32.mrf.mxu0
        %1633 = vmatprep.mubr.f32.mxu0 0.0
        %v1634 = vand.u32 %v1428, 4294901760
        %1635 = vmatmul.mubr.f32.gmra.mxu0 %v1634
        %v1636 = vpop.f32.mrf.mxu0
        %v1637 = vadd.f32 %v1520, %v1636
        %v1638 = vpop.f32.mrf.mxu0
        %1639 = vdwg.mxu0
        %1640 = vmatprep.subr.mxu0 0.0
        %1641 = vmatpush1.msra.mxu0 0.0
        %1642 = vmatprep.subr.mxu0 0.0
        %1643 = vmatpush1.msra.mxu0 0.0
        %1644 = vmatprep.subr.mxu0 0.0
        %1645 = vmatpush1.msra.mxu0 0.0
        %1646 = vmatprep.subr.mxu0 0.0
        %1647 = vmatpush1.msra.mxu0 0.0
        %1648 = vmatprep.subr.mxu0 0.0
        %1649 = vmatpush1.msra.mxu0 0.0
        %1650 = vmatprep.subr.mxu0 0.0
        %1651 = vmatpush1.msra.mxu0 0.0
        %1652 = vmatprep.subr.mxu0 0.0
        %1653 = vmatpush1.msra.mxu0 0.0
        %1654 = vmatprep.subr.mxu0 0.0
        %1655 = vmatpush1.msra.mxu0 0.0
        %1656 = vmatprep.subr.mxu0 0.0
        %v1657 = vand.u32 %v1423, 4294901760
        %v1658 = vsub.f32 %v1423, %v1657
        %1659 = vmatpush1.msra.mxu0 %v1658
        %1660 = vmatprep.subr.mxu0 0.0
        %v1661 = vand.u32 %v1422, 4294901760
        %v1662 = vsub.f32 %v1422, %v1661
        %1663 = vmatpush1.msra.mxu0 %v1662
        %1664 = vmatprep.subr.mxu0 0.0
        %v1665 = vand.u32 %v1421, 4294901760
        %v1666 = vsub.f32 %v1421, %v1665
        %1667 = vmatpush1.msra.mxu0 %v1666
        %1668 = vmatprep.subr.mxu0 0.0
        %v1669 = vand.u32 %v1420, 4294901760
        %v1670 = vsub.f32 %v1420, %v1669
        %1671 = vmatpush1.msra.mxu0 %v1670
        %1672 = vmatprep.subr.mxu0 0.0
        %v1673 = vand.u32 %v1419, 4294901760
        %v1674 = vsub.f32 %v1419, %v1673
        %1675 = vmatpush1.msra.mxu0 %v1674
        %1676 = vmatprep.subr.mxu0 0.0
        %v1677 = vand.u32 %v1418, 4294901760
        %v1678 = vsub.f32 %v1418, %v1677
        %1679 = vmatpush1.msra.mxu0 %v1678
        %1680 = vmatprep.subr.mxu0 0.0
        %v1681 = vand.u32 %v1417, 4294901760
        %v1682 = vsub.f32 %v1417, %v1681
        %1683 = vmatpush1.msra.mxu0 %v1682
        %1684 = vmatprep.subr.mxu0 0.0
        %v1685 = vand.u32 %v1416, 4294901760
        %v1686 = vsub.f32 %v1416, %v1685
        %1687 = vmatpush1.msra.mxu0 %v1686
        %1688 = vmatprep.subr.mxu0 0.0
        %1689 = vmatpush2.msra.mxu0 0.0
        %1690 = vmatprep.subr.mxu0 0.0
        %1691 = vmatpush2.msra.mxu0 0.0
        %1692 = vmatprep.subr.mxu0 0.0
        %1693 = vmatpush2.msra.mxu0 0.0
        %1694 = vmatprep.subr.mxu0 0.0
        %1695 = vmatpush2.msra.mxu0 0.0
        %1696 = vmatprep.subr.mxu0 0.0
        %1697 = vmatpush2.msra.mxu0 0.0
        %1698 = vmatprep.subr.mxu0 0.0
        %1699 = vmatpush2.msra.mxu0 0.0
        %1700 = vmatprep.subr.mxu0 0.0
        %1701 = vmatpush2.msra.mxu0 0.0
        %1702 = vmatprep.subr.mxu0 0.0
        %1703 = vmatpush2.msra.mxu0 0.0
        %1704 = vmatprep.subr.mxu0 0.0
        %1705 = vmatpush2.msra.mxu0 0.0
        %1706 = vmatprep.subr.mxu0 0.0
        %1707 = vmatpush2.msra.mxu0 0.0
        %1708 = vmatprep.subr.mxu0 0.0
        %1709 = vmatpush2.msra.mxu0 0.0
        %1710 = vmatprep.subr.mxu0 0.0
        %1711 = vmatpush2.msra.mxu0 0.0
        %1712 = vmatprep.subr.mxu0 0.0
        %1713 = vmatpush2.msra.mxu0 0.0
        %1714 = vmatprep.subr.mxu0 0.0
        %1715 = vmatpush2.msra.mxu0 0.0
        %1716 = vmatprep.subr.mxu0 0.0
        %1717 = vmatpush2.msra.mxu0 0.0
        %1718 = vmatprep.subr.mxu0 0.0
        %1719 = vmatpush2.msra.mxu0 0.0
        %1720 = vmatprep.mubr.f32.mxu0 0.0
        %v1721 = vand.u32 %v1425, 4294901760
        %v1722 = vsub.f32 %v1425, %v1721
        %1723 = vmatmul.mubr.f32.gmra.mxu0 %v1722
        %v1724 = vpop.f32.mrf.mxu0
        %v1725 = vadd.f32 %v1631, %v1724
        %v1726 = vpop.f32.mrf.mxu0
        %1727 = vmatprep.mubr.f32.mxu0 0.0
        %v1728 = vand.u32 %v1428, 4294901760
        %v1729 = vsub.f32 %v1428, %v1728
        %1730 = vmatmul.mubr.f32.gmra.mxu0 %v1729
        %v1731 = vpop.f32.mrf.mxu0
        %v1732 = vadd.f32 %v1637, %v1731
        %v1733 = vpop.f32.mrf.mxu0
        %1734 = vdwg.mxu0
        %1735 = vmatprep.subr.mxu0 0.0
        %1736 = vmatpush1.msra.mxu0 0.0
        %1737 = vmatprep.subr.mxu0 0.0
        %1738 = vmatpush1.msra.mxu0 0.0
        %1739 = vmatprep.subr.mxu0 0.0
        %1740 = vmatpush1.msra.mxu0 0.0
        %1741 = vmatprep.subr.mxu0 0.0
        %1742 = vmatpush1.msra.mxu0 0.0
        %1743 = vmatprep.subr.mxu0 0.0
        %1744 = vmatpush1.msra.mxu0 0.0
        %1745 = vmatprep.subr.mxu0 0.0
        %1746 = vmatpush1.msra.mxu0 0.0
        %1747 = vmatprep.subr.mxu0 0.0
        %1748 = vmatpush1.msra.mxu0 0.0
        %1749 = vmatprep.subr.mxu0 0.0
        %1750 = vmatpush1.msra.mxu0 0.0
        %1751 = vmatprep.subr.mxu0 0.0
        %v1752 = vand.u32 %v1423, 4294901760
        %1753 = vmatpush1.msra.mxu0 %v1752
        %1754 = vmatprep.subr.mxu0 0.0
        %v1755 = vand.u32 %v1422, 4294901760
        %1756 = vmatpush1.msra.mxu0 %v1755
        %1757 = vmatprep.subr.mxu0 0.0
        %v1758 = vand.u32 %v1421, 4294901760
        %1759 = vmatpush1.msra.mxu0 %v1758
        %1760 = vmatprep.subr.mxu0 0.0
        %v1761 = vand.u32 %v1420, 4294901760
        %1762 = vmatpush1.msra.mxu0 %v1761
        %1763 = vmatprep.subr.mxu0 0.0
        %v1764 = vand.u32 %v1419, 4294901760
        %1765 = vmatpush1.msra.mxu0 %v1764
        %1766 = vmatprep.subr.mxu0 0.0
        %v1767 = vand.u32 %v1418, 4294901760
        %1768 = vmatpush1.msra.mxu0 %v1767
        %1769 = vmatprep.subr.mxu0 0.0
        %v1770 = vand.u32 %v1417, 4294901760
        %1771 = vmatpush1.msra.mxu0 %v1770
        %1772 = vmatprep.subr.mxu0 0.0
        %v1773 = vand.u32 %v1416, 4294901760
        %1774 = vmatpush1.msra.mxu0 %v1773
        %1775 = vmatprep.subr.mxu0 0.0
        %1776 = vmatpush2.msra.mxu0 0.0
        %1777 = vmatprep.subr.mxu0 0.0
        %1778 = vmatpush2.msra.mxu0 0.0
        %1779 = vmatprep.subr.mxu0 0.0
        %1780 = vmatpush2.msra.mxu0 0.0
        %1781 = vmatprep.subr.mxu0 0.0
        %1782 = vmatpush2.msra.mxu0 0.0
        %1783 = vmatprep.subr.mxu0 0.0
        %1784 = vmatpush2.msra.mxu0 0.0
        %1785 = vmatprep.subr.mxu0 0.0
        %1786 = vmatpush2.msra.mxu0 0.0
        %1787 = vmatprep.subr.mxu0 0.0
        %1788 = vmatpush2.msra.mxu0 0.0
        %1789 = vmatprep.subr.mxu0 0.0
        %1790 = vmatpush2.msra.mxu0 0.0
        %1791 = vmatprep.subr.mxu0 0.0
        %1792 = vmatpush2.msra.mxu0 0.0
        %1793 = vmatprep.subr.mxu0 0.0
        %1794 = vmatpush2.msra.mxu0 0.0
        %1795 = vmatprep.subr.mxu0 0.0
        %1796 = vmatpush2.msra.mxu0 0.0
        %1797 = vmatprep.subr.mxu0 0.0
        %1798 = vmatpush2.msra.mxu0 0.0
        %1799 = vmatprep.subr.mxu0 0.0
        %1800 = vmatpush2.msra.mxu0 0.0
        %1801 = vmatprep.subr.mxu0 0.0
        %1802 = vmatpush2.msra.mxu0 0.0
        %1803 = vmatprep.subr.mxu0 0.0
        %1804 = vmatpush2.msra.mxu0 0.0
        %1805 = vmatprep.subr.mxu0 0.0
        %1806 = vmatpush2.msra.mxu0 0.0
        %1807 = vmatprep.mubr.f32.mxu0 0.0
        %v1808 = vand.u32 %v1425, 4294901760
        %v1809 = vsub.f32 %v1425, %v1808
        %v1810 = vand.u32 %v1809, 4294901760
        %1811 = vmatmul.mubr.f32.gmra.mxu0 %v1810
        %v1812 = vpop.f32.mrf.mxu0
        %v1813 = vadd.f32 %v1725, %v1812
        %v1814 = vpop.f32.mrf.mxu0
        %1815 = vmatprep.mubr.f32.mxu0 0.0
        %v1816 = vand.u32 %v1428, 4294901760
        %v1817 = vsub.f32 %v1428, %v1816
        %v1818 = vand.u32 %v1817, 4294901760
        %1819 = vmatmul.mubr.f32.gmra.mxu0 %v1818
        %v1820 = vpop.f32.mrf.mxu0
        %v1821 = vadd.f32 %v1732, %v1820
        %v1822 = vpop.f32.mrf.mxu0
        %1823 = vdwg.mxu0
        %1824 = vmatprep.subr.mxu0 0.0
        %1825 = vmatpush1.msra.mxu0 0.0
        %1826 = vmatprep.subr.mxu0 0.0
        %1827 = vmatpush1.msra.mxu0 0.0
        %1828 = vmatprep.subr.mxu0 0.0
        %1829 = vmatpush1.msra.mxu0 0.0
        %1830 = vmatprep.subr.mxu0 0.0
        %1831 = vmatpush1.msra.mxu0 0.0
        %1832 = vmatprep.subr.mxu0 0.0
        %1833 = vmatpush1.msra.mxu0 0.0
        %1834 = vmatprep.subr.mxu0 0.0
        %1835 = vmatpush1.msra.mxu0 0.0
        %1836 = vmatprep.subr.mxu0 0.0
        %1837 = vmatpush1.msra.mxu0 0.0
        %1838 = vmatprep.subr.mxu0 0.0
        %1839 = vmatpush1.msra.mxu0 0.0
        %1840 = vmatprep.subr.mxu0 0.0
        %v1841 = vand.u32 %v1423, 4294901760
        %v1842 = vsub.f32 %v1423, %v1841
        %v1843 = vand.u32 %v1842, 4294901760
        %1844 = vmatpush1.msra.mxu0 %v1843
        %1845 = vmatprep.subr.mxu0 0.0
        %v1846 = vand.u32 %v1422, 4294901760
        %v1847 = vsub.f32 %v1422, %v1846
        %v1848 = vand.u32 %v1847, 4294901760
        %1849 = vmatpush1.msra.mxu0 %v1848
        %1850 = vmatprep.subr.mxu0 0.0
        %v1851 = vand.u32 %v1421, 4294901760
        %v1852 = vsub.f32 %v1421, %v1851
        %v1853 = vand.u32 %v1852, 4294901760
        %1854 = vmatpush1.msra.mxu0 %v1853
        %1855 = vmatprep.subr.mxu0 0.0
        %v1856 = vand.u32 %v1420, 4294901760
        %v1857 = vsub.f32 %v1420, %v1856
        %v1858 = vand.u32 %v1857, 4294901760
        %1859 = vmatpush1.msra.mxu0 %v1858
        %1860 = vmatprep.subr.mxu0 0.0
        %v1861 = vand.u32 %v1419, 4294901760
        %v1862 = vsub.f32 %v1419, %v1861
        %v1863 = vand.u32 %v1862, 4294901760
        %1864 = vmatpush1.msra.mxu0 %v1863
        %1865 = vmatprep.subr.mxu0 0.0
        %v1866 = vand.u32 %v1418, 4294901760
        %v1867 = vsub.f32 %v1418, %v1866
        %v1868 = vand.u32 %v1867, 4294901760
        %1869 = vmatpush1.msra.mxu0 %v1868
        %1870 = vmatprep.subr.mxu0 0.0
        %v1871 = vand.u32 %v1417, 4294901760
        %v1872 = vsub.f32 %v1417, %v1871
        %v1873 = vand.u32 %v1872, 4294901760
        %1874 = vmatpush1.msra.mxu0 %v1873
        %1875 = vmatprep.subr.mxu0 0.0
        %v1876 = vand.u32 %v1416, 4294901760
        %v1877 = vsub.f32 %v1416, %v1876
        %v1878 = vand.u32 %v1877, 4294901760
        %1879 = vmatpush1.msra.mxu0 %v1878
        %1880 = vmatprep.subr.mxu0 0.0
        %1881 = vmatpush2.msra.mxu0 0.0
        %1882 = vmatprep.subr.mxu0 0.0
        %1883 = vmatpush2.msra.mxu0 0.0
        %1884 = vmatprep.subr.mxu0 0.0
        %1885 = vmatpush2.msra.mxu0 0.0
        %1886 = vmatprep.subr.mxu0 0.0
        %1887 = vmatpush2.msra.mxu0 0.0
        %1888 = vmatprep.subr.mxu0 0.0
        %1889 = vmatpush2.msra.mxu0 0.0
        %1890 = vmatprep.subr.mxu0 0.0
        %1891 = vmatpush2.msra.mxu0 0.0
        %1892 = vmatprep.subr.mxu0 0.0
        %1893 = vmatpush2.msra.mxu0 0.0
        %1894 = vmatprep.subr.mxu0 0.0
        %1895 = vmatpush2.msra.mxu0 0.0
        %1896 = vmatprep.subr.mxu0 0.0
        %1897 = vmatpush2.msra.mxu0 0.0
        %1898 = vmatprep.subr.mxu0 0.0
        %1899 = vmatpush2.msra.mxu0 0.0
        %1900 = vmatprep.subr.mxu0 0.0
        %1901 = vmatpush2.msra.mxu0 0.0
        %1902 = vmatprep.subr.mxu0 0.0
        %1903 = vmatpush2.msra.mxu0 0.0
        %1904 = vmatprep.subr.mxu0 0.0
        %1905 = vmatpush2.msra.mxu0 0.0
        %1906 = vmatprep.subr.mxu0 0.0
        %1907 = vmatpush2.msra.mxu0 0.0
        %1908 = vmatprep.subr.mxu0 0.0
        %1909 = vmatpush2.msra.mxu0 0.0
        %1910 = vmatprep.subr.mxu0 0.0
        %1911 = vmatpush2.msra.mxu0 0.0
        %1912 = vmatprep.mubr.f32.mxu0 0.0
        %v1913 = vand.u32 %v1425, 4294901760
        %1914 = vmatmul.mubr.f32.gmra.mxu0 %v1913
        %v1915 = vpop.f32.mrf.mxu0
        %v1916 = vadd.f32 %v1813, %v1915
        %v1917 = vpop.f32.mrf.mxu0
        %1918 = vmatprep.mubr.f32.mxu0 0.0
        %v1919 = vand.u32 %v1428, 4294901760
        %1920 = vmatmul.mubr.f32.gmra.mxu0 %v1919
        %v1921 = vpop.f32.mrf.mxu0
        %v1922 = vadd.f32 %v1821, %v1921
        %v1923 = vpop.f32.mrf.mxu0
        %1924 = vdwg.mxu0
        %1925 = vmatprep.subr.mxu0 0.0
        %1926 = vmatpush1.msra.mxu0 0.0
        %1927 = vmatprep.subr.mxu0 0.0
        %1928 = vmatpush1.msra.mxu0 0.0
        %1929 = vmatprep.subr.mxu0 0.0
        %1930 = vmatpush1.msra.mxu0 0.0
        %1931 = vmatprep.subr.mxu0 0.0
        %1932 = vmatpush1.msra.mxu0 0.0
        %1933 = vmatprep.subr.mxu0 0.0
        %1934 = vmatpush1.msra.mxu0 0.0
        %1935 = vmatprep.subr.mxu0 0.0
        %1936 = vmatpush1.msra.mxu0 0.0
        %1937 = vmatprep.subr.mxu0 0.0
        %1938 = vmatpush1.msra.mxu0 0.0
        %1939 = vmatprep.subr.mxu0 0.0
        %1940 = vmatpush1.msra.mxu0 0.0
        %1941 = vmatprep.subr.mxu0 0.0
        %v1942 = vand.u32 %v1423, 4294901760
        %1943 = vmatpush1.msra.mxu0 %v1942
        %1944 = vmatprep.subr.mxu0 0.0
        %v1945 = vand.u32 %v1422, 4294901760
        %1946 = vmatpush1.msra.mxu0 %v1945
        %1947 = vmatprep.subr.mxu0 0.0
        %v1948 = vand.u32 %v1421, 4294901760
        %1949 = vmatpush1.msra.mxu0 %v1948
        %1950 = vmatprep.subr.mxu0 0.0
        %v1951 = vand.u32 %v1420, 4294901760
        %1952 = vmatpush1.msra.mxu0 %v1951
        %1953 = vmatprep.subr.mxu0 0.0
        %v1954 = vand.u32 %v1419, 4294901760
        %1955 = vmatpush1.msra.mxu0 %v1954
        %1956 = vmatprep.subr.mxu0 0.0
        %v1957 = vand.u32 %v1418, 4294901760
        %1958 = vmatpush1.msra.mxu0 %v1957
        %1959 = vmatprep.subr.mxu0 0.0
        %v1960 = vand.u32 %v1417, 4294901760
        %1961 = vmatpush1.msra.mxu0 %v1960
        %1962 = vmatprep.subr.mxu0 0.0
        %v1963 = vand.u32 %v1416, 4294901760
        %1964 = vmatpush1.msra.mxu0 %v1963
        %1965 = vmatprep.subr.mxu0 0.0
        %1966 = vmatpush2.msra.mxu0 0.0
        %1967 = vmatprep.subr.mxu0 0.0
        %1968 = vmatpush2.msra.mxu0 0.0
        %1969 = vmatprep.subr.mxu0 0.0
        %1970 = vmatpush2.msra.mxu0 0.0
        %1971 = vmatprep.subr.mxu0 0.0
        %1972 = vmatpush2.msra.mxu0 0.0
        %1973 = vmatprep.subr.mxu0 0.0
        %1974 = vmatpush2.msra.mxu0 0.0
        %1975 = vmatprep.subr.mxu0 0.0
        %1976 = vmatpush2.msra.mxu0 0.0
        %1977 = vmatprep.subr.mxu0 0.0
        %1978 = vmatpush2.msra.mxu0 0.0
        %1979 = vmatprep.subr.mxu0 0.0
        %1980 = vmatpush2.msra.mxu0 0.0
        %1981 = vmatprep.subr.mxu0 0.0
        %1982 = vmatpush2.msra.mxu0 0.0
        %1983 = vmatprep.subr.mxu0 0.0
        %1984 = vmatpush2.msra.mxu0 0.0
        %1985 = vmatprep.subr.mxu0 0.0
        %1986 = vmatpush2.msra.mxu0 0.0
        %1987 = vmatprep.subr.mxu0 0.0
        %1988 = vmatpush2.msra.mxu0 0.0
        %1989 = vmatprep.subr.mxu0 0.0
        %1990 = vmatpush2.msra.mxu0 0.0
        %1991 = vmatprep.subr.mxu0 0.0
        %1992 = vmatpush2.msra.mxu0 0.0
        %1993 = vmatprep.subr.mxu0 0.0
        %1994 = vmatpush2.msra.mxu0 0.0
        %1995 = vmatprep.subr.mxu0 0.0
        %1996 = vmatpush2.msra.mxu0 0.0
        %1997 = vmatprep.mubr.f32.mxu0 0.0
        %v1998 = vand.u32 %v1425, 4294901760
        %1999 = vmatmul.mubr.f32.gmra.mxu0 %v1998
        %v2000 = vpop.f32.mrf.mxu0
        %v2001 = vadd.f32 %v1916, %v2000
        %v2002 = vpop.f32.mrf.mxu0
        %2003 = vmatprep.mubr.f32.mxu0 0.0
        %v2004 = vand.u32 %v1428, 4294901760
        %2005 = vmatmul.mubr.f32.gmra.mxu0 %v2004
        %v2006 = vpop.f32.mrf.mxu0
        %v2007 = vadd.f32 %v1922, %v2006
        %v2008 = vpop.f32.mrf.mxu0
        %2009 = vdwg.mxu0
        %v2010 = vadd.f32 %v1406, %v2001
        %v2011 = vadd.f32 %v1412, %v2007
        %v2012 = vld [vmem:[%s2] sm:$0xff]
        %v2013 = vld [vmem:[%s2 + $0x8] sm:$0xff]
        %v2014 = vld [vmem:[%s2 + $0x10] sm:$0xff]
        %v2015 = vld [vmem:[%s2 + $0x18] sm:$0xff]
        %s2016 = scalar_lea.vmem %s1, 192
        %v2017 = vld [vmem:[%s2016] sm:$0xff]
        %v2018 = vld [vmem:[%s2016 + $0x8] sm:$0xff]
        %v2019 = vld [vmem:[%s2016 + $0x10] sm:$0xff]
        %v2020 = vld [vmem:[%s2016 + $0x18] sm:$0xff]
        %v2021 = vld [vmem:[%s2016 + $0x20] sm:$0xff]
        %v2022 = vld [vmem:[%s2016 + $0x28] sm:$0xff]
        %v2023 = vld [vmem:[%s2016 + $0x30] sm:$0xff]
        %v2024 = vld [vmem:[%s2016 + $0x38] sm:$0xff]
        %s2025 = scalar_lea.vmem %s1, 256
        %v2026 = vld [vmem:[%s2025] sm:$0xff]
        %v2027 = vld [vmem:[%s2025 + $0x8] sm:$0xff]
        %v2028 = vld [vmem:[%s2025 + $0x10] sm:$0xff]
        %v2029 = vld [vmem:[%s2025 + $0x18] sm:$0xff]
        %v2030 = vld [vmem:[%s2025 + $0x20] sm:$0xff]
        %v2031 = vld [vmem:[%s2025 + $0x28] sm:$0xff]
        %v2032 = vld [vmem:[%s2025 + $0x30] sm:$0xff]
        %v2033 = vld [vmem:[%s2025 + $0x38] sm:$0xff]
        %2034 = vmatprep.subr.mxu0 0.0
        %2035 = vmatpush1.msra.mxu0 0.0
        %2036 = vmatprep.subr.mxu0 0.0
        %2037 = vmatpush1.msra.mxu0 0.0
        %2038 = vmatprep.subr.mxu0 0.0
        %2039 = vmatpush1.msra.mxu0 0.0
        %2040 = vmatprep.subr.mxu0 0.0
        %2041 = vmatpush1.msra.mxu0 0.0
        %2042 = vmatprep.subr.mxu0 0.0
        %2043 = vmatpush1.msra.mxu0 0.0
        %2044 = vmatprep.subr.mxu0 0.0
        %2045 = vmatpush1.msra.mxu0 0.0
        %2046 = vmatprep.subr.mxu0 0.0
        %2047 = vmatpush1.msra.mxu0 0.0
        %2048 = vmatprep.subr.mxu0 0.0
        %2049 = vmatpush1.msra.mxu0 0.0
        %2050 = vmatprep.subr.mxu0 0.0
        %v2051 = vand.u32 %v2033, 4294901760
        %2052 = vmatpush1.msra.mxu0 %v2051
        %2053 = vmatprep.subr.mxu0 0.0
        %v2054 = vand.u32 %v2032, 4294901760
        %2055 = vmatpush1.msra.mxu0 %v2054
        %2056 = vmatprep.subr.mxu0 0.0
        %v2057 = vand.u32 %v2031, 4294901760
        %2058 = vmatpush1.msra.mxu0 %v2057
        %2059 = vmatprep.subr.mxu0 0.0
        %v2060 = vand.u32 %v2030, 4294901760
        %2061 = vmatpush1.msra.mxu0 %v2060
        %2062 = vmatprep.subr.mxu0 0.0
        %v2063 = vand.u32 %v2029, 4294901760
        %2064 = vmatpush1.msra.mxu0 %v2063
        %2065 = vmatprep.subr.mxu0 0.0
        %v2066 = vand.u32 %v2028, 4294901760
        %2067 = vmatpush1.msra.mxu0 %v2066
        %2068 = vmatprep.subr.mxu0 0.0
        %v2069 = vand.u32 %v2027, 4294901760
        %2070 = vmatpush1.msra.mxu0 %v2069
        %2071 = vmatprep.subr.mxu0 0.0
        %v2072 = vand.u32 %v2026, 4294901760
        %2073 = vmatpush1.msra.mxu0 %v2072
        %2074 = vmatprep.subr.mxu0 0.0
        %2075 = vmatpush2.msra.mxu0 0.0
        %2076 = vmatprep.subr.mxu0 0.0
        %2077 = vmatpush2.msra.mxu0 0.0
        %2078 = vmatprep.subr.mxu0 0.0
        %2079 = vmatpush2.msra.mxu0 0.0
        %2080 = vmatprep.subr.mxu0 0.0
        %2081 = vmatpush2.msra.mxu0 0.0
        %2082 = vmatprep.subr.mxu0 0.0
        %2083 = vmatpush2.msra.mxu0 0.0
        %2084 = vmatprep.subr.mxu0 0.0
        %2085 = vmatpush2.msra.mxu0 0.0
        %2086 = vmatprep.subr.mxu0 0.0
        %2087 = vmatpush2.msra.mxu0 0.0
        %2088 = vmatprep.subr.mxu0 0.0
        %2089 = vmatpush2.msra.mxu0 0.0
        %2090 = vmatprep.subr.mxu0 0.0
        %2091 = vmatpush2.msra.mxu0 0.0
        %2092 = vmatprep.subr.mxu0 0.0
        %2093 = vmatpush2.msra.mxu0 0.0
        %2094 = vmatprep.subr.mxu0 0.0
        %2095 = vmatpush2.msra.mxu0 0.0
        %2096 = vmatprep.subr.mxu0 0.0
        %2097 = vmatpush2.msra.mxu0 0.0
        %2098 = vmatprep.subr.mxu0 0.0
        %2099 = vmatpush2.msra.mxu0 0.0
        %2100 = vmatprep.subr.mxu0 0.0
        %2101 = vmatpush2.msra.mxu0 0.0
        %2102 = vmatprep.subr.mxu0 0.0
        %2103 = vmatpush2.msra.mxu0 0.0
        %2104 = vmatprep.subr.mxu0 0.0
        %2105 = vmatpush2.msra.mxu0 0.0
        %2106 = vmatprep.mubr.f32.mxu0 0.0
        %v2107 = vand.u32 %v244, 4294901760
        %v2108 = vsub.f32 %v244, %v2107
        %v2109 = vand.u32 %v2108, 4294901760
        %v2110 = vsub.f32 %v2108, %v2109
        %v2111 = vand.u32 %v2110, 4294901760
        %2112 = vmatmul.mubr.f32.gmra.mxu0 %v2111
        %v2113 = vpop.f32.mrf.mxu0
        %v2114 = vadd.f32 0.0, %v2113
        %v2115 = vpop.f32.mrf.mxu0
        %2116 = vmatprep.mubr.f32.mxu0 0.0
        %v2117 = vand.u32 %v247, 4294901760
        %v2118 = vsub.f32 %v247, %v2117
        %v2119 = vand.u32 %v2118, 4294901760
        %v2120 = vsub.f32 %v2118, %v2119
        %v2121 = vand.u32 %v2120, 4294901760
        %2122 = vmatmul.mubr.f32.gmra.mxu0 %v2121
        %v2123 = vpop.f32.mrf.mxu0
        %v2124 = vadd.f32 0.0, %v2123
        %v2125 = vpop.f32.mrf.mxu0
        %2126 = vdwg.mxu0
        %2127 = vmatprep.subr.mxu0 0.0
        %2128 = vmatpush1.msra.mxu0 0.0
        %2129 = vmatprep.subr.mxu0 0.0
        %2130 = vmatpush1.msra.mxu0 0.0
        %2131 = vmatprep.subr.mxu0 0.0
        %2132 = vmatpush1.msra.mxu0 0.0
        %2133 = vmatprep.subr.mxu0 0.0
        %2134 = vmatpush1.msra.mxu0 0.0
        %2135 = vmatprep.subr.mxu0 0.0
        %2136 = vmatpush1.msra.mxu0 0.0
        %2137 = vmatprep.subr.mxu0 0.0
        %2138 = vmatpush1.msra.mxu0 0.0
        %2139 = vmatprep.subr.mxu0 0.0
        %2140 = vmatpush1.msra.mxu0 0.0
        %2141 = vmatprep.subr.mxu0 0.0
        %2142 = vmatpush1.msra.mxu0 0.0
        %2143 = vmatprep.subr.mxu0 0.0
        %v2144 = vand.u32 %v2033, 4294901760
        %v2145 = vsub.f32 %v2033, %v2144
        %v2146 = vand.u32 %v2145, 4294901760
        %v2147 = vsub.f32 %v2145, %v2146
        %v2148 = vand.u32 %v2147, 4294901760
        %2149 = vmatpush1.msra.mxu0 %v2148
        %2150 = vmatprep.subr.mxu0 0.0
        %v2151 = vand.u32 %v2032, 4294901760
        %v2152 = vsub.f32 %v2032, %v2151
        %v2153 = vand.u32 %v2152, 4294901760
        %v2154 = vsub.f32 %v2152, %v2153
        %v2155 = vand.u32 %v2154, 4294901760
        %2156 = vmatpush1.msra.mxu0 %v2155
        %2157 = vmatprep.subr.mxu0 0.0
        %v2158 = vand.u32 %v2031, 4294901760
        %v2159 = vsub.f32 %v2031, %v2158
        %v2160 = vand.u32 %v2159, 4294901760
        %v2161 = vsub.f32 %v2159, %v2160
        %v2162 = vand.u32 %v2161, 4294901760
        %2163 = vmatpush1.msra.mxu0 %v2162
        %2164 = vmatprep.subr.mxu0 0.0
        %v2165 = vand.u32 %v2030, 4294901760
        %v2166 = vsub.f32 %v2030, %v2165
        %v2167 = vand.u32 %v2166, 4294901760
        %v2168 = vsub.f32 %v2166, %v2167
        %v2169 = vand.u32 %v2168, 4294901760
        %2170 = vmatpush1.msra.mxu0 %v2169
        %2171 = vmatprep.subr.mxu0 0.0
        %v2172 = vand.u32 %v2029, 4294901760
        %v2173 = vsub.f32 %v2029, %v2172
        %v2174 = vand.u32 %v2173, 4294901760
        %v2175 = vsub.f32 %v2173, %v2174
        %v2176 = vand.u32 %v2175, 4294901760
        %2177 = vmatpush1.msra.mxu0 %v2176
        %2178 = vmatprep.subr.mxu0 0.0
        %v2179 = vand.u32 %v2028, 4294901760
        %v2180 = vsub.f32 %v2028, %v2179
        %v2181 = vand.u32 %v2180, 4294901760
        %v2182 = vsub.f32 %v2180, %v2181
        %v2183 = vand.u32 %v2182, 4294901760
        %2184 = vmatpush1.msra.mxu0 %v2183
        %2185 = vmatprep.subr.mxu0 0.0
        %v2186 = vand.u32 %v2027, 4294901760
        %v2187 = vsub.f32 %v2027, %v2186
        %v2188 = vand.u32 %v2187, 4294901760
        %v2189 = vsub.f32 %v2187, %v2188
        %v2190 = vand.u32 %v2189, 4294901760
        %2191 = vmatpush1.msra.mxu0 %v2190
        %2192 = vmatprep.subr.mxu0 0.0
        %v2193 = vand.u32 %v2026, 4294901760
        %v2194 = vsub.f32 %v2026, %v2193
        %v2195 = vand.u32 %v2194, 4294901760
        %v2196 = vsub.f32 %v2194, %v2195
        %v2197 = vand.u32 %v2196, 4294901760
        %2198 = vmatpush1.msra.mxu0 %v2197
        %2199 = vmatprep.subr.mxu0 0.0
        %2200 = vmatpush2.msra.mxu0 0.0
        %2201 = vmatprep.subr.mxu0 0.0
        %2202 = vmatpush2.msra.mxu0 0.0
        %2203 = vmatprep.subr.mxu0 0.0
        %2204 = vmatpush2.msra.mxu0 0.0
        %2205 = vmatprep.subr.mxu0 0.0
        %2206 = vmatpush2.msra.mxu0 0.0
        %2207 = vmatprep.subr.mxu0 0.0
        %2208 = vmatpush2.msra.mxu0 0.0
        %2209 = vmatprep.subr.mxu0 0.0
        %2210 = vmatpush2.msra.mxu0 0.0
        %2211 = vmatprep.subr.mxu0 0.0
        %2212 = vmatpush2.msra.mxu0 0.0
        %2213 = vmatprep.subr.mxu0 0.0
        %2214 = vmatpush2.msra.mxu0 0.0
        %2215 = vmatprep.subr.mxu0 0.0
        %2216 = vmatpush2.msra.mxu0 0.0
        %2217 = vmatprep.subr.mxu0 0.0
        %2218 = vmatpush2.msra.mxu0 0.0
        %2219 = vmatprep.subr.mxu0 0.0
        %2220 = vmatpush2.msra.mxu0 0.0
        %2221 = vmatprep.subr.mxu0 0.0
        %2222 = vmatpush2.msra.mxu0 0.0
        %2223 = vmatprep.subr.mxu0 0.0
        %2224 = vmatpush2.msra.mxu0 0.0
        %2225 = vmatprep.subr.mxu0 0.0
        %2226 = vmatpush2.msra.mxu0 0.0
        %2227 = vmatprep.subr.mxu0 0.0
        %2228 = vmatpush2.msra.mxu0 0.0
        %2229 = vmatprep.subr.mxu0 0.0
        %2230 = vmatpush2.msra.mxu0 0.0
        %2231 = vmatprep.mubr.f32.mxu0 0.0
        %v2232 = vand.u32 %v244, 4294901760
        %2233 = vmatmul.mubr.f32.gmra.mxu0 %v2232
        %v2234 = vpop.f32.mrf.mxu0
        %v2235 = vadd.f32 %v2114, %v2234
        %v2236 = vpop.f32.mrf.mxu0
        %2237 = vmatprep.mubr.f32.mxu0 0.0
        %v2238 = vand.u32 %v247, 4294901760
        %2239 = vmatmul.mubr.f32.gmra.mxu0 %v2238
        %v2240 = vpop.f32.mrf.mxu0
        %v2241 = vadd.f32 %v2124, %v2240
        %v2242 = vpop.f32.mrf.mxu0
        %2243 = vdwg.mxu0
        %2244 = vmatprep.subr.mxu0 0.0
        %2245 = vmatpush1.msra.mxu0 0.0
        %2246 = vmatprep.subr.mxu0 0.0
        %2247 = vmatpush1.msra.mxu0 0.0
        %2248 = vmatprep.subr.mxu0 0.0
        %2249 = vmatpush1.msra.mxu0 0.0
        %2250 = vmatprep.subr.mxu0 0.0
        %2251 = vmatpush1.msra.mxu0 0.0
        %2252 = vmatprep.subr.mxu0 0.0
        %2253 = vmatpush1.msra.mxu0 0.0
        %2254 = vmatprep.subr.mxu0 0.0
        %2255 = vmatpush1.msra.mxu0 0.0
        %2256 = vmatprep.subr.mxu0 0.0
        %2257 = vmatpush1.msra.mxu0 0.0
        %2258 = vmatprep.subr.mxu0 0.0
        %2259 = vmatpush1.msra.mxu0 0.0
        %2260 = vmatprep.subr.mxu0 0.0
        %v2261 = vand.u32 %v2033, 4294901760
        %v2262 = vsub.f32 %v2033, %v2261
        %2263 = vmatpush1.msra.mxu0 %v2262
        %2264 = vmatprep.subr.mxu0 0.0
        %v2265 = vand.u32 %v2032, 4294901760
        %v2266 = vsub.f32 %v2032, %v2265
        %2267 = vmatpush1.msra.mxu0 %v2266
        %2268 = vmatprep.subr.mxu0 0.0
        %v2269 = vand.u32 %v2031, 4294901760
        %v2270 = vsub.f32 %v2031, %v2269
        %2271 = vmatpush1.msra.mxu0 %v2270
        %2272 = vmatprep.subr.mxu0 0.0
        %v2273 = vand.u32 %v2030, 4294901760
        %v2274 = vsub.f32 %v2030, %v2273
        %2275 = vmatpush1.msra.mxu0 %v2274
        %2276 = vmatprep.subr.mxu0 0.0
        %v2277 = vand.u32 %v2029, 4294901760
        %v2278 = vsub.f32 %v2029, %v2277
        %2279 = vmatpush1.msra.mxu0 %v2278
        %2280 = vmatprep.subr.mxu0 0.0
        %v2281 = vand.u32 %v2028, 4294901760
        %v2282 = vsub.f32 %v2028, %v2281
        %2283 = vmatpush1.msra.mxu0 %v2282
        %2284 = vmatprep.subr.mxu0 0.0
        %v2285 = vand.u32 %v2027, 4294901760
        %v2286 = vsub.f32 %v2027, %v2285
        %2287 = vmatpush1.msra.mxu0 %v2286
        %2288 = vmatprep.subr.mxu0 0.0
        %v2289 = vand.u32 %v2026, 4294901760
        %v2290 = vsub.f32 %v2026, %v2289
        %2291 = vmatpush1.msra.mxu0 %v2290
        %2292 = vmatprep.subr.mxu0 0.0
        %2293 = vmatpush2.msra.mxu0 0.0
        %2294 = vmatprep.subr.mxu0 0.0
        %2295 = vmatpush2.msra.mxu0 0.0
        %2296 = vmatprep.subr.mxu0 0.0
        %2297 = vmatpush2.msra.mxu0 0.0
        %2298 = vmatprep.subr.mxu0 0.0
        %2299 = vmatpush2.msra.mxu0 0.0
        %2300 = vmatprep.subr.mxu0 0.0
        %2301 = vmatpush2.msra.mxu0 0.0
        %2302 = vmatprep.subr.mxu0 0.0
        %2303 = vmatpush2.msra.mxu0 0.0
        %2304 = vmatprep.subr.mxu0 0.0
        %2305 = vmatpush2.msra.mxu0 0.0
        %2306 = vmatprep.subr.mxu0 0.0
        %2307 = vmatpush2.msra.mxu0 0.0
        %2308 = vmatprep.subr.mxu0 0.0
        %2309 = vmatpush2.msra.mxu0 0.0
        %2310 = vmatprep.subr.mxu0 0.0
        %2311 = vmatpush2.msra.mxu0 0.0
        %2312 = vmatprep.subr.mxu0 0.0
        %2313 = vmatpush2.msra.mxu0 0.0
        %2314 = vmatprep.subr.mxu0 0.0
        %2315 = vmatpush2.msra.mxu0 0.0
        %2316 = vmatprep.subr.mxu0 0.0
        %2317 = vmatpush2.msra.mxu0 0.0
        %2318 = vmatprep.subr.mxu0 0.0
        %2319 = vmatpush2.msra.mxu0 0.0
        %2320 = vmatprep.subr.mxu0 0.0
        %2321 = vmatpush2.msra.mxu0 0.0
        %2322 = vmatprep.subr.mxu0 0.0
        %2323 = vmatpush2.msra.mxu0 0.0
        %2324 = vmatprep.mubr.f32.mxu0 0.0
        %v2325 = vand.u32 %v244, 4294901760
        %v2326 = vsub.f32 %v244, %v2325
        %2327 = vmatmul.mubr.f32.gmra.mxu0 %v2326
        %v2328 = vpop.f32.mrf.mxu0
        %v2329 = vadd.f32 %v2235, %v2328
        %v2330 = vpop.f32.mrf.mxu0
        %2331 = vmatprep.mubr.f32.mxu0 0.0
        %v2332 = vand.u32 %v247, 4294901760
        %v2333 = vsub.f32 %v247, %v2332
        %2334 = vmatmul.mubr.f32.gmra.mxu0 %v2333
        %v2335 = vpop.f32.mrf.mxu0
        %v2336 = vadd.f32 %v2241, %v2335
        %v2337 = vpop.f32.mrf.mxu0
        %2338 = vdwg.mxu0
        %2339 = vmatprep.subr.mxu0 0.0
        %2340 = vmatpush1.msra.mxu0 0.0
        %2341 = vmatprep.subr.mxu0 0.0
        %2342 = vmatpush1.msra.mxu0 0.0
        %2343 = vmatprep.subr.mxu0 0.0
        %2344 = vmatpush1.msra.mxu0 0.0
        %2345 = vmatprep.subr.mxu0 0.0
        %2346 = vmatpush1.msra.mxu0 0.0
        %2347 = vmatprep.subr.mxu0 0.0
        %2348 = vmatpush1.msra.mxu0 0.0
        %2349 = vmatprep.subr.mxu0 0.0
        %2350 = vmatpush1.msra.mxu0 0.0
        %2351 = vmatprep.subr.mxu0 0.0
        %2352 = vmatpush1.msra.mxu0 0.0
        %2353 = vmatprep.subr.mxu0 0.0
        %2354 = vmatpush1.msra.mxu0 0.0
        %2355 = vmatprep.subr.mxu0 0.0
        %v2356 = vand.u32 %v2033, 4294901760
        %2357 = vmatpush1.msra.mxu0 %v2356
        %2358 = vmatprep.subr.mxu0 0.0
        %v2359 = vand.u32 %v2032, 4294901760
        %2360 = vmatpush1.msra.mxu0 %v2359
        %2361 = vmatprep.subr.mxu0 0.0
        %v2362 = vand.u32 %v2031, 4294901760
        %2363 = vmatpush1.msra.mxu0 %v2362
        %2364 = vmatprep.subr.mxu0 0.0
        %v2365 = vand.u32 %v2030, 4294901760
        %2366 = vmatpush1.msra.mxu0 %v2365
        %2367 = vmatprep.subr.mxu0 0.0
        %v2368 = vand.u32 %v2029, 4294901760
        %2369 = vmatpush1.msra.mxu0 %v2368
        %2370 = vmatprep.subr.mxu0 0.0
        %v2371 = vand.u32 %v2028, 4294901760
        %2372 = vmatpush1.msra.mxu0 %v2371
        %2373 = vmatprep.subr.mxu0 0.0
        %v2374 = vand.u32 %v2027, 4294901760
        %2375 = vmatpush1.msra.mxu0 %v2374
        %2376 = vmatprep.subr.mxu0 0.0
        %v2377 = vand.u32 %v2026, 4294901760
        %2378 = vmatpush1.msra.mxu0 %v2377
        %2379 = vmatprep.subr.mxu0 0.0
        %2380 = vmatpush2.msra.mxu0 0.0
        %2381 = vmatprep.subr.mxu0 0.0
        %2382 = vmatpush2.msra.mxu0 0.0
        %2383 = vmatprep.subr.mxu0 0.0
        %2384 = vmatpush2.msra.mxu0 0.0
        %2385 = vmatprep.subr.mxu0 0.0
        %2386 = vmatpush2.msra.mxu0 0.0
        %2387 = vmatprep.subr.mxu0 0.0
        %2388 = vmatpush2.msra.mxu0 0.0
        %2389 = vmatprep.subr.mxu0 0.0
        %2390 = vmatpush2.msra.mxu0 0.0
        %2391 = vmatprep.subr.mxu0 0.0
        %2392 = vmatpush2.msra.mxu0 0.0
        %2393 = vmatprep.subr.mxu0 0.0
        %2394 = vmatpush2.msra.mxu0 0.0
        %2395 = vmatprep.subr.mxu0 0.0
        %2396 = vmatpush2.msra.mxu0 0.0
        %2397 = vmatprep.subr.mxu0 0.0
        %2398 = vmatpush2.msra.mxu0 0.0
        %2399 = vmatprep.subr.mxu0 0.0
        %2400 = vmatpush2.msra.mxu0 0.0
        %2401 = vmatprep.subr.mxu0 0.0
        %2402 = vmatpush2.msra.mxu0 0.0
        %2403 = vmatprep.subr.mxu0 0.0
        %2404 = vmatpush2.msra.mxu0 0.0
        %2405 = vmatprep.subr.mxu0 0.0
        %2406 = vmatpush2.msra.mxu0 0.0
        %2407 = vmatprep.subr.mxu0 0.0
        %2408 = vmatpush2.msra.mxu0 0.0
        %2409 = vmatprep.subr.mxu0 0.0
        %2410 = vmatpush2.msra.mxu0 0.0
        %2411 = vmatprep.mubr.f32.mxu0 0.0
        %v2412 = vand.u32 %v244, 4294901760
        %v2413 = vsub.f32 %v244, %v2412
        %v2414 = vand.u32 %v2413, 4294901760
        %2415 = vmatmul.mubr.f32.gmra.mxu0 %v2414
        %v2416 = vpop.f32.mrf.mxu0
        %v2417 = vadd.f32 %v2329, %v2416
        %v2418 = vpop.f32.mrf.mxu0
        %2419 = vmatprep.mubr.f32.mxu0 0.0
        %v2420 = vand.u32 %v247, 4294901760
        %v2421 = vsub.f32 %v247, %v2420
        %v2422 = vand.u32 %v2421, 4294901760
        %2423 = vmatmul.mubr.f32.gmra.mxu0 %v2422
        %v2424 = vpop.f32.mrf.mxu0
        %v2425 = vadd.f32 %v2336, %v2424
        %v2426 = vpop.f32.mrf.mxu0
        %2427 = vdwg.mxu0
        %2428 = vmatprep.subr.mxu0 0.0
        %2429 = vmatpush1.msra.mxu0 0.0
        %2430 = vmatprep.subr.mxu0 0.0
        %2431 = vmatpush1.msra.mxu0 0.0
        %2432 = vmatprep.subr.mxu0 0.0
        %2433 = vmatpush1.msra.mxu0 0.0
        %2434 = vmatprep.subr.mxu0 0.0
        %2435 = vmatpush1.msra.mxu0 0.0
        %2436 = vmatprep.subr.mxu0 0.0
        %2437 = vmatpush1.msra.mxu0 0.0
        %2438 = vmatprep.subr.mxu0 0.0
        %2439 = vmatpush1.msra.mxu0 0.0
        %2440 = vmatprep.subr.mxu0 0.0
        %2441 = vmatpush1.msra.mxu0 0.0
        %2442 = vmatprep.subr.mxu0 0.0
        %2443 = vmatpush1.msra.mxu0 0.0
        %2444 = vmatprep.subr.mxu0 0.0
        %v2445 = vand.u32 %v2033, 4294901760
        %v2446 = vsub.f32 %v2033, %v2445
        %v2447 = vand.u32 %v2446, 4294901760
        %2448 = vmatpush1.msra.mxu0 %v2447
        %2449 = vmatprep.subr.mxu0 0.0
        %v2450 = vand.u32 %v2032, 4294901760
        %v2451 = vsub.f32 %v2032, %v2450
        %v2452 = vand.u32 %v2451, 4294901760
        %2453 = vmatpush1.msra.mxu0 %v2452
        %2454 = vmatprep.subr.mxu0 0.0
        %v2455 = vand.u32 %v2031, 4294901760
        %v2456 = vsub.f32 %v2031, %v2455
        %v2457 = vand.u32 %v2456, 4294901760
        %2458 = vmatpush1.msra.mxu0 %v2457
        %2459 = vmatprep.subr.mxu0 0.0
        %v2460 = vand.u32 %v2030, 4294901760
        %v2461 = vsub.f32 %v2030, %v2460
        %v2462 = vand.u32 %v2461, 4294901760
        %2463 = vmatpush1.msra.mxu0 %v2462
        %2464 = vmatprep.subr.mxu0 0.0
        %v2465 = vand.u32 %v2029, 4294901760
        %v2466 = vsub.f32 %v2029, %v2465
        %v2467 = vand.u32 %v2466, 4294901760
        %2468 = vmatpush1.msra.mxu0 %v2467
        %2469 = vmatprep.subr.mxu0 0.0
        %v2470 = vand.u32 %v2028, 4294901760
        %v2471 = vsub.f32 %v2028, %v2470
        %v2472 = vand.u32 %v2471, 4294901760
        %2473 = vmatpush1.msra.mxu0 %v2472
        %2474 = vmatprep.subr.mxu0 0.0
        %v2475 = vand.u32 %v2027, 4294901760
        %v2476 = vsub.f32 %v2027, %v2475
        %v2477 = vand.u32 %v2476, 4294901760
        %2478 = vmatpush1.msra.mxu0 %v2477
        %2479 = vmatprep.subr.mxu0 0.0
        %v2480 = vand.u32 %v2026, 4294901760
        %v2481 = vsub.f32 %v2026, %v2480
        %v2482 = vand.u32 %v2481, 4294901760
        %2483 = vmatpush1.msra.mxu0 %v2482
        %2484 = vmatprep.subr.mxu0 0.0
        %2485 = vmatpush2.msra.mxu0 0.0
        %2486 = vmatprep.subr.mxu0 0.0
        %2487 = vmatpush2.msra.mxu0 0.0
        %2488 = vmatprep.subr.mxu0 0.0
        %2489 = vmatpush2.msra.mxu0 0.0
        %2490 = vmatprep.subr.mxu0 0.0
        %2491 = vmatpush2.msra.mxu0 0.0
        %2492 = vmatprep.subr.mxu0 0.0
        %2493 = vmatpush2.msra.mxu0 0.0
        %2494 = vmatprep.subr.mxu0 0.0
        %2495 = vmatpush2.msra.mxu0 0.0
        %2496 = vmatprep.subr.mxu0 0.0
        %2497 = vmatpush2.msra.mxu0 0.0
        %2498 = vmatprep.subr.mxu0 0.0
        %2499 = vmatpush2.msra.mxu0 0.0
        %2500 = vmatprep.subr.mxu0 0.0
        %2501 = vmatpush2.msra.mxu0 0.0
        %2502 = vmatprep.subr.mxu0 0.0
        %2503 = vmatpush2.msra.mxu0 0.0
        %2504 = vmatprep.subr.mxu0 0.0
        %2505 = vmatpush2.msra.mxu0 0.0
        %2506 = vmatprep.subr.mxu0 0.0
        %2507 = vmatpush2.msra.mxu0 0.0
        %2508 = vmatprep.subr.mxu0 0.0
        %2509 = vmatpush2.msra.mxu0 0.0
        %2510 = vmatprep.subr.mxu0 0.0
        %2511 = vmatpush2.msra.mxu0 0.0
        %2512 = vmatprep.subr.mxu0 0.0
        %2513 = vmatpush2.msra.mxu0 0.0
        %2514 = vmatprep.subr.mxu0 0.0
        %2515 = vmatpush2.msra.mxu0 0.0
        %2516 = vmatprep.mubr.f32.mxu0 0.0
        %v2517 = vand.u32 %v244, 4294901760
        %2518 = vmatmul.mubr.f32.gmra.mxu0 %v2517
        %v2519 = vpop.f32.mrf.mxu0
        %v2520 = vadd.f32 %v2417, %v2519
        %v2521 = vpop.f32.mrf.mxu0
        %2522 = vmatprep.mubr.f32.mxu0 0.0
        %v2523 = vand.u32 %v247, 4294901760
        %2524 = vmatmul.mubr.f32.gmra.mxu0 %v2523
        %v2525 = vpop.f32.mrf.mxu0
        %v2526 = vadd.f32 %v2425, %v2525
        %v2527 = vpop.f32.mrf.mxu0
        %2528 = vdwg.mxu0
        %2529 = vmatprep.subr.mxu0 0.0
        %2530 = vmatpush1.msra.mxu0 0.0
        %2531 = vmatprep.subr.mxu0 0.0
        %2532 = vmatpush1.msra.mxu0 0.0
        %2533 = vmatprep.subr.mxu0 0.0
        %2534 = vmatpush1.msra.mxu0 0.0
        %2535 = vmatprep.subr.mxu0 0.0
        %2536 = vmatpush1.msra.mxu0 0.0
        %2537 = vmatprep.subr.mxu0 0.0
        %2538 = vmatpush1.msra.mxu0 0.0
        %2539 = vmatprep.subr.mxu0 0.0
        %2540 = vmatpush1.msra.mxu0 0.0
        %2541 = vmatprep.subr.mxu0 0.0
        %2542 = vmatpush1.msra.mxu0 0.0
        %2543 = vmatprep.subr.mxu0 0.0
        %2544 = vmatpush1.msra.mxu0 0.0
        %2545 = vmatprep.subr.mxu0 0.0
        %v2546 = vand.u32 %v2033, 4294901760
        %2547 = vmatpush1.msra.mxu0 %v2546
        %2548 = vmatprep.subr.mxu0 0.0
        %v2549 = vand.u32 %v2032, 4294901760
        %2550 = vmatpush1.msra.mxu0 %v2549
        %2551 = vmatprep.subr.mxu0 0.0
        %v2552 = vand.u32 %v2031, 4294901760
        %2553 = vmatpush1.msra.mxu0 %v2552
        %2554 = vmatprep.subr.mxu0 0.0
        %v2555 = vand.u32 %v2030, 4294901760
        %2556 = vmatpush1.msra.mxu0 %v2555
        %2557 = vmatprep.subr.mxu0 0.0
        %v2558 = vand.u32 %v2029, 4294901760
        %2559 = vmatpush1.msra.mxu0 %v2558
        %2560 = vmatprep.subr.mxu0 0.0
        %v2561 = vand.u32 %v2028, 4294901760
        %2562 = vmatpush1.msra.mxu0 %v2561
        %2563 = vmatprep.subr.mxu0 0.0
        %v2564 = vand.u32 %v2027, 4294901760
        %2565 = vmatpush1.msra.mxu0 %v2564
        %2566 = vmatprep.subr.mxu0 0.0
        %v2567 = vand.u32 %v2026, 4294901760
        %2568 = vmatpush1.msra.mxu0 %v2567
        %2569 = vmatprep.subr.mxu0 0.0
        %2570 = vmatpush2.msra.mxu0 0.0
        %2571 = vmatprep.subr.mxu0 0.0
        %2572 = vmatpush2.msra.mxu0 0.0
        %2573 = vmatprep.subr.mxu0 0.0
        %2574 = vmatpush2.msra.mxu0 0.0
        %2575 = vmatprep.subr.mxu0 0.0
        %2576 = vmatpush2.msra.mxu0 0.0
        %2577 = vmatprep.subr.mxu0 0.0
        %2578 = vmatpush2.msra.mxu0 0.0
        %2579 = vmatprep.subr.mxu0 0.0
        %2580 = vmatpush2.msra.mxu0 0.0
        %2581 = vmatprep.subr.mxu0 0.0
        %2582 = vmatpush2.msra.mxu0 0.0
        %2583 = vmatprep.subr.mxu0 0.0
        %2584 = vmatpush2.msra.mxu0 0.0
        %2585 = vmatprep.subr.mxu0 0.0
        %2586 = vmatpush2.msra.mxu0 0.0
        %2587 = vmatprep.subr.mxu0 0.0
        %2588 = vmatpush2.msra.mxu0 0.0
        %2589 = vmatprep.subr.mxu0 0.0
        %2590 = vmatpush2.msra.mxu0 0.0
        %2591 = vmatprep.subr.mxu0 0.0
        %2592 = vmatpush2.msra.mxu0 0.0
        %2593 = vmatprep.subr.mxu0 0.0
        %2594 = vmatpush2.msra.mxu0 0.0
        %2595 = vmatprep.subr.mxu0 0.0
        %2596 = vmatpush2.msra.mxu0 0.0
        %2597 = vmatprep.subr.mxu0 0.0
        %2598 = vmatpush2.msra.mxu0 0.0
        %2599 = vmatprep.subr.mxu0 0.0
        %2600 = vmatpush2.msra.mxu0 0.0
        %2601 = vmatprep.mubr.f32.mxu0 0.0
        %v2602 = vand.u32 %v244, 4294901760
        %2603 = vmatmul.mubr.f32.gmra.mxu0 %v2602
        %v2604 = vpop.f32.mrf.mxu0
        %v2605 = vadd.f32 %v2520, %v2604
        %v2606 = vpop.f32.mrf.mxu0
        %2607 = vmatprep.mubr.f32.mxu0 0.0
        %v2608 = vand.u32 %v247, 4294901760
        %2609 = vmatmul.mubr.f32.gmra.mxu0 %v2608
        %v2610 = vpop.f32.mrf.mxu0
        %v2611 = vadd.f32 %v2526, %v2610
        %v2612 = vpop.f32.mrf.mxu0
        %2613 = vdwg.mxu0
        %2614 = vmatprep.subr.mxu0 0.0
        %2615 = vmatpush1.msra.mxu0 0.0
        %2616 = vmatprep.subr.mxu0 0.0
        %2617 = vmatpush1.msra.mxu0 0.0
        %2618 = vmatprep.subr.mxu0 0.0
        %2619 = vmatpush1.msra.mxu0 0.0
        %2620 = vmatprep.subr.mxu0 0.0
        %2621 = vmatpush1.msra.mxu0 0.0
        %2622 = vmatprep.subr.mxu0 0.0
        %2623 = vmatpush1.msra.mxu0 0.0
        %2624 = vmatprep.subr.mxu0 0.0
        %2625 = vmatpush1.msra.mxu0 0.0
        %2626 = vmatprep.subr.mxu0 0.0
        %2627 = vmatpush1.msra.mxu0 0.0
        %2628 = vmatprep.subr.mxu0 0.0
        %2629 = vmatpush1.msra.mxu0 0.0
        %2630 = vmatprep.subr.mxu0 0.0
        %v2631 = vand.u32 %v2024, 4294901760
        %2632 = vmatpush1.msra.mxu0 %v2631
        %2633 = vmatprep.subr.mxu0 0.0
        %v2634 = vand.u32 %v2023, 4294901760
        %2635 = vmatpush1.msra.mxu0 %v2634
        %2636 = vmatprep.subr.mxu0 0.0
        %v2637 = vand.u32 %v2022, 4294901760
        %2638 = vmatpush1.msra.mxu0 %v2637
        %2639 = vmatprep.subr.mxu0 0.0
        %v2640 = vand.u32 %v2021, 4294901760
        %2641 = vmatpush1.msra.mxu0 %v2640
        %2642 = vmatprep.subr.mxu0 0.0
        %v2643 = vand.u32 %v2020, 4294901760
        %2644 = vmatpush1.msra.mxu0 %v2643
        %2645 = vmatprep.subr.mxu0 0.0
        %v2646 = vand.u32 %v2019, 4294901760
        %2647 = vmatpush1.msra.mxu0 %v2646
        %2648 = vmatprep.subr.mxu0 0.0
        %v2649 = vand.u32 %v2018, 4294901760
        %2650 = vmatpush1.msra.mxu0 %v2649
        %2651 = vmatprep.subr.mxu0 0.0
        %v2652 = vand.u32 %v2017, 4294901760
        %2653 = vmatpush1.msra.mxu0 %v2652
        %2654 = vmatprep.subr.mxu0 0.0
        %2655 = vmatpush2.msra.mxu0 0.0
        %2656 = vmatprep.subr.mxu0 0.0
        %2657 = vmatpush2.msra.mxu0 0.0
        %2658 = vmatprep.subr.mxu0 0.0
        %2659 = vmatpush2.msra.mxu0 0.0
        %2660 = vmatprep.subr.mxu0 0.0
        %2661 = vmatpush2.msra.mxu0 0.0
        %2662 = vmatprep.subr.mxu0 0.0
        %2663 = vmatpush2.msra.mxu0 0.0
        %2664 = vmatprep.subr.mxu0 0.0
        %2665 = vmatpush2.msra.mxu0 0.0
        %2666 = vmatprep.subr.mxu0 0.0
        %2667 = vmatpush2.msra.mxu0 0.0
        %2668 = vmatprep.subr.mxu0 0.0
        %2669 = vmatpush2.msra.mxu0 0.0
        %2670 = vmatprep.subr.mxu0 0.0
        %2671 = vmatpush2.msra.mxu0 0.0
        %2672 = vmatprep.subr.mxu0 0.0
        %2673 = vmatpush2.msra.mxu0 0.0
        %2674 = vmatprep.subr.mxu0 0.0
        %2675 = vmatpush2.msra.mxu0 0.0
        %2676 = vmatprep.subr.mxu0 0.0
        %2677 = vmatpush2.msra.mxu0 0.0
        %2678 = vmatprep.subr.mxu0 0.0
        %2679 = vmatpush2.msra.mxu0 0.0
        %2680 = vmatprep.subr.mxu0 0.0
        %2681 = vmatpush2.msra.mxu0 0.0
        %2682 = vmatprep.subr.mxu0 0.0
        %2683 = vmatpush2.msra.mxu0 0.0
        %2684 = vmatprep.subr.mxu0 0.0
        %2685 = vmatpush2.msra.mxu0 0.0
        %2686 = vmatprep.mubr.f32.mxu0 0.0
        %v2687 = vand.u32 %v830, 4294901760
        %v2688 = vsub.f32 %v830, %v2687
        %v2689 = vand.u32 %v2688, 4294901760
        %v2690 = vsub.f32 %v2688, %v2689
        %v2691 = vand.u32 %v2690, 4294901760
        %2692 = vmatmul.mubr.f32.gmra.mxu0 %v2691
        %v2693 = vpop.f32.mrf.mxu0
        %v2694 = vadd.f32 %v2605, %v2693
        %v2695 = vpop.f32.mrf.mxu0
        %2696 = vmatprep.mubr.f32.mxu0 0.0
        %v2697 = vand.u32 %v833, 4294901760
        %v2698 = vsub.f32 %v833, %v2697
        %v2699 = vand.u32 %v2698, 4294901760
        %v2700 = vsub.f32 %v2698, %v2699
        %v2701 = vand.u32 %v2700, 4294901760
        %2702 = vmatmul.mubr.f32.gmra.mxu0 %v2701
        %v2703 = vpop.f32.mrf.mxu0
        %v2704 = vadd.f32 %v2611, %v2703
        %v2705 = vpop.f32.mrf.mxu0
        %2706 = vdwg.mxu0
        %2707 = vmatprep.subr.mxu0 0.0
        %2708 = vmatpush1.msra.mxu0 0.0
        %2709 = vmatprep.subr.mxu0 0.0
        %2710 = vmatpush1.msra.mxu0 0.0
        %2711 = vmatprep.subr.mxu0 0.0
        %2712 = vmatpush1.msra.mxu0 0.0
        %2713 = vmatprep.subr.mxu0 0.0
        %2714 = vmatpush1.msra.mxu0 0.0
        %2715 = vmatprep.subr.mxu0 0.0
        %2716 = vmatpush1.msra.mxu0 0.0
        %2717 = vmatprep.subr.mxu0 0.0
        %2718 = vmatpush1.msra.mxu0 0.0
        %2719 = vmatprep.subr.mxu0 0.0
        %2720 = vmatpush1.msra.mxu0 0.0
        %2721 = vmatprep.subr.mxu0 0.0
        %2722 = vmatpush1.msra.mxu0 0.0
        %2723 = vmatprep.subr.mxu0 0.0
        %v2724 = vand.u32 %v2024, 4294901760
        %v2725 = vsub.f32 %v2024, %v2724
        %v2726 = vand.u32 %v2725, 4294901760
        %v2727 = vsub.f32 %v2725, %v2726
        %v2728 = vand.u32 %v2727, 4294901760
        %2729 = vmatpush1.msra.mxu0 %v2728
        %2730 = vmatprep.subr.mxu0 0.0
        %v2731 = vand.u32 %v2023, 4294901760
        %v2732 = vsub.f32 %v2023, %v2731
        %v2733 = vand.u32 %v2732, 4294901760
        %v2734 = vsub.f32 %v2732, %v2733
        %v2735 = vand.u32 %v2734, 4294901760
        %2736 = vmatpush1.msra.mxu0 %v2735
        %2737 = vmatprep.subr.mxu0 0.0
        %v2738 = vand.u32 %v2022, 4294901760
        %v2739 = vsub.f32 %v2022, %v2738
        %v2740 = vand.u32 %v2739, 4294901760
        %v2741 = vsub.f32 %v2739, %v2740
        %v2742 = vand.u32 %v2741, 4294901760
        %2743 = vmatpush1.msra.mxu0 %v2742
        %2744 = vmatprep.subr.mxu0 0.0
        %v2745 = vand.u32 %v2021, 4294901760
        %v2746 = vsub.f32 %v2021, %v2745
        %v2747 = vand.u32 %v2746, 4294901760
        %v2748 = vsub.f32 %v2746, %v2747
        %v2749 = vand.u32 %v2748, 4294901760
        %2750 = vmatpush1.msra.mxu0 %v2749
        %2751 = vmatprep.subr.mxu0 0.0
        %v2752 = vand.u32 %v2020, 4294901760
        %v2753 = vsub.f32 %v2020, %v2752
        %v2754 = vand.u32 %v2753, 4294901760
        %v2755 = vsub.f32 %v2753, %v2754
        %v2756 = vand.u32 %v2755, 4294901760
        %2757 = vmatpush1.msra.mxu0 %v2756
        %2758 = vmatprep.subr.mxu0 0.0
        %v2759 = vand.u32 %v2019, 4294901760
        %v2760 = vsub.f32 %v2019, %v2759
        %v2761 = vand.u32 %v2760, 4294901760
        %v2762 = vsub.f32 %v2760, %v2761
        %v2763 = vand.u32 %v2762, 4294901760
        %2764 = vmatpush1.msra.mxu0 %v2763
        %2765 = vmatprep.subr.mxu0 0.0
        %v2766 = vand.u32 %v2018, 4294901760
        %v2767 = vsub.f32 %v2018, %v2766
        %v2768 = vand.u32 %v2767, 4294901760
        %v2769 = vsub.f32 %v2767, %v2768
        %v2770 = vand.u32 %v2769, 4294901760
        %2771 = vmatpush1.msra.mxu0 %v2770
        %2772 = vmatprep.subr.mxu0 0.0
        %v2773 = vand.u32 %v2017, 4294901760
        %v2774 = vsub.f32 %v2017, %v2773
        %v2775 = vand.u32 %v2774, 4294901760
        %v2776 = vsub.f32 %v2774, %v2775
        %v2777 = vand.u32 %v2776, 4294901760
        %2778 = vmatpush1.msra.mxu0 %v2777
        %2779 = vmatprep.subr.mxu0 0.0
        %2780 = vmatpush2.msra.mxu0 0.0
        %2781 = vmatprep.subr.mxu0 0.0
        %2782 = vmatpush2.msra.mxu0 0.0
        %2783 = vmatprep.subr.mxu0 0.0
        %2784 = vmatpush2.msra.mxu0 0.0
        %2785 = vmatprep.subr.mxu0 0.0
        %2786 = vmatpush2.msra.mxu0 0.0
        %2787 = vmatprep.subr.mxu0 0.0
        %2788 = vmatpush2.msra.mxu0 0.0
        %2789 = vmatprep.subr.mxu0 0.0
        %2790 = vmatpush2.msra.mxu0 0.0
        %2791 = vmatprep.subr.mxu0 0.0
        %2792 = vmatpush2.msra.mxu0 0.0
        %2793 = vmatprep.subr.mxu0 0.0
        %2794 = vmatpush2.msra.mxu0 0.0
        %2795 = vmatprep.subr.mxu0 0.0
        %2796 = vmatpush2.msra.mxu0 0.0
        %2797 = vmatprep.subr.mxu0 0.0
        %2798 = vmatpush2.msra.mxu0 0.0
        %2799 = vmatprep.subr.mxu0 0.0
        %2800 = vmatpush2.msra.mxu0 0.0
        %2801 = vmatprep.subr.mxu0 0.0
        %2802 = vmatpush2.msra.mxu0 0.0
        %2803 = vmatprep.subr.mxu0 0.0
        %2804 = vmatpush2.msra.mxu0 0.0
        %2805 = vmatprep.subr.mxu0 0.0
        %2806 = vmatpush2.msra.mxu0 0.0
        %2807 = vmatprep.subr.mxu0 0.0
        %2808 = vmatpush2.msra.mxu0 0.0
        %2809 = vmatprep.subr.mxu0 0.0
        %2810 = vmatpush2.msra.mxu0 0.0
        %2811 = vmatprep.mubr.f32.mxu0 0.0
        %v2812 = vand.u32 %v830, 4294901760
        %2813 = vmatmul.mubr.f32.gmra.mxu0 %v2812
        %v2814 = vpop.f32.mrf.mxu0
        %v2815 = vadd.f32 %v2694, %v2814
        %v2816 = vpop.f32.mrf.mxu0
        %2817 = vmatprep.mubr.f32.mxu0 0.0
        %v2818 = vand.u32 %v833, 4294901760
        %2819 = vmatmul.mubr.f32.gmra.mxu0 %v2818
        %v2820 = vpop.f32.mrf.mxu0
        %v2821 = vadd.f32 %v2704, %v2820
        %v2822 = vpop.f32.mrf.mxu0
        %2823 = vdwg.mxu0
        %2824 = vmatprep.subr.mxu0 0.0
        %2825 = vmatpush1.msra.mxu0 0.0
        %2826 = vmatprep.subr.mxu0 0.0
        %2827 = vmatpush1.msra.mxu0 0.0
        %2828 = vmatprep.subr.mxu0 0.0
        %2829 = vmatpush1.msra.mxu0 0.0
        %2830 = vmatprep.subr.mxu0 0.0
        %2831 = vmatpush1.msra.mxu0 0.0
        %2832 = vmatprep.subr.mxu0 0.0
        %2833 = vmatpush1.msra.mxu0 0.0
        %2834 = vmatprep.subr.mxu0 0.0
        %2835 = vmatpush1.msra.mxu0 0.0
        %2836 = vmatprep.subr.mxu0 0.0
        %2837 = vmatpush1.msra.mxu0 0.0
        %2838 = vmatprep.subr.mxu0 0.0
        %2839 = vmatpush1.msra.mxu0 0.0
        %2840 = vmatprep.subr.mxu0 0.0
        %v2841 = vand.u32 %v2024, 4294901760
        %v2842 = vsub.f32 %v2024, %v2841
        %2843 = vmatpush1.msra.mxu0 %v2842
        %2844 = vmatprep.subr.mxu0 0.0
        %v2845 = vand.u32 %v2023, 4294901760
        %v2846 = vsub.f32 %v2023, %v2845
        %2847 = vmatpush1.msra.mxu0 %v2846
        %2848 = vmatprep.subr.mxu0 0.0
        %v2849 = vand.u32 %v2022, 4294901760
        %v2850 = vsub.f32 %v2022, %v2849
        %2851 = vmatpush1.msra.mxu0 %v2850
        %2852 = vmatprep.subr.mxu0 0.0
        %v2853 = vand.u32 %v2021, 4294901760
        %v2854 = vsub.f32 %v2021, %v2853
        %2855 = vmatpush1.msra.mxu0 %v2854
        %2856 = vmatprep.subr.mxu0 0.0
        %v2857 = vand.u32 %v2020, 4294901760
        %v2858 = vsub.f32 %v2020, %v2857
        %2859 = vmatpush1.msra.mxu0 %v2858
        %2860 = vmatprep.subr.mxu0 0.0
        %v2861 = vand.u32 %v2019, 4294901760
        %v2862 = vsub.f32 %v2019, %v2861
        %2863 = vmatpush1.msra.mxu0 %v2862
        %2864 = vmatprep.subr.mxu0 0.0
        %v2865 = vand.u32 %v2018, 4294901760
        %v2866 = vsub.f32 %v2018, %v2865
        %2867 = vmatpush1.msra.mxu0 %v2866
        %2868 = vmatprep.subr.mxu0 0.0
        %v2869 = vand.u32 %v2017, 4294901760
        %v2870 = vsub.f32 %v2017, %v2869
        %2871 = vmatpush1.msra.mxu0 %v2870
        %2872 = vmatprep.subr.mxu0 0.0
        %2873 = vmatpush2.msra.mxu0 0.0
        %2874 = vmatprep.subr.mxu0 0.0
        %2875 = vmatpush2.msra.mxu0 0.0
        %2876 = vmatprep.subr.mxu0 0.0
        %2877 = vmatpush2.msra.mxu0 0.0
        %2878 = vmatprep.subr.mxu0 0.0
        %2879 = vmatpush2.msra.mxu0 0.0
        %2880 = vmatprep.subr.mxu0 0.0
        %2881 = vmatpush2.msra.mxu0 0.0
        %2882 = vmatprep.subr.mxu0 0.0
        %2883 = vmatpush2.msra.mxu0 0.0
        %2884 = vmatprep.subr.mxu0 0.0
        %2885 = vmatpush2.msra.mxu0 0.0
        %2886 = vmatprep.subr.mxu0 0.0
        %2887 = vmatpush2.msra.mxu0 0.0
        %2888 = vmatprep.subr.mxu0 0.0
        %2889 = vmatpush2.msra.mxu0 0.0
        %2890 = vmatprep.subr.mxu0 0.0
        %2891 = vmatpush2.msra.mxu0 0.0
        %2892 = vmatprep.subr.mxu0 0.0
        %2893 = vmatpush2.msra.mxu0 0.0
        %2894 = vmatprep.subr.mxu0 0.0
        %2895 = vmatpush2.msra.mxu0 0.0
        %2896 = vmatprep.subr.mxu0 0.0
        %2897 = vmatpush2.msra.mxu0 0.0
        %2898 = vmatprep.subr.mxu0 0.0
        %2899 = vmatpush2.msra.mxu0 0.0
        %2900 = vmatprep.subr.mxu0 0.0
        %2901 = vmatpush2.msra.mxu0 0.0
        %2902 = vmatprep.subr.mxu0 0.0
        %2903 = vmatpush2.msra.mxu0 0.0
        %2904 = vmatprep.mubr.f32.mxu0 0.0
        %v2905 = vand.u32 %v830, 4294901760
        %v2906 = vsub.f32 %v830, %v2905
        %2907 = vmatmul.mubr.f32.gmra.mxu0 %v2906
        %v2908 = vpop.f32.mrf.mxu0
        %v2909 = vadd.f32 %v2815, %v2908
        %v2910 = vpop.f32.mrf.mxu0
        %2911 = vmatprep.mubr.f32.mxu0 0.0
        %v2912 = vand.u32 %v833, 4294901760
        %v2913 = vsub.f32 %v833, %v2912
        %2914 = vmatmul.mubr.f32.gmra.mxu0 %v2913
        %v2915 = vpop.f32.mrf.mxu0
        %v2916 = vadd.f32 %v2821, %v2915
        %v2917 = vpop.f32.mrf.mxu0
        %2918 = vdwg.mxu0
        %2919 = vmatprep.subr.mxu0 0.0
        %2920 = vmatpush1.msra.mxu0 0.0
        %2921 = vmatprep.subr.mxu0 0.0
        %2922 = vmatpush1.msra.mxu0 0.0
        %2923 = vmatprep.subr.mxu0 0.0
        %2924 = vmatpush1.msra.mxu0 0.0
        %2925 = vmatprep.subr.mxu0 0.0
        %2926 = vmatpush1.msra.mxu0 0.0
        %2927 = vmatprep.subr.mxu0 0.0
        %2928 = vmatpush1.msra.mxu0 0.0
        %2929 = vmatprep.subr.mxu0 0.0
        %2930 = vmatpush1.msra.mxu0 0.0
        %2931 = vmatprep.subr.mxu0 0.0
        %2932 = vmatpush1.msra.mxu0 0.0
        %2933 = vmatprep.subr.mxu0 0.0
        %2934 = vmatpush1.msra.mxu0 0.0
        %2935 = vmatprep.subr.mxu0 0.0
        %v2936 = vand.u32 %v2024, 4294901760
        %2937 = vmatpush1.msra.mxu0 %v2936
        %2938 = vmatprep.subr.mxu0 0.0
        %v2939 = vand.u32 %v2023, 4294901760
        %2940 = vmatpush1.msra.mxu0 %v2939
        %2941 = vmatprep.subr.mxu0 0.0
        %v2942 = vand.u32 %v2022, 4294901760
        %2943 = vmatpush1.msra.mxu0 %v2942
        %2944 = vmatprep.subr.mxu0 0.0
        %v2945 = vand.u32 %v2021, 4294901760
        %2946 = vmatpush1.msra.mxu0 %v2945
        %2947 = vmatprep.subr.mxu0 0.0
        %v2948 = vand.u32 %v2020, 4294901760
        %2949 = vmatpush1.msra.mxu0 %v2948
        %2950 = vmatprep.subr.mxu0 0.0
        %v2951 = vand.u32 %v2019, 4294901760
        %2952 = vmatpush1.msra.mxu0 %v2951
        %2953 = vmatprep.subr.mxu0 0.0
        %v2954 = vand.u32 %v2018, 4294901760
        %2955 = vmatpush1.msra.mxu0 %v2954
        %2956 = vmatprep.subr.mxu0 0.0
        %v2957 = vand.u32 %v2017, 4294901760
        %2958 = vmatpush1.msra.mxu0 %v2957
        %2959 = vmatprep.subr.mxu0 0.0
        %2960 = vmatpush2.msra.mxu0 0.0
        %2961 = vmatprep.subr.mxu0 0.0
        %2962 = vmatpush2.msra.mxu0 0.0
        %2963 = vmatprep.subr.mxu0 0.0
        %2964 = vmatpush2.msra.mxu0 0.0
        %2965 = vmatprep.subr.mxu0 0.0
        %2966 = vmatpush2.msra.mxu0 0.0
        %2967 = vmatprep.subr.mxu0 0.0
        %2968 = vmatpush2.msra.mxu0 0.0
        %2969 = vmatprep.subr.mxu0 0.0
        %2970 = vmatpush2.msra.mxu0 0.0
        %2971 = vmatprep.subr.mxu0 0.0
        %2972 = vmatpush2.msra.mxu0 0.0
        %2973 = vmatprep.subr.mxu0 0.0
        %2974 = vmatpush2.msra.mxu0 0.0
        %2975 = vmatprep.subr.mxu0 0.0
        %2976 = vmatpush2.msra.mxu0 0.0
        %2977 = vmatprep.subr.mxu0 0.0
        %2978 = vmatpush2.msra.mxu0 0.0
        %2979 = vmatprep.subr.mxu0 0.0
        %2980 = vmatpush2.msra.mxu0 0.0
        %2981 = vmatprep.subr.mxu0 0.0
        %2982 = vmatpush2.msra.mxu0 0.0
        %2983 = vmatprep.subr.mxu0 0.0
        %2984 = vmatpush2.msra.mxu0 0.0
        %2985 = vmatprep.subr.mxu0 0.0
        %2986 = vmatpush2.msra.mxu0 0.0
        %2987 = vmatprep.subr.mxu0 0.0
        %2988 = vmatpush2.msra.mxu0 0.0
        %2989 = vmatprep.subr.mxu0 0.0
        %2990 = vmatpush2.msra.mxu0 0.0
        %2991 = vmatprep.mubr.f32.mxu0 0.0
        %v2992 = vand.u32 %v830, 4294901760
        %v2993 = vsub.f32 %v830, %v2992
        %v2994 = vand.u32 %v2993, 4294901760
        %2995 = vmatmul.mubr.f32.gmra.mxu0 %v2994
        %v2996 = vpop.f32.mrf.mxu0
        %v2997 = vadd.f32 %v2909, %v2996
        %v2998 = vpop.f32.mrf.mxu0
        %2999 = vmatprep.mubr.f32.mxu0 0.0
        %v3000 = vand.u32 %v833, 4294901760
        %v3001 = vsub.f32 %v833, %v3000
        %v3002 = vand.u32 %v3001, 4294901760
        %3003 = vmatmul.mubr.f32.gmra.mxu0 %v3002
        %v3004 = vpop.f32.mrf.mxu0
        %v3005 = vadd.f32 %v2916, %v3004
        %v3006 = vpop.f32.mrf.mxu0
        %3007 = vdwg.mxu0
        %3008 = vmatprep.subr.mxu0 0.0
        %3009 = vmatpush1.msra.mxu0 0.0
        %3010 = vmatprep.subr.mxu0 0.0
        %3011 = vmatpush1.msra.mxu0 0.0
        %3012 = vmatprep.subr.mxu0 0.0
        %3013 = vmatpush1.msra.mxu0 0.0
        %3014 = vmatprep.subr.mxu0 0.0
        %3015 = vmatpush1.msra.mxu0 0.0
        %3016 = vmatprep.subr.mxu0 0.0
        %3017 = vmatpush1.msra.mxu0 0.0
        %3018 = vmatprep.subr.mxu0 0.0
        %3019 = vmatpush1.msra.mxu0 0.0
        %3020 = vmatprep.subr.mxu0 0.0
        %3021 = vmatpush1.msra.mxu0 0.0
        %3022 = vmatprep.subr.mxu0 0.0
        %3023 = vmatpush1.msra.mxu0 0.0
        %3024 = vmatprep.subr.mxu0 0.0
        %v3025 = vand.u32 %v2024, 4294901760
        %v3026 = vsub.f32 %v2024, %v3025
        %v3027 = vand.u32 %v3026, 4294901760
        %3028 = vmatpush1.msra.mxu0 %v3027
        %3029 = vmatprep.subr.mxu0 0.0
        %v3030 = vand.u32 %v2023, 4294901760
        %v3031 = vsub.f32 %v2023, %v3030
        %v3032 = vand.u32 %v3031, 4294901760
        %3033 = vmatpush1.msra.mxu0 %v3032
        %3034 = vmatprep.subr.mxu0 0.0
        %v3035 = vand.u32 %v2022, 4294901760
        %v3036 = vsub.f32 %v2022, %v3035
        %v3037 = vand.u32 %v3036, 4294901760
        %3038 = vmatpush1.msra.mxu0 %v3037
        %3039 = vmatprep.subr.mxu0 0.0
        %v3040 = vand.u32 %v2021, 4294901760
        %v3041 = vsub.f32 %v2021, %v3040
        %v3042 = vand.u32 %v3041, 4294901760
        %3043 = vmatpush1.msra.mxu0 %v3042
        %3044 = vmatprep.subr.mxu0 0.0
        %v3045 = vand.u32 %v2020, 4294901760
        %v3046 = vsub.f32 %v2020, %v3045
        %v3047 = vand.u32 %v3046, 4294901760
        %3048 = vmatpush1.msra.mxu0 %v3047
        %3049 = vmatprep.subr.mxu0 0.0
        %v3050 = vand.u32 %v2019, 4294901760
        %v3051 = vsub.f32 %v2019, %v3050
        %v3052 = vand.u32 %v3051, 4294901760
        %3053 = vmatpush1.msra.mxu0 %v3052
        %3054 = vmatprep.subr.mxu0 0.0
        %v3055 = vand.u32 %v2018, 4294901760
        %v3056 = vsub.f32 %v2018, %v3055
        %v3057 = vand.u32 %v3056, 4294901760
        %3058 = vmatpush1.msra.mxu0 %v3057
        %3059 = vmatprep.subr.mxu0 0.0
        %v3060 = vand.u32 %v2017, 4294901760
        %v3061 = vsub.f32 %v2017, %v3060
        %v3062 = vand.u32 %v3061, 4294901760
        %3063 = vmatpush1.msra.mxu0 %v3062
        %3064 = vmatprep.subr.mxu0 0.0
        %3065 = vmatpush2.msra.mxu0 0.0
        %3066 = vmatprep.subr.mxu0 0.0
        %3067 = vmatpush2.msra.mxu0 0.0
        %3068 = vmatprep.subr.mxu0 0.0
        %3069 = vmatpush2.msra.mxu0 0.0
        %3070 = vmatprep.subr.mxu0 0.0
        %3071 = vmatpush2.msra.mxu0 0.0
        %3072 = vmatprep.subr.mxu0 0.0
        %3073 = vmatpush2.msra.mxu0 0.0
        %3074 = vmatprep.subr.mxu0 0.0
        %3075 = vmatpush2.msra.mxu0 0.0
        %3076 = vmatprep.subr.mxu0 0.0
        %3077 = vmatpush2.msra.mxu0 0.0
        %3078 = vmatprep.subr.mxu0 0.0
        %3079 = vmatpush2.msra.mxu0 0.0
        %3080 = vmatprep.subr.mxu0 0.0
        %3081 = vmatpush2.msra.mxu0 0.0
        %3082 = vmatprep.subr.mxu0 0.0
        %3083 = vmatpush2.msra.mxu0 0.0
        %3084 = vmatprep.subr.mxu0 0.0
        %3085 = vmatpush2.msra.mxu0 0.0
        %3086 = vmatprep.subr.mxu0 0.0
        %3087 = vmatpush2.msra.mxu0 0.0
        %3088 = vmatprep.subr.mxu0 0.0
        %3089 = vmatpush2.msra.mxu0 0.0
        %3090 = vmatprep.subr.mxu0 0.0
        %3091 = vmatpush2.msra.mxu0 0.0
        %3092 = vmatprep.subr.mxu0 0.0
        %3093 = vmatpush2.msra.mxu0 0.0
        %3094 = vmatprep.subr.mxu0 0.0
        %3095 = vmatpush2.msra.mxu0 0.0
        %3096 = vmatprep.mubr.f32.mxu0 0.0
        %v3097 = vand.u32 %v830, 4294901760
        %3098 = vmatmul.mubr.f32.gmra.mxu0 %v3097
        %v3099 = vpop.f32.mrf.mxu0
        %v3100 = vadd.f32 %v2997, %v3099
        %v3101 = vpop.f32.mrf.mxu0
        %3102 = vmatprep.mubr.f32.mxu0 0.0
        %v3103 = vand.u32 %v833, 4294901760
        %3104 = vmatmul.mubr.f32.gmra.mxu0 %v3103
        %v3105 = vpop.f32.mrf.mxu0
        %v3106 = vadd.f32 %v3005, %v3105
        %v3107 = vpop.f32.mrf.mxu0
        %3108 = vdwg.mxu0
        %3109 = vmatprep.subr.mxu0 0.0
        %3110 = vmatpush1.msra.mxu0 0.0
        %3111 = vmatprep.subr.mxu0 0.0
        %3112 = vmatpush1.msra.mxu0 0.0
        %3113 = vmatprep.subr.mxu0 0.0
        %3114 = vmatpush1.msra.mxu0 0.0
        %3115 = vmatprep.subr.mxu0 0.0
        %3116 = vmatpush1.msra.mxu0 0.0
        %3117 = vmatprep.subr.mxu0 0.0
        %3118 = vmatpush1.msra.mxu0 0.0
        %3119 = vmatprep.subr.mxu0 0.0
        %3120 = vmatpush1.msra.mxu0 0.0
        %3121 = vmatprep.subr.mxu0 0.0
        %3122 = vmatpush1.msra.mxu0 0.0
        %3123 = vmatprep.subr.mxu0 0.0
        %3124 = vmatpush1.msra.mxu0 0.0
        %3125 = vmatprep.subr.mxu0 0.0
        %v3126 = vand.u32 %v2024, 4294901760
        %3127 = vmatpush1.msra.mxu0 %v3126
        %3128 = vmatprep.subr.mxu0 0.0
        %v3129 = vand.u32 %v2023, 4294901760
        %3130 = vmatpush1.msra.mxu0 %v3129
        %3131 = vmatprep.subr.mxu0 0.0
        %v3132 = vand.u32 %v2022, 4294901760
        %3133 = vmatpush1.msra.mxu0 %v3132
        %3134 = vmatprep.subr.mxu0 0.0
        %v3135 = vand.u32 %v2021, 4294901760
        %3136 = vmatpush1.msra.mxu0 %v3135
        %3137 = vmatprep.subr.mxu0 0.0
        %v3138 = vand.u32 %v2020, 4294901760
        %3139 = vmatpush1.msra.mxu0 %v3138
        %3140 = vmatprep.subr.mxu0 0.0
        %v3141 = vand.u32 %v2019, 4294901760
        %3142 = vmatpush1.msra.mxu0 %v3141
        %3143 = vmatprep.subr.mxu0 0.0
        %v3144 = vand.u32 %v2018, 4294901760
        %3145 = vmatpush1.msra.mxu0 %v3144
        %3146 = vmatprep.subr.mxu0 0.0
        %v3147 = vand.u32 %v2017, 4294901760
        %3148 = vmatpush1.msra.mxu0 %v3147
        %3149 = vmatprep.subr.mxu0 0.0
        %3150 = vmatpush2.msra.mxu0 0.0
        %3151 = vmatprep.subr.mxu0 0.0
        %3152 = vmatpush2.msra.mxu0 0.0
        %3153 = vmatprep.subr.mxu0 0.0
        %3154 = vmatpush2.msra.mxu0 0.0
        %3155 = vmatprep.subr.mxu0 0.0
        %3156 = vmatpush2.msra.mxu0 0.0
        %3157 = vmatprep.subr.mxu0 0.0
        %3158 = vmatpush2.msra.mxu0 0.0
        %3159 = vmatprep.subr.mxu0 0.0
        %3160 = vmatpush2.msra.mxu0 0.0
        %3161 = vmatprep.subr.mxu0 0.0
        %3162 = vmatpush2.msra.mxu0 0.0
        %3163 = vmatprep.subr.mxu0 0.0
        %3164 = vmatpush2.msra.mxu0 0.0
        %3165 = vmatprep.subr.mxu0 0.0
        %3166 = vmatpush2.msra.mxu0 0.0
        %3167 = vmatprep.subr.mxu0 0.0
        %3168 = vmatpush2.msra.mxu0 0.0
        %3169 = vmatprep.subr.mxu0 0.0
        %3170 = vmatpush2.msra.mxu0 0.0
        %3171 = vmatprep.subr.mxu0 0.0
        %3172 = vmatpush2.msra.mxu0 0.0
        %3173 = vmatprep.subr.mxu0 0.0
        %3174 = vmatpush2.msra.mxu0 0.0
        %3175 = vmatprep.subr.mxu0 0.0
        %3176 = vmatpush2.msra.mxu0 0.0
        %3177 = vmatprep.subr.mxu0 0.0
        %3178 = vmatpush2.msra.mxu0 0.0
        %3179 = vmatprep.subr.mxu0 0.0
        %3180 = vmatpush2.msra.mxu0 0.0
        %3181 = vmatprep.mubr.f32.mxu0 0.0
        %v3182 = vand.u32 %v830, 4294901760
        %3183 = vmatmul.mubr.f32.gmra.mxu0 %v3182
        %v3184 = vpop.f32.mrf.mxu0
        %v3185 = vadd.f32 %v3100, %v3184
        %v3186 = vpop.f32.mrf.mxu0
        %3187 = vmatprep.mubr.f32.mxu0 0.0
        %v3188 = vand.u32 %v833, 4294901760
        %3189 = vmatmul.mubr.f32.gmra.mxu0 %v3188
        %v3190 = vpop.f32.mrf.mxu0
        %v3191 = vadd.f32 %v3106, %v3190
        %v3192 = vpop.f32.mrf.mxu0
        %3193 = vdwg.mxu0
        %s3194 = scalar_lea.vmem %s1, 320
        %v3195 = vld [vmem:[%s3194] sm:$0xff]
        %v3196 = vld [vmem:[%s3194 + $0x8] sm:$0xff]
        %v3197 = vld [vmem:[%s3194 + $0x10] sm:$0xff]
        %v3198 = vld [vmem:[%s3194 + $0x18] sm:$0xff]
        %v3199 = vld [vmem:[%s3194 + $0x20] sm:$0xff]
        %v3200 = vld [vmem:[%s3194 + $0x28] sm:$0xff]
        %v3201 = vld [vmem:[%s3194 + $0x30] sm:$0xff]
        %v3202 = vld [vmem:[%s3194 + $0x38] sm:$0xff]
        %3203 = vmatprep.subr.mxu0 0.0
        %3204 = vmatpush1.msra.mxu0 0.0
        %3205 = vmatprep.subr.mxu0 0.0
        %3206 = vmatpush1.msra.mxu0 0.0
        %3207 = vmatprep.subr.mxu0 0.0
        %3208 = vmatpush1.msra.mxu0 0.0
        %3209 = vmatprep.subr.mxu0 0.0
        %3210 = vmatpush1.msra.mxu0 0.0
        %3211 = vmatprep.subr.mxu0 0.0
        %3212 = vmatpush1.msra.mxu0 0.0
        %3213 = vmatprep.subr.mxu0 0.0
        %3214 = vmatpush1.msra.mxu0 0.0
        %3215 = vmatprep.subr.mxu0 0.0
        %3216 = vmatpush1.msra.mxu0 0.0
        %3217 = vmatprep.subr.mxu0 0.0
        %3218 = vmatpush1.msra.mxu0 0.0
        %3219 = vmatprep.subr.mxu0 0.0
        %v3220 = vand.u32 %v3202, 4294901760
        %3221 = vmatpush1.msra.mxu0 %v3220
        %3222 = vmatprep.subr.mxu0 0.0
        %v3223 = vand.u32 %v3201, 4294901760
        %3224 = vmatpush1.msra.mxu0 %v3223
        %3225 = vmatprep.subr.mxu0 0.0
        %v3226 = vand.u32 %v3200, 4294901760
        %3227 = vmatpush1.msra.mxu0 %v3226
        %3228 = vmatprep.subr.mxu0 0.0
        %v3229 = vand.u32 %v3199, 4294901760
        %3230 = vmatpush1.msra.mxu0 %v3229
        %3231 = vmatprep.subr.mxu0 0.0
        %v3232 = vand.u32 %v3198, 4294901760
        %3233 = vmatpush1.msra.mxu0 %v3232
        %3234 = vmatprep.subr.mxu0 0.0
        %v3235 = vand.u32 %v3197, 4294901760
        %3236 = vmatpush1.msra.mxu0 %v3235
        %3237 = vmatprep.subr.mxu0 0.0
        %v3238 = vand.u32 %v3196, 4294901760
        %3239 = vmatpush1.msra.mxu0 %v3238
        %3240 = vmatprep.subr.mxu0 0.0
        %v3241 = vand.u32 %v3195, 4294901760
        %3242 = vmatpush1.msra.mxu0 %v3241
        %3243 = vmatprep.subr.mxu0 0.0
        %3244 = vmatpush2.msra.mxu0 0.0
        %3245 = vmatprep.subr.mxu0 0.0
        %3246 = vmatpush2.msra.mxu0 0.0
        %3247 = vmatprep.subr.mxu0 0.0
        %3248 = vmatpush2.msra.mxu0 0.0
        %3249 = vmatprep.subr.mxu0 0.0
        %3250 = vmatpush2.msra.mxu0 0.0
        %3251 = vmatprep.subr.mxu0 0.0
        %3252 = vmatpush2.msra.mxu0 0.0
        %3253 = vmatprep.subr.mxu0 0.0
        %3254 = vmatpush2.msra.mxu0 0.0
        %3255 = vmatprep.subr.mxu0 0.0
        %3256 = vmatpush2.msra.mxu0 0.0
        %3257 = vmatprep.subr.mxu0 0.0
        %3258 = vmatpush2.msra.mxu0 0.0
        %3259 = vmatprep.subr.mxu0 0.0
        %3260 = vmatpush2.msra.mxu0 0.0
        %3261 = vmatprep.subr.mxu0 0.0
        %3262 = vmatpush2.msra.mxu0 0.0
        %3263 = vmatprep.subr.mxu0 0.0
        %3264 = vmatpush2.msra.mxu0 0.0
        %3265 = vmatprep.subr.mxu0 0.0
        %3266 = vmatpush2.msra.mxu0 0.0
        %3267 = vmatprep.subr.mxu0 0.0
        %3268 = vmatpush2.msra.mxu0 0.0
        %3269 = vmatprep.subr.mxu0 0.0
        %3270 = vmatpush2.msra.mxu0 0.0
        %3271 = vmatprep.subr.mxu0 0.0
        %3272 = vmatpush2.msra.mxu0 0.0
        %3273 = vmatprep.subr.mxu0 0.0
        %3274 = vmatpush2.msra.mxu0 0.0
        %3275 = vmatprep.mubr.f32.mxu0 0.0
        %v3276 = vand.u32 %v1425, 4294901760
        %v3277 = vsub.f32 %v1425, %v3276
        %v3278 = vand.u32 %v3277, 4294901760
        %v3279 = vsub.f32 %v3277, %v3278
        %v3280 = vand.u32 %v3279, 4294901760
        %3281 = vmatmul.mubr.f32.gmra.mxu0 %v3280
        %v3282 = vpop.f32.mrf.mxu0
        %v3283 = vadd.f32 0.0, %v3282
        %v3284 = vpop.f32.mrf.mxu0
        %3285 = vmatprep.mubr.f32.mxu0 0.0
        %v3286 = vand.u32 %v1428, 4294901760
        %v3287 = vsub.f32 %v1428, %v3286
        %v3288 = vand.u32 %v3287, 4294901760
        %v3289 = vsub.f32 %v3287, %v3288
        %v3290 = vand.u32 %v3289, 4294901760
        %3291 = vmatmul.mubr.f32.gmra.mxu0 %v3290
        %v3292 = vpop.f32.mrf.mxu0
        %v3293 = vadd.f32 0.0, %v3292
        %v3294 = vpop.f32.mrf.mxu0
        %3295 = vdwg.mxu0
        %3296 = vmatprep.subr.mxu0 0.0
        %3297 = vmatpush1.msra.mxu0 0.0
        %3298 = vmatprep.subr.mxu0 0.0
        %3299 = vmatpush1.msra.mxu0 0.0
        %3300 = vmatprep.subr.mxu0 0.0
        %3301 = vmatpush1.msra.mxu0 0.0
        %3302 = vmatprep.subr.mxu0 0.0
        %3303 = vmatpush1.msra.mxu0 0.0
        %3304 = vmatprep.subr.mxu0 0.0
        %3305 = vmatpush1.msra.mxu0 0.0
        %3306 = vmatprep.subr.mxu0 0.0
        %3307 = vmatpush1.msra.mxu0 0.0
        %3308 = vmatprep.subr.mxu0 0.0
        %3309 = vmatpush1.msra.mxu0 0.0
        %3310 = vmatprep.subr.mxu0 0.0
        %3311 = vmatpush1.msra.mxu0 0.0
        %3312 = vmatprep.subr.mxu0 0.0
        %v3313 = vand.u32 %v3202, 4294901760
        %v3314 = vsub.f32 %v3202, %v3313
        %v3315 = vand.u32 %v3314, 4294901760
        %v3316 = vsub.f32 %v3314, %v3315
        %v3317 = vand.u32 %v3316, 4294901760
        %3318 = vmatpush1.msra.mxu0 %v3317
        %3319 = vmatprep.subr.mxu0 0.0
        %v3320 = vand.u32 %v3201, 4294901760
        %v3321 = vsub.f32 %v3201, %v3320
        %v3322 = vand.u32 %v3321, 4294901760
        %v3323 = vsub.f32 %v3321, %v3322
        %v3324 = vand.u32 %v3323, 4294901760
        %3325 = vmatpush1.msra.mxu0 %v3324
        %3326 = vmatprep.subr.mxu0 0.0
        %v3327 = vand.u32 %v3200, 4294901760
        %v3328 = vsub.f32 %v3200, %v3327
        %v3329 = vand.u32 %v3328, 4294901760
        %v3330 = vsub.f32 %v3328, %v3329
        %v3331 = vand.u32 %v3330, 4294901760
        %3332 = vmatpush1.msra.mxu0 %v3331
        %3333 = vmatprep.subr.mxu0 0.0
        %v3334 = vand.u32 %v3199, 4294901760
        %v3335 = vsub.f32 %v3199, %v3334
        %v3336 = vand.u32 %v3335, 4294901760
        %v3337 = vsub.f32 %v3335, %v3336
        %v3338 = vand.u32 %v3337, 4294901760
        %3339 = vmatpush1.msra.mxu0 %v3338
        %3340 = vmatprep.subr.mxu0 0.0
        %v3341 = vand.u32 %v3198, 4294901760
        %v3342 = vsub.f32 %v3198, %v3341
        %v3343 = vand.u32 %v3342, 4294901760
        %v3344 = vsub.f32 %v3342, %v3343
        %v3345 = vand.u32 %v3344, 4294901760
        %3346 = vmatpush1.msra.mxu0 %v3345
        %3347 = vmatprep.subr.mxu0 0.0
        %v3348 = vand.u32 %v3197, 4294901760
        %v3349 = vsub.f32 %v3197, %v3348
        %v3350 = vand.u32 %v3349, 4294901760
        %v3351 = vsub.f32 %v3349, %v3350
        %v3352 = vand.u32 %v3351, 4294901760
        %3353 = vmatpush1.msra.mxu0 %v3352
        %3354 = vmatprep.subr.mxu0 0.0
        %v3355 = vand.u32 %v3196, 4294901760
        %v3356 = vsub.f32 %v3196, %v3355
        %v3357 = vand.u32 %v3356, 4294901760
        %v3358 = vsub.f32 %v3356, %v3357
        %v3359 = vand.u32 %v3358, 4294901760
        %3360 = vmatpush1.msra.mxu0 %v3359
        %3361 = vmatprep.subr.mxu0 0.0
        %v3362 = vand.u32 %v3195, 4294901760
        %v3363 = vsub.f32 %v3195, %v3362
        %v3364 = vand.u32 %v3363, 4294901760
        %v3365 = vsub.f32 %v3363, %v3364
        %v3366 = vand.u32 %v3365, 4294901760
        %3367 = vmatpush1.msra.mxu0 %v3366
        %3368 = vmatprep.subr.mxu0 0.0
        %3369 = vmatpush2.msra.mxu0 0.0
        %3370 = vmatprep.subr.mxu0 0.0
        %3371 = vmatpush2.msra.mxu0 0.0
        %3372 = vmatprep.subr.mxu0 0.0
        %3373 = vmatpush2.msra.mxu0 0.0
        %3374 = vmatprep.subr.mxu0 0.0
        %3375 = vmatpush2.msra.mxu0 0.0
        %3376 = vmatprep.subr.mxu0 0.0
        %3377 = vmatpush2.msra.mxu0 0.0
        %3378 = vmatprep.subr.mxu0 0.0
        %3379 = vmatpush2.msra.mxu0 0.0
        %3380 = vmatprep.subr.mxu0 0.0
        %3381 = vmatpush2.msra.mxu0 0.0
        %3382 = vmatprep.subr.mxu0 0.0
        %3383 = vmatpush2.msra.mxu0 0.0
        %3384 = vmatprep.subr.mxu0 0.0
        %3385 = vmatpush2.msra.mxu0 0.0
        %3386 = vmatprep.subr.mxu0 0.0
        %3387 = vmatpush2.msra.mxu0 0.0
        %3388 = vmatprep.subr.mxu0 0.0
        %3389 = vmatpush2.msra.mxu0 0.0
        %3390 = vmatprep.subr.mxu0 0.0
        %3391 = vmatpush2.msra.mxu0 0.0
        %3392 = vmatprep.subr.mxu0 0.0
        %3393 = vmatpush2.msra.mxu0 0.0
        %3394 = vmatprep.subr.mxu0 0.0
        %3395 = vmatpush2.msra.mxu0 0.0
        %3396 = vmatprep.subr.mxu0 0.0
        %3397 = vmatpush2.msra.mxu0 0.0
        %3398 = vmatprep.subr.mxu0 0.0
        %3399 = vmatpush2.msra.mxu0 0.0
        %3400 = vmatprep.mubr.f32.mxu0 0.0
        %v3401 = vand.u32 %v1425, 4294901760
        %3402 = vmatmul.mubr.f32.gmra.mxu0 %v3401
        %v3403 = vpop.f32.mrf.mxu0
        %v3404 = vadd.f32 %v3283, %v3403
        %v3405 = vpop.f32.mrf.mxu0
        %3406 = vmatprep.mubr.f32.mxu0 0.0
        %v3407 = vand.u32 %v1428, 4294901760
        %3408 = vmatmul.mubr.f32.gmra.mxu0 %v3407
        %v3409 = vpop.f32.mrf.mxu0
        %v3410 = vadd.f32 %v3293, %v3409
        %v3411 = vpop.f32.mrf.mxu0
        %3412 = vdwg.mxu0
        %3413 = vmatprep.subr.mxu0 0.0
        %3414 = vmatpush1.msra.mxu0 0.0
        %3415 = vmatprep.subr.mxu0 0.0
        %3416 = vmatpush1.msra.mxu0 0.0
        %3417 = vmatprep.subr.mxu0 0.0
        %3418 = vmatpush1.msra.mxu0 0.0
        %3419 = vmatprep.subr.mxu0 0.0
        %3420 = vmatpush1.msra.mxu0 0.0
        %3421 = vmatprep.subr.mxu0 0.0
        %3422 = vmatpush1.msra.mxu0 0.0
        %3423 = vmatprep.subr.mxu0 0.0
        %3424 = vmatpush1.msra.mxu0 0.0
        %3425 = vmatprep.subr.mxu0 0.0
        %3426 = vmatpush1.msra.mxu0 0.0
        %3427 = vmatprep.subr.mxu0 0.0
        %3428 = vmatpush1.msra.mxu0 0.0
        %3429 = vmatprep.subr.mxu0 0.0
        %v3430 = vand.u32 %v3202, 4294901760
        %v3431 = vsub.f32 %v3202, %v3430
        %3432 = vmatpush1.msra.mxu0 %v3431
        %3433 = vmatprep.subr.mxu0 0.0
        %v3434 = vand.u32 %v3201, 4294901760
        %v3435 = vsub.f32 %v3201, %v3434
        %3436 = vmatpush1.msra.mxu0 %v3435
        %3437 = vmatprep.subr.mxu0 0.0
        %v3438 = vand.u32 %v3200, 4294901760
        %v3439 = vsub.f32 %v3200, %v3438
        %3440 = vmatpush1.msra.mxu0 %v3439
        %3441 = vmatprep.subr.mxu0 0.0
        %v3442 = vand.u32 %v3199, 4294901760
        %v3443 = vsub.f32 %v3199, %v3442
        %3444 = vmatpush1.msra.mxu0 %v3443
        %3445 = vmatprep.subr.mxu0 0.0
        %v3446 = vand.u32 %v3198, 4294901760
        %v3447 = vsub.f32 %v3198, %v3446
        %3448 = vmatpush1.msra.mxu0 %v3447
        %3449 = vmatprep.subr.mxu0 0.0
        %v3450 = vand.u32 %v3197, 4294901760
        %v3451 = vsub.f32 %v3197, %v3450
        %3452 = vmatpush1.msra.mxu0 %v3451
        %3453 = vmatprep.subr.mxu0 0.0
        %v3454 = vand.u32 %v3196, 4294901760
        %v3455 = vsub.f32 %v3196, %v3454
        %3456 = vmatpush1.msra.mxu0 %v3455
        %3457 = vmatprep.subr.mxu0 0.0
        %v3458 = vand.u32 %v3195, 4294901760
        %v3459 = vsub.f32 %v3195, %v3458
        %3460 = vmatpush1.msra.mxu0 %v3459
        %3461 = vmatprep.subr.mxu0 0.0
        %3462 = vmatpush2.msra.mxu0 0.0
        %3463 = vmatprep.subr.mxu0 0.0
        %3464 = vmatpush2.msra.mxu0 0.0
        %3465 = vmatprep.subr.mxu0 0.0
        %3466 = vmatpush2.msra.mxu0 0.0
        %3467 = vmatprep.subr.mxu0 0.0
        %3468 = vmatpush2.msra.mxu0 0.0
        %3469 = vmatprep.subr.mxu0 0.0
        %3470 = vmatpush2.msra.mxu0 0.0
        %3471 = vmatprep.subr.mxu0 0.0
        %3472 = vmatpush2.msra.mxu0 0.0
        %3473 = vmatprep.subr.mxu0 0.0
        %3474 = vmatpush2.msra.mxu0 0.0
        %3475 = vmatprep.subr.mxu0 0.0
        %3476 = vmatpush2.msra.mxu0 0.0
        %3477 = vmatprep.subr.mxu0 0.0
        %3478 = vmatpush2.msra.mxu0 0.0
        %3479 = vmatprep.subr.mxu0 0.0
        %3480 = vmatpush2.msra.mxu0 0.0
        %3481 = vmatprep.subr.mxu0 0.0
        %3482 = vmatpush2.msra.mxu0 0.0
        %3483 = vmatprep.subr.mxu0 0.0
        %3484 = vmatpush2.msra.mxu0 0.0
        %3485 = vmatprep.subr.mxu0 0.0
        %3486 = vmatpush2.msra.mxu0 0.0
        %3487 = vmatprep.subr.mxu0 0.0
        %3488 = vmatpush2.msra.mxu0 0.0
        %3489 = vmatprep.subr.mxu0 0.0
        %3490 = vmatpush2.msra.mxu0 0.0
        %3491 = vmatprep.subr.mxu0 0.0
        %3492 = vmatpush2.msra.mxu0 0.0
        %3493 = vmatprep.mubr.f32.mxu0 0.0
        %v3494 = vand.u32 %v1425, 4294901760
        %v3495 = vsub.f32 %v1425, %v3494
        %3496 = vmatmul.mubr.f32.gmra.mxu0 %v3495
        %v3497 = vpop.f32.mrf.mxu0
        %v3498 = vadd.f32 %v3404, %v3497
        %v3499 = vpop.f32.mrf.mxu0
        %3500 = vmatprep.mubr.f32.mxu0 0.0
        %v3501 = vand.u32 %v1428, 4294901760
        %v3502 = vsub.f32 %v1428, %v3501
        %3503 = vmatmul.mubr.f32.gmra.mxu0 %v3502
        %v3504 = vpop.f32.mrf.mxu0
        %v3505 = vadd.f32 %v3410, %v3504
        %v3506 = vpop.f32.mrf.mxu0
        %3507 = vdwg.mxu0
        %3508 = vmatprep.subr.mxu0 0.0
        %3509 = vmatpush1.msra.mxu0 0.0
        %3510 = vmatprep.subr.mxu0 0.0
        %3511 = vmatpush1.msra.mxu0 0.0
        %3512 = vmatprep.subr.mxu0 0.0
        %3513 = vmatpush1.msra.mxu0 0.0
        %3514 = vmatprep.subr.mxu0 0.0
        %3515 = vmatpush1.msra.mxu0 0.0
        %3516 = vmatprep.subr.mxu0 0.0
        %3517 = vmatpush1.msra.mxu0 0.0
        %3518 = vmatprep.subr.mxu0 0.0
        %3519 = vmatpush1.msra.mxu0 0.0
        %3520 = vmatprep.subr.mxu0 0.0
        %3521 = vmatpush1.msra.mxu0 0.0
        %3522 = vmatprep.subr.mxu0 0.0
        %3523 = vmatpush1.msra.mxu0 0.0
        %3524 = vmatprep.subr.mxu0 0.0
        %v3525 = vand.u32 %v3202, 4294901760
        %3526 = vmatpush1.msra.mxu0 %v3525
        %3527 = vmatprep.subr.mxu0 0.0
        %v3528 = vand.u32 %v3201, 4294901760
        %3529 = vmatpush1.msra.mxu0 %v3528
        %3530 = vmatprep.subr.mxu0 0.0
        %v3531 = vand.u32 %v3200, 4294901760
        %3532 = vmatpush1.msra.mxu0 %v3531
        %3533 = vmatprep.subr.mxu0 0.0
        %v3534 = vand.u32 %v3199, 4294901760
        %3535 = vmatpush1.msra.mxu0 %v3534
        %3536 = vmatprep.subr.mxu0 0.0
        %v3537 = vand.u32 %v3198, 4294901760
        %3538 = vmatpush1.msra.mxu0 %v3537
        %3539 = vmatprep.subr.mxu0 0.0
        %v3540 = vand.u32 %v3197, 4294901760
        %3541 = vmatpush1.msra.mxu0 %v3540
        %3542 = vmatprep.subr.mxu0 0.0
        %v3543 = vand.u32 %v3196, 4294901760
        %3544 = vmatpush1.msra.mxu0 %v3543
        %3545 = vmatprep.subr.mxu0 0.0
        %v3546 = vand.u32 %v3195, 4294901760
        %3547 = vmatpush1.msra.mxu0 %v3546
        %3548 = vmatprep.subr.mxu0 0.0
        %3549 = vmatpush2.msra.mxu0 0.0
        %3550 = vmatprep.subr.mxu0 0.0
        %3551 = vmatpush2.msra.mxu0 0.0
        %3552 = vmatprep.subr.mxu0 0.0
        %3553 = vmatpush2.msra.mxu0 0.0
        %3554 = vmatprep.subr.mxu0 0.0
        %3555 = vmatpush2.msra.mxu0 0.0
        %3556 = vmatprep.subr.mxu0 0.0
        %3557 = vmatpush2.msra.mxu0 0.0
        %3558 = vmatprep.subr.mxu0 0.0
        %3559 = vmatpush2.msra.mxu0 0.0
        %3560 = vmatprep.subr.mxu0 0.0
        %3561 = vmatpush2.msra.mxu0 0.0
        %3562 = vmatprep.subr.mxu0 0.0
        %3563 = vmatpush2.msra.mxu0 0.0
        %3564 = vmatprep.subr.mxu0 0.0
        %3565 = vmatpush2.msra.mxu0 0.0
        %3566 = vmatprep.subr.mxu0 0.0
        %3567 = vmatpush2.msra.mxu0 0.0
        %3568 = vmatprep.subr.mxu0 0.0
        %3569 = vmatpush2.msra.mxu0 0.0
        %3570 = vmatprep.subr.mxu0 0.0
        %3571 = vmatpush2.msra.mxu0 0.0
        %3572 = vmatprep.subr.mxu0 0.0
        %3573 = vmatpush2.msra.mxu0 0.0
        %3574 = vmatprep.subr.mxu0 0.0
        %3575 = vmatpush2.msra.mxu0 0.0
        %3576 = vmatprep.subr.mxu0 0.0
        %3577 = vmatpush2.msra.mxu0 0.0
        %3578 = vmatprep.subr.mxu0 0.0
        %3579 = vmatpush2.msra.mxu0 0.0
        %3580 = vmatprep.mubr.f32.mxu0 0.0
        %v3581 = vand.u32 %v1425, 4294901760
        %v3582 = vsub.f32 %v1425, %v3581
        %v3583 = vand.u32 %v3582, 4294901760
        %3584 = vmatmul.mubr.f32.gmra.mxu0 %v3583
        %v3585 = vpop.f32.mrf.mxu0
        %v3586 = vadd.f32 %v3498, %v3585
        %v3587 = vpop.f32.mrf.mxu0
        %3588 = vmatprep.mubr.f32.mxu0 0.0
        %v3589 = vand.u32 %v1428, 4294901760
        %v3590 = vsub.f32 %v1428, %v3589
        %v3591 = vand.u32 %v3590, 4294901760
        %3592 = vmatmul.mubr.f32.gmra.mxu0 %v3591
        %v3593 = vpop.f32.mrf.mxu0
        %v3594 = vadd.f32 %v3505, %v3593
        %v3595 = vpop.f32.mrf.mxu0
        %3596 = vdwg.mxu0
        %3597 = vmatprep.subr.mxu0 0.0
        %3598 = vmatpush1.msra.mxu0 0.0
        %3599 = vmatprep.subr.mxu0 0.0
        %3600 = vmatpush1.msra.mxu0 0.0
        %3601 = vmatprep.subr.mxu0 0.0
        %3602 = vmatpush1.msra.mxu0 0.0
        %3603 = vmatprep.subr.mxu0 0.0
        %3604 = vmatpush1.msra.mxu0 0.0
        %3605 = vmatprep.subr.mxu0 0.0
        %3606 = vmatpush1.msra.mxu0 0.0
        %3607 = vmatprep.subr.mxu0 0.0
        %3608 = vmatpush1.msra.mxu0 0.0
        %3609 = vmatprep.subr.mxu0 0.0
        %3610 = vmatpush1.msra.mxu0 0.0
        %3611 = vmatprep.subr.mxu0 0.0
        %3612 = vmatpush1.msra.mxu0 0.0
        %3613 = vmatprep.subr.mxu0 0.0
        %v3614 = vand.u32 %v3202, 4294901760
        %v3615 = vsub.f32 %v3202, %v3614
        %v3616 = vand.u32 %v3615, 4294901760
        %3617 = vmatpush1.msra.mxu0 %v3616
        %3618 = vmatprep.subr.mxu0 0.0
        %v3619 = vand.u32 %v3201, 4294901760
        %v3620 = vsub.f32 %v3201, %v3619
        %v3621 = vand.u32 %v3620, 4294901760
        %3622 = vmatpush1.msra.mxu0 %v3621
        %3623 = vmatprep.subr.mxu0 0.0
        %v3624 = vand.u32 %v3200, 4294901760
        %v3625 = vsub.f32 %v3200, %v3624
        %v3626 = vand.u32 %v3625, 4294901760
        %3627 = vmatpush1.msra.mxu0 %v3626
        %3628 = vmatprep.subr.mxu0 0.0
        %v3629 = vand.u32 %v3199, 4294901760
        %v3630 = vsub.f32 %v3199, %v3629
        %v3631 = vand.u32 %v3630, 4294901760
        %3632 = vmatpush1.msra.mxu0 %v3631
        %3633 = vmatprep.subr.mxu0 0.0
        %v3634 = vand.u32 %v3198, 4294901760
        %v3635 = vsub.f32 %v3198, %v3634
        %v3636 = vand.u32 %v3635, 4294901760
        %3637 = vmatpush1.msra.mxu0 %v3636
        %3638 = vmatprep.subr.mxu0 0.0
        %v3639 = vand.u32 %v3197, 4294901760
        %v3640 = vsub.f32 %v3197, %v3639
        %v3641 = vand.u32 %v3640, 4294901760
        %3642 = vmatpush1.msra.mxu0 %v3641
        %3643 = vmatprep.subr.mxu0 0.0
        %v3644 = vand.u32 %v3196, 4294901760
        %v3645 = vsub.f32 %v3196, %v3644
        %v3646 = vand.u32 %v3645, 4294901760
        %3647 = vmatpush1.msra.mxu0 %v3646
        %3648 = vmatprep.subr.mxu0 0.0
        %v3649 = vand.u32 %v3195, 4294901760
        %v3650 = vsub.f32 %v3195, %v3649
        %v3651 = vand.u32 %v3650, 4294901760
        %3652 = vmatpush1.msra.mxu0 %v3651
        %3653 = vmatprep.subr.mxu0 0.0
        %3654 = vmatpush2.msra.mxu0 0.0
        %3655 = vmatprep.subr.mxu0 0.0
        %3656 = vmatpush2.msra.mxu0 0.0
        %3657 = vmatprep.subr.mxu0 0.0
        %3658 = vmatpush2.msra.mxu0 0.0
        %3659 = vmatprep.subr.mxu0 0.0
        %3660 = vmatpush2.msra.mxu0 0.0
        %3661 = vmatprep.subr.mxu0 0.0
        %3662 = vmatpush2.msra.mxu0 0.0
        %3663 = vmatprep.subr.mxu0 0.0
        %3664 = vmatpush2.msra.mxu0 0.0
        %3665 = vmatprep.subr.mxu0 0.0
        %3666 = vmatpush2.msra.mxu0 0.0
        %3667 = vmatprep.subr.mxu0 0.0
        %3668 = vmatpush2.msra.mxu0 0.0
        %3669 = vmatprep.subr.mxu0 0.0
        %3670 = vmatpush2.msra.mxu0 0.0
        %3671 = vmatprep.subr.mxu0 0.0
        %3672 = vmatpush2.msra.mxu0 0.0
        %3673 = vmatprep.subr.mxu0 0.0
        %3674 = vmatpush2.msra.mxu0 0.0
        %3675 = vmatprep.subr.mxu0 0.0
        %3676 = vmatpush2.msra.mxu0 0.0
        %3677 = vmatprep.subr.mxu0 0.0
        %3678 = vmatpush2.msra.mxu0 0.0
        %3679 = vmatprep.subr.mxu0 0.0
        %3680 = vmatpush2.msra.mxu0 0.0
        %3681 = vmatprep.subr.mxu0 0.0
        %3682 = vmatpush2.msra.mxu0 0.0
        %3683 = vmatprep.subr.mxu0 0.0
        %3684 = vmatpush2.msra.mxu0 0.0
        %3685 = vmatprep.mubr.f32.mxu0 0.0
        %v3686 = vand.u32 %v1425, 4294901760
        %3687 = vmatmul.mubr.f32.gmra.mxu0 %v3686
        %v3688 = vpop.f32.mrf.mxu0
        %v3689 = vadd.f32 %v3586, %v3688
        %v3690 = vpop.f32.mrf.mxu0
        %3691 = vmatprep.mubr.f32.mxu0 0.0
        %v3692 = vand.u32 %v1428, 4294901760
        %3693 = vmatmul.mubr.f32.gmra.mxu0 %v3692
        %v3694 = vpop.f32.mrf.mxu0
        %v3695 = vadd.f32 %v3594, %v3694
        %v3696 = vpop.f32.mrf.mxu0
        %3697 = vdwg.mxu0
        %3698 = vmatprep.subr.mxu0 0.0
        %3699 = vmatpush1.msra.mxu0 0.0
        %3700 = vmatprep.subr.mxu0 0.0
        %3701 = vmatpush1.msra.mxu0 0.0
        %3702 = vmatprep.subr.mxu0 0.0
        %3703 = vmatpush1.msra.mxu0 0.0
        %3704 = vmatprep.subr.mxu0 0.0
        %3705 = vmatpush1.msra.mxu0 0.0
        %3706 = vmatprep.subr.mxu0 0.0
        %3707 = vmatpush1.msra.mxu0 0.0
        %3708 = vmatprep.subr.mxu0 0.0
        %3709 = vmatpush1.msra.mxu0 0.0
        %3710 = vmatprep.subr.mxu0 0.0
        %3711 = vmatpush1.msra.mxu0 0.0
        %3712 = vmatprep.subr.mxu0 0.0
        %3713 = vmatpush1.msra.mxu0 0.0
        %3714 = vmatprep.subr.mxu0 0.0
        %v3715 = vand.u32 %v3202, 4294901760
        %3716 = vmatpush1.msra.mxu0 %v3715
        %3717 = vmatprep.subr.mxu0 0.0
        %v3718 = vand.u32 %v3201, 4294901760
        %3719 = vmatpush1.msra.mxu0 %v3718
        %3720 = vmatprep.subr.mxu0 0.0
        %v3721 = vand.u32 %v3200, 4294901760
        %3722 = vmatpush1.msra.mxu0 %v3721
        %3723 = vmatprep.subr.mxu0 0.0
        %v3724 = vand.u32 %v3199, 4294901760
        %3725 = vmatpush1.msra.mxu0 %v3724
        %3726 = vmatprep.subr.mxu0 0.0
        %v3727 = vand.u32 %v3198, 4294901760
        %3728 = vmatpush1.msra.mxu0 %v3727
        %3729 = vmatprep.subr.mxu0 0.0
        %v3730 = vand.u32 %v3197, 4294901760
        %3731 = vmatpush1.msra.mxu0 %v3730
        %3732 = vmatprep.subr.mxu0 0.0
        %v3733 = vand.u32 %v3196, 4294901760
        %3734 = vmatpush1.msra.mxu0 %v3733
        %3735 = vmatprep.subr.mxu0 0.0
        %v3736 = vand.u32 %v3195, 4294901760
        %3737 = vmatpush1.msra.mxu0 %v3736
        %3738 = vmatprep.subr.mxu0 0.0
        %3739 = vmatpush2.msra.mxu0 0.0
        %3740 = vmatprep.subr.mxu0 0.0
        %3741 = vmatpush2.msra.mxu0 0.0
        %3742 = vmatprep.subr.mxu0 0.0
        %3743 = vmatpush2.msra.mxu0 0.0
        %3744 = vmatprep.subr.mxu0 0.0
        %3745 = vmatpush2.msra.mxu0 0.0
        %3746 = vmatprep.subr.mxu0 0.0
        %3747 = vmatpush2.msra.mxu0 0.0
        %3748 = vmatprep.subr.mxu0 0.0
        %3749 = vmatpush2.msra.mxu0 0.0
        %3750 = vmatprep.subr.mxu0 0.0
        %3751 = vmatpush2.msra.mxu0 0.0
        %3752 = vmatprep.subr.mxu0 0.0
        %3753 = vmatpush2.msra.mxu0 0.0
        %3754 = vmatprep.subr.mxu0 0.0
        %3755 = vmatpush2.msra.mxu0 0.0
        %3756 = vmatprep.subr.mxu0 0.0
        %3757 = vmatpush2.msra.mxu0 0.0
        %3758 = vmatprep.subr.mxu0 0.0
        %3759 = vmatpush2.msra.mxu0 0.0
        %3760 = vmatprep.subr.mxu0 0.0
        %3761 = vmatpush2.msra.mxu0 0.0
        %3762 = vmatprep.subr.mxu0 0.0
        %3763 = vmatpush2.msra.mxu0 0.0
        %3764 = vmatprep.subr.mxu0 0.0
        %3765 = vmatpush2.msra.mxu0 0.0
        %3766 = vmatprep.subr.mxu0 0.0
        %3767 = vmatpush2.msra.mxu0 0.0
        %3768 = vmatprep.subr.mxu0 0.0
        %3769 = vmatpush2.msra.mxu0 0.0
        %3770 = vmatprep.mubr.f32.mxu0 0.0
        %v3771 = vand.u32 %v1425, 4294901760
        %3772 = vmatmul.mubr.f32.gmra.mxu0 %v3771
        %v3773 = vpop.f32.mrf.mxu0
        %v3774 = vadd.f32 %v3689, %v3773
        %v3775 = vpop.f32.mrf.mxu0
        %3776 = vmatprep.mubr.f32.mxu0 0.0
        %v3777 = vand.u32 %v1428, 4294901760
        %3778 = vmatmul.mubr.f32.gmra.mxu0 %v3777
        %v3779 = vpop.f32.mrf.mxu0
        %v3780 = vadd.f32 %v3695, %v3779
        %v3781 = vpop.f32.mrf.mxu0
        %3782 = vdwg.mxu0
        %v3783 = vadd.f32 %v3185, %v3774
        %v3784 = vadd.f32 %v3191, %v3780
        %s3785 = scalar_lea.vmem %s2, 32
        %v3786 = vld [vmem:[%s3785] sm:$0xff]
        %v3787 = vld [vmem:[%s3785 + $0x8] sm:$0xff]
        %v3788 = vld [vmem:[%s3785 + $0x10] sm:$0xff]
        %v3789 = vld [vmem:[%s3785 + $0x18] sm:$0xff]
        %v3791 = vsel %vm174, %v3786, 0
        %v3794 = vsel %vm174, %v3787, 0
        %v3797 = vsel %vm174, %v3788, 0
        %v3800 = vsel %vm174, %v3789, 0
        %3802 = vmatprep.subr.mxu0 0.0
        %3803 = vmatpush1.msra.mxu0 0.0
        %3804 = vmatprep.subr.mxu0 0.0
        %3805 = vmatpush1.msra.mxu0 0.0
        %3806 = vmatprep.subr.mxu0 0.0
        %3807 = vmatpush1.msra.mxu0 0.0
        %3808 = vmatprep.subr.mxu0 0.0
        %3809 = vmatpush1.msra.mxu0 0.0
        %3810 = vmatprep.subr.mxu0 0.0
        %3811 = vmatpush1.msra.mxu0 0.0
        %3812 = vmatprep.subr.mxu0 0.0
        %3813 = vmatpush1.msra.mxu0 0.0
        %3814 = vmatprep.subr.mxu0 0.0
        %3815 = vmatpush1.msra.mxu0 0.0
        %3816 = vmatprep.subr.mxu0 0.0
        %3817 = vmatpush1.msra.mxu0 0.0
        %3818 = vmatprep.subr.mxu0 0.0
        %3819 = vmatpush1.msra.mxu0 0.0
        %3820 = vmatprep.subr.mxu0 0.0
        %3821 = vmatpush1.msra.mxu0 0.0
        %3822 = vmatprep.subr.mxu0 0.0
        %3823 = vmatpush1.msra.mxu0 0.0
        %3824 = vmatprep.subr.mxu0 0.0
        %3825 = vmatpush1.msra.mxu0 0.0
        %3826 = vmatprep.subr.mxu0 0.0
        %3827 = vmatpush1.msra.mxu0 0.0
        %3828 = vmatprep.subr.mxu0 0.0
        %3829 = vmatpush1.msra.mxu0 0.0
        %3830 = vmatprep.subr.mxu0 0.0
        %v3831 = vand.u32 %v3784, 4294901760
        %3832 = vmatpush1.msra.mxu0 %v3831
        %3833 = vmatprep.subr.mxu0 0.0
        %v3834 = vand.u32 %v3783, 4294901760
        %3835 = vmatpush1.msra.mxu0 %v3834
        %3836 = vmatprep.subr.mxu0 0.0
        %3837 = vmatpush2.msra.mxu0 0.0
        %3838 = vmatprep.subr.mxu0 0.0
        %3839 = vmatpush2.msra.mxu0 0.0
        %3840 = vmatprep.subr.mxu0 0.0
        %3841 = vmatpush2.msra.mxu0 0.0
        %3842 = vmatprep.subr.mxu0 0.0
        %3843 = vmatpush2.msra.mxu0 0.0
        %3844 = vmatprep.subr.mxu0 0.0
        %3845 = vmatpush2.msra.mxu0 0.0
        %3846 = vmatprep.subr.mxu0 0.0
        %3847 = vmatpush2.msra.mxu0 0.0
        %3848 = vmatprep.subr.mxu0 0.0
        %3849 = vmatpush2.msra.mxu0 0.0
        %3850 = vmatprep.subr.mxu0 0.0
        %3851 = vmatpush2.msra.mxu0 0.0
        %3852 = vmatprep.subr.mxu0 0.0
        %3853 = vmatpush2.msra.mxu0 0.0
        %3854 = vmatprep.subr.mxu0 0.0
        %3855 = vmatpush2.msra.mxu0 0.0
        %3856 = vmatprep.subr.mxu0 0.0
        %3857 = vmatpush2.msra.mxu0 0.0
        %3858 = vmatprep.subr.mxu0 0.0
        %3859 = vmatpush2.msra.mxu0 0.0
        %3860 = vmatprep.subr.mxu0 0.0
        %3861 = vmatpush2.msra.mxu0 0.0
        %3862 = vmatprep.subr.mxu0 0.0
        %3863 = vmatpush2.msra.mxu0 0.0
        %3864 = vmatprep.subr.mxu0 0.0
        %3865 = vmatpush2.msra.mxu0 0.0
        %3866 = vmatprep.subr.mxu0 0.0
        %3867 = vmatpush2.msra.mxu0 0.0
        %3868 = vmatprep.mubr.f32.mxu0 0.0
        %v3869 = vand.u32 %v3791, 4294901760
        %v3870 = vsub.f32 %v3791, %v3869
        %v3871 = vand.u32 %v3870, 4294901760
        %v3872 = vsub.f32 %v3870, %v3871
        %v3873 = vand.u32 %v3872, 4294901760
        %3874 = vmatmul.mubr.f32.gmra.mxu0 %v3873
        %v3875 = vpop.f32.mrf.mxu0
        %v3876 = vadd.f32 0.0, %v3875
        %v3877 = vpop.f32.mrf.mxu0
        %3878 = vmatprep.mubr.f32.mxu0 0.0
        %v3879 = vand.u32 %v3794, 4294901760
        %v3880 = vsub.f32 %v3794, %v3879
        %v3881 = vand.u32 %v3880, 4294901760
        %v3882 = vsub.f32 %v3880, %v3881
        %v3883 = vand.u32 %v3882, 4294901760
        %3884 = vmatmul.mubr.f32.gmra.mxu0 %v3883
        %v3885 = vpop.f32.mrf.mxu0
        %v3886 = vadd.f32 0.0, %v3885
        %v3887 = vpop.f32.mrf.mxu0
        %3888 = vmatprep.mubr.f32.mxu0 0.0
        %v3889 = vand.u32 %v3797, 4294901760
        %v3890 = vsub.f32 %v3797, %v3889
        %v3891 = vand.u32 %v3890, 4294901760
        %v3892 = vsub.f32 %v3890, %v3891
        %v3893 = vand.u32 %v3892, 4294901760
        %3894 = vmatmul.mubr.f32.gmra.mxu0 %v3893
        %v3895 = vpop.f32.mrf.mxu0
        %v3896 = vadd.f32 0.0, %v3895
        %v3897 = vpop.f32.mrf.mxu0
        %3898 = vmatprep.mubr.f32.mxu0 0.0
        %v3899 = vand.u32 %v3800, 4294901760
        %v3900 = vsub.f32 %v3800, %v3899
        %v3901 = vand.u32 %v3900, 4294901760
        %v3902 = vsub.f32 %v3900, %v3901
        %v3903 = vand.u32 %v3902, 4294901760
        %3904 = vmatmul.mubr.f32.gmra.mxu0 %v3903
        %v3905 = vpop.f32.mrf.mxu0
        %v3906 = vadd.f32 0.0, %v3905
        %v3907 = vpop.f32.mrf.mxu0
        %3908 = vdwg.mxu0
        %3909 = vmatprep.subr.mxu0 0.0
        %3910 = vmatpush1.msra.mxu0 0.0
        %3911 = vmatprep.subr.mxu0 0.0
        %3912 = vmatpush1.msra.mxu0 0.0
        %3913 = vmatprep.subr.mxu0 0.0
        %3914 = vmatpush1.msra.mxu0 0.0
        %3915 = vmatprep.subr.mxu0 0.0
        %3916 = vmatpush1.msra.mxu0 0.0
        %3917 = vmatprep.subr.mxu0 0.0
        %3918 = vmatpush1.msra.mxu0 0.0
        %3919 = vmatprep.subr.mxu0 0.0
        %3920 = vmatpush1.msra.mxu0 0.0
        %3921 = vmatprep.subr.mxu0 0.0
        %3922 = vmatpush1.msra.mxu0 0.0
        %3923 = vmatprep.subr.mxu0 0.0
        %3924 = vmatpush1.msra.mxu0 0.0
        %3925 = vmatprep.subr.mxu0 0.0
        %3926 = vmatpush1.msra.mxu0 0.0
        %3927 = vmatprep.subr.mxu0 0.0
        %3928 = vmatpush1.msra.mxu0 0.0
        %3929 = vmatprep.subr.mxu0 0.0
        %3930 = vmatpush1.msra.mxu0 0.0
        %3931 = vmatprep.subr.mxu0 0.0
        %3932 = vmatpush1.msra.mxu0 0.0
        %3933 = vmatprep.subr.mxu0 0.0
        %3934 = vmatpush1.msra.mxu0 0.0
        %3935 = vmatprep.subr.mxu0 0.0
        %3936 = vmatpush1.msra.mxu0 0.0
        %3937 = vmatprep.subr.mxu0 0.0
        %v3938 = vand.u32 %v3784, 4294901760
        %v3939 = vsub.f32 %v3784, %v3938
        %v3940 = vand.u32 %v3939, 4294901760
        %v3941 = vsub.f32 %v3939, %v3940
        %v3942 = vand.u32 %v3941, 4294901760
        %3943 = vmatpush1.msra.mxu0 %v3942
        %3944 = vmatprep.subr.mxu0 0.0
        %v3945 = vand.u32 %v3783, 4294901760
        %v3946 = vsub.f32 %v3783, %v3945
        %v3947 = vand.u32 %v3946, 4294901760
        %v3948 = vsub.f32 %v3946, %v3947
        %v3949 = vand.u32 %v3948, 4294901760
        %3950 = vmatpush1.msra.mxu0 %v3949
        %3951 = vmatprep.subr.mxu0 0.0
        %3952 = vmatpush2.msra.mxu0 0.0
        %3953 = vmatprep.subr.mxu0 0.0
        %3954 = vmatpush2.msra.mxu0 0.0
        %3955 = vmatprep.subr.mxu0 0.0
        %3956 = vmatpush2.msra.mxu0 0.0
        %3957 = vmatprep.subr.mxu0 0.0
        %3958 = vmatpush2.msra.mxu0 0.0
        %3959 = vmatprep.subr.mxu0 0.0
        %3960 = vmatpush2.msra.mxu0 0.0
        %3961 = vmatprep.subr.mxu0 0.0
        %3962 = vmatpush2.msra.mxu0 0.0
        %3963 = vmatprep.subr.mxu0 0.0
        %3964 = vmatpush2.msra.mxu0 0.0
        %3965 = vmatprep.subr.mxu0 0.0
        %3966 = vmatpush2.msra.mxu0 0.0
        %3967 = vmatprep.subr.mxu0 0.0
        %3968 = vmatpush2.msra.mxu0 0.0
        %3969 = vmatprep.subr.mxu0 0.0
        %3970 = vmatpush2.msra.mxu0 0.0
        %3971 = vmatprep.subr.mxu0 0.0
        %3972 = vmatpush2.msra.mxu0 0.0
        %3973 = vmatprep.subr.mxu0 0.0
        %3974 = vmatpush2.msra.mxu0 0.0
        %3975 = vmatprep.subr.mxu0 0.0
        %3976 = vmatpush2.msra.mxu0 0.0
        %3977 = vmatprep.subr.mxu0 0.0
        %3978 = vmatpush2.msra.mxu0 0.0
        %3979 = vmatprep.subr.mxu0 0.0
        %3980 = vmatpush2.msra.mxu0 0.0
        %3981 = vmatprep.subr.mxu0 0.0
        %3982 = vmatpush2.msra.mxu0 0.0
        %3983 = vmatprep.mubr.f32.mxu0 0.0
        %v3984 = vand.u32 %v3791, 4294901760
        %3985 = vmatmul.mubr.f32.gmra.mxu0 %v3984
        %v3986 = vpop.f32.mrf.mxu0
        %v3987 = vadd.f32 %v3876, %v3986
        %v3988 = vpop.f32.mrf.mxu0
        %3989 = vmatprep.mubr.f32.mxu0 0.0
        %v3990 = vand.u32 %v3794, 4294901760
        %3991 = vmatmul.mubr.f32.gmra.mxu0 %v3990
        %v3992 = vpop.f32.mrf.mxu0
        %v3993 = vadd.f32 %v3886, %v3992
        %v3994 = vpop.f32.mrf.mxu0
        %3995 = vmatprep.mubr.f32.mxu0 0.0
        %v3996 = vand.u32 %v3797, 4294901760
        %3997 = vmatmul.mubr.f32.gmra.mxu0 %v3996
        %v3998 = vpop.f32.mrf.mxu0
        %v3999 = vadd.f32 %v3896, %v3998
        %v4000 = vpop.f32.mrf.mxu0
        %4001 = vmatprep.mubr.f32.mxu0 0.0
        %v4002 = vand.u32 %v3800, 4294901760
        %4003 = vmatmul.mubr.f32.gmra.mxu0 %v4002
        %v4004 = vpop.f32.mrf.mxu0
        %v4005 = vadd.f32 %v3906, %v4004
        %v4006 = vpop.f32.mrf.mxu0
        %4007 = vdwg.mxu0
        %4008 = vmatprep.subr.mxu0 0.0
        %4009 = vmatpush1.msra.mxu0 0.0
        %4010 = vmatprep.subr.mxu0 0.0
        %4011 = vmatpush1.msra.mxu0 0.0
        %4012 = vmatprep.subr.mxu0 0.0
        %4013 = vmatpush1.msra.mxu0 0.0
        %4014 = vmatprep.subr.mxu0 0.0
        %4015 = vmatpush1.msra.mxu0 0.0
        %4016 = vmatprep.subr.mxu0 0.0
        %4017 = vmatpush1.msra.mxu0 0.0
        %4018 = vmatprep.subr.mxu0 0.0
        %4019 = vmatpush1.msra.mxu0 0.0
        %4020 = vmatprep.subr.mxu0 0.0
        %4021 = vmatpush1.msra.mxu0 0.0
        %4022 = vmatprep.subr.mxu0 0.0
        %4023 = vmatpush1.msra.mxu0 0.0
        %4024 = vmatprep.subr.mxu0 0.0
        %4025 = vmatpush1.msra.mxu0 0.0
        %4026 = vmatprep.subr.mxu0 0.0
        %4027 = vmatpush1.msra.mxu0 0.0
        %4028 = vmatprep.subr.mxu0 0.0
        %4029 = vmatpush1.msra.mxu0 0.0
        %4030 = vmatprep.subr.mxu0 0.0
        %4031 = vmatpush1.msra.mxu0 0.0
        %4032 = vmatprep.subr.mxu0 0.0
        %4033 = vmatpush1.msra.mxu0 0.0
        %4034 = vmatprep.subr.mxu0 0.0
        %4035 = vmatpush1.msra.mxu0 0.0
        %4036 = vmatprep.subr.mxu0 0.0
        %v4037 = vand.u32 %v3784, 4294901760
        %v4038 = vsub.f32 %v3784, %v4037
        %4039 = vmatpush1.msra.mxu0 %v4038
        %4040 = vmatprep.subr.mxu0 0.0
        %v4041 = vand.u32 %v3783, 4294901760
        %v4042 = vsub.f32 %v3783, %v4041
        %4043 = vmatpush1.msra.mxu0 %v4042
        %4044 = vmatprep.subr.mxu0 0.0
        %4045 = vmatpush2.msra.mxu0 0.0
        %4046 = vmatprep.subr.mxu0 0.0
        %4047 = vmatpush2.msra.mxu0 0.0
        %4048 = vmatprep.subr.mxu0 0.0
        %4049 = vmatpush2.msra.mxu0 0.0
        %4050 = vmatprep.subr.mxu0 0.0
        %4051 = vmatpush2.msra.mxu0 0.0
        %4052 = vmatprep.subr.mxu0 0.0
        %4053 = vmatpush2.msra.mxu0 0.0
        %4054 = vmatprep.subr.mxu0 0.0
        %4055 = vmatpush2.msra.mxu0 0.0
        %4056 = vmatprep.subr.mxu0 0.0
        %4057 = vmatpush2.msra.mxu0 0.0
        %4058 = vmatprep.subr.mxu0 0.0
        %4059 = vmatpush2.msra.mxu0 0.0
        %4060 = vmatprep.subr.mxu0 0.0
        %4061 = vmatpush2.msra.mxu0 0.0
        %4062 = vmatprep.subr.mxu0 0.0
        %4063 = vmatpush2.msra.mxu0 0.0
        %4064 = vmatprep.subr.mxu0 0.0
        %4065 = vmatpush2.msra.mxu0 0.0
        %4066 = vmatprep.subr.mxu0 0.0
        %4067 = vmatpush2.msra.mxu0 0.0
        %4068 = vmatprep.subr.mxu0 0.0
        %4069 = vmatpush2.msra.mxu0 0.0
        %4070 = vmatprep.subr.mxu0 0.0
        %4071 = vmatpush2.msra.mxu0 0.0
        %4072 = vmatprep.subr.mxu0 0.0
        %4073 = vmatpush2.msra.mxu0 0.0
        %4074 = vmatprep.subr.mxu0 0.0
        %4075 = vmatpush2.msra.mxu0 0.0
        %4076 = vmatprep.mubr.f32.mxu0 0.0
        %v4077 = vand.u32 %v3791, 4294901760
        %v4078 = vsub.f32 %v3791, %v4077
        %4079 = vmatmul.mubr.f32.gmra.mxu0 %v4078
        %v4080 = vpop.f32.mrf.mxu0
        %v4081 = vadd.f32 %v3987, %v4080
        %v4082 = vpop.f32.mrf.mxu0
        %4083 = vmatprep.mubr.f32.mxu0 0.0
        %v4084 = vand.u32 %v3794, 4294901760
        %v4085 = vsub.f32 %v3794, %v4084
        %4086 = vmatmul.mubr.f32.gmra.mxu0 %v4085
        %v4087 = vpop.f32.mrf.mxu0
        %v4088 = vadd.f32 %v3993, %v4087
        %v4089 = vpop.f32.mrf.mxu0
        %4090 = vmatprep.mubr.f32.mxu0 0.0
        %v4091 = vand.u32 %v3797, 4294901760
        %v4092 = vsub.f32 %v3797, %v4091
        %4093 = vmatmul.mubr.f32.gmra.mxu0 %v4092
        %v4094 = vpop.f32.mrf.mxu0
        %v4095 = vadd.f32 %v3999, %v4094
        %v4096 = vpop.f32.mrf.mxu0
        %4097 = vmatprep.mubr.f32.mxu0 0.0
        %v4098 = vand.u32 %v3800, 4294901760
        %v4099 = vsub.f32 %v3800, %v4098
        %4100 = vmatmul.mubr.f32.gmra.mxu0 %v4099
        %v4101 = vpop.f32.mrf.mxu0
        %v4102 = vadd.f32 %v4005, %v4101
        %v4103 = vpop.f32.mrf.mxu0
        %4104 = vdwg.mxu0
        %4105 = vmatprep.subr.mxu0 0.0
        %4106 = vmatpush1.msra.mxu0 0.0
        %4107 = vmatprep.subr.mxu0 0.0
        %4108 = vmatpush1.msra.mxu0 0.0
        %4109 = vmatprep.subr.mxu0 0.0
        %4110 = vmatpush1.msra.mxu0 0.0
        %4111 = vmatprep.subr.mxu0 0.0
        %4112 = vmatpush1.msra.mxu0 0.0
        %4113 = vmatprep.subr.mxu0 0.0
        %4114 = vmatpush1.msra.mxu0 0.0
        %4115 = vmatprep.subr.mxu0 0.0
        %4116 = vmatpush1.msra.mxu0 0.0
        %4117 = vmatprep.subr.mxu0 0.0
        %4118 = vmatpush1.msra.mxu0 0.0
        %4119 = vmatprep.subr.mxu0 0.0
        %4120 = vmatpush1.msra.mxu0 0.0
        %4121 = vmatprep.subr.mxu0 0.0
        %4122 = vmatpush1.msra.mxu0 0.0
        %4123 = vmatprep.subr.mxu0 0.0
        %4124 = vmatpush1.msra.mxu0 0.0
        %4125 = vmatprep.subr.mxu0 0.0
        %4126 = vmatpush1.msra.mxu0 0.0
        %4127 = vmatprep.subr.mxu0 0.0
        %4128 = vmatpush1.msra.mxu0 0.0
        %4129 = vmatprep.subr.mxu0 0.0
        %4130 = vmatpush1.msra.mxu0 0.0
        %4131 = vmatprep.subr.mxu0 0.0
        %4132 = vmatpush1.msra.mxu0 0.0
        %4133 = vmatprep.subr.mxu0 0.0
        %v4134 = vand.u32 %v3784, 4294901760
        %4135 = vmatpush1.msra.mxu0 %v4134
        %4136 = vmatprep.subr.mxu0 0.0
        %v4137 = vand.u32 %v3783, 4294901760
        %4138 = vmatpush1.msra.mxu0 %v4137
        %4139 = vmatprep.subr.mxu0 0.0
        %4140 = vmatpush2.msra.mxu0 0.0
        %4141 = vmatprep.subr.mxu0 0.0
        %4142 = vmatpush2.msra.mxu0 0.0
        %4143 = vmatprep.subr.mxu0 0.0
        %4144 = vmatpush2.msra.mxu0 0.0
        %4145 = vmatprep.subr.mxu0 0.0
        %4146 = vmatpush2.msra.mxu0 0.0
        %4147 = vmatprep.subr.mxu0 0.0
        %4148 = vmatpush2.msra.mxu0 0.0
        %4149 = vmatprep.subr.mxu0 0.0
        %4150 = vmatpush2.msra.mxu0 0.0
        %4151 = vmatprep.subr.mxu0 0.0
        %4152 = vmatpush2.msra.mxu0 0.0
        %4153 = vmatprep.subr.mxu0 0.0
        %4154 = vmatpush2.msra.mxu0 0.0
        %4155 = vmatprep.subr.mxu0 0.0
        %4156 = vmatpush2.msra.mxu0 0.0
        %4157 = vmatprep.subr.mxu0 0.0
        %4158 = vmatpush2.msra.mxu0 0.0
        %4159 = vmatprep.subr.mxu0 0.0
        %4160 = vmatpush2.msra.mxu0 0.0
        %4161 = vmatprep.subr.mxu0 0.0
        %4162 = vmatpush2.msra.mxu0 0.0
        %4163 = vmatprep.subr.mxu0 0.0
        %4164 = vmatpush2.msra.mxu0 0.0
        %4165 = vmatprep.subr.mxu0 0.0
        %4166 = vmatpush2.msra.mxu0 0.0
        %4167 = vmatprep.subr.mxu0 0.0
        %4168 = vmatpush2.msra.mxu0 0.0
        %4169 = vmatprep.subr.mxu0 0.0
        %4170 = vmatpush2.msra.mxu0 0.0
        %4171 = vmatprep.mubr.f32.mxu0 0.0
        %v4172 = vand.u32 %v3791, 4294901760
        %v4173 = vsub.f32 %v3791, %v4172
        %v4174 = vand.u32 %v4173, 4294901760
        %4175 = vmatmul.mubr.f32.gmra.mxu0 %v4174
        %v4176 = vpop.f32.mrf.mxu0
        %v4177 = vadd.f32 %v4081, %v4176
        %v4178 = vpop.f32.mrf.mxu0
        %4179 = vmatprep.mubr.f32.mxu0 0.0
        %v4180 = vand.u32 %v3794, 4294901760
        %v4181 = vsub.f32 %v3794, %v4180
        %v4182 = vand.u32 %v4181, 4294901760
        %4183 = vmatmul.mubr.f32.gmra.mxu0 %v4182
        %v4184 = vpop.f32.mrf.mxu0
        %v4185 = vadd.f32 %v4088, %v4184
        %v4186 = vpop.f32.mrf.mxu0
        %4187 = vmatprep.mubr.f32.mxu0 0.0
        %v4188 = vand.u32 %v3797, 4294901760
        %v4189 = vsub.f32 %v3797, %v4188
        %v4190 = vand.u32 %v4189, 4294901760
        %4191 = vmatmul.mubr.f32.gmra.mxu0 %v4190
        %v4192 = vpop.f32.mrf.mxu0
        %v4193 = vadd.f32 %v4095, %v4192
        %v4194 = vpop.f32.mrf.mxu0
        %4195 = vmatprep.mubr.f32.mxu0 0.0
        %v4196 = vand.u32 %v3800, 4294901760
        %v4197 = vsub.f32 %v3800, %v4196
        %v4198 = vand.u32 %v4197, 4294901760
        %4199 = vmatmul.mubr.f32.gmra.mxu0 %v4198
        %v4200 = vpop.f32.mrf.mxu0
        %v4201 = vadd.f32 %v4102, %v4200
        %v4202 = vpop.f32.mrf.mxu0
        %4203 = vdwg.mxu0
        %4204 = vmatprep.subr.mxu0 0.0
        %4205 = vmatpush1.msra.mxu0 0.0
        %4206 = vmatprep.subr.mxu0 0.0
        %4207 = vmatpush1.msra.mxu0 0.0
        %4208 = vmatprep.subr.mxu0 0.0
        %4209 = vmatpush1.msra.mxu0 0.0
        %4210 = vmatprep.subr.mxu0 0.0
        %4211 = vmatpush1.msra.mxu0 0.0
        %4212 = vmatprep.subr.mxu0 0.0
        %4213 = vmatpush1.msra.mxu0 0.0
        %4214 = vmatprep.subr.mxu0 0.0
        %4215 = vmatpush1.msra.mxu0 0.0
        %4216 = vmatprep.subr.mxu0 0.0
        %4217 = vmatpush1.msra.mxu0 0.0
        %4218 = vmatprep.subr.mxu0 0.0
        %4219 = vmatpush1.msra.mxu0 0.0
        %4220 = vmatprep.subr.mxu0 0.0
        %4221 = vmatpush1.msra.mxu0 0.0
        %4222 = vmatprep.subr.mxu0 0.0
        %4223 = vmatpush1.msra.mxu0 0.0
        %4224 = vmatprep.subr.mxu0 0.0
        %4225 = vmatpush1.msra.mxu0 0.0
        %4226 = vmatprep.subr.mxu0 0.0
        %4227 = vmatpush1.msra.mxu0 0.0
        %4228 = vmatprep.subr.mxu0 0.0
        %4229 = vmatpush1.msra.mxu0 0.0
        %4230 = vmatprep.subr.mxu0 0.0
        %4231 = vmatpush1.msra.mxu0 0.0
        %4232 = vmatprep.subr.mxu0 0.0
        %v4233 = vand.u32 %v3784, 4294901760
        %v4234 = vsub.f32 %v3784, %v4233
        %v4235 = vand.u32 %v4234, 4294901760
        %4236 = vmatpush1.msra.mxu0 %v4235
        %4237 = vmatprep.subr.mxu0 0.0
        %v4238 = vand.u32 %v3783, 4294901760
        %v4239 = vsub.f32 %v3783, %v4238
        %v4240 = vand.u32 %v4239, 4294901760
        %4241 = vmatpush1.msra.mxu0 %v4240
        %4242 = vmatprep.subr.mxu0 0.0
        %4243 = vmatpush2.msra.mxu0 0.0
        %4244 = vmatprep.subr.mxu0 0.0
        %4245 = vmatpush2.msra.mxu0 0.0
        %4246 = vmatprep.subr.mxu0 0.0
        %4247 = vmatpush2.msra.mxu0 0.0
        %4248 = vmatprep.subr.mxu0 0.0
        %4249 = vmatpush2.msra.mxu0 0.0
        %4250 = vmatprep.subr.mxu0 0.0
        %4251 = vmatpush2.msra.mxu0 0.0
        %4252 = vmatprep.subr.mxu0 0.0
        %4253 = vmatpush2.msra.mxu0 0.0
        %4254 = vmatprep.subr.mxu0 0.0
        %4255 = vmatpush2.msra.mxu0 0.0
        %4256 = vmatprep.subr.mxu0 0.0
        %4257 = vmatpush2.msra.mxu0 0.0
        %4258 = vmatprep.subr.mxu0 0.0
        %4259 = vmatpush2.msra.mxu0 0.0
        %4260 = vmatprep.subr.mxu0 0.0
        %4261 = vmatpush2.msra.mxu0 0.0
        %4262 = vmatprep.subr.mxu0 0.0
        %4263 = vmatpush2.msra.mxu0 0.0
        %4264 = vmatprep.subr.mxu0 0.0
        %4265 = vmatpush2.msra.mxu0 0.0
        %4266 = vmatprep.subr.mxu0 0.0
        %4267 = vmatpush2.msra.mxu0 0.0
        %4268 = vmatprep.subr.mxu0 0.0
        %4269 = vmatpush2.msra.mxu0 0.0
        %4270 = vmatprep.subr.mxu0 0.0
        %4271 = vmatpush2.msra.mxu0 0.0
        %4272 = vmatprep.subr.mxu0 0.0
        %4273 = vmatpush2.msra.mxu0 0.0
        %4274 = vmatprep.mubr.f32.mxu0 0.0
        %v4275 = vand.u32 %v3791, 4294901760
        %4276 = vmatmul.mubr.f32.gmra.mxu0 %v4275
        %v4277 = vpop.f32.mrf.mxu0
        %v4278 = vadd.f32 %v4177, %v4277
        %v4279 = vpop.f32.mrf.mxu0
        %4280 = vmatprep.mubr.f32.mxu0 0.0
        %v4281 = vand.u32 %v3794, 4294901760
        %4282 = vmatmul.mubr.f32.gmra.mxu0 %v4281
        %v4283 = vpop.f32.mrf.mxu0
        %v4284 = vadd.f32 %v4185, %v4283
        %v4285 = vpop.f32.mrf.mxu0
        %4286 = vmatprep.mubr.f32.mxu0 0.0
        %v4287 = vand.u32 %v3797, 4294901760
        %4288 = vmatmul.mubr.f32.gmra.mxu0 %v4287
        %v4289 = vpop.f32.mrf.mxu0
        %v4290 = vadd.f32 %v4193, %v4289
        %v4291 = vpop.f32.mrf.mxu0
        %4292 = vmatprep.mubr.f32.mxu0 0.0
        %v4293 = vand.u32 %v3800, 4294901760
        %4294 = vmatmul.mubr.f32.gmra.mxu0 %v4293
        %v4295 = vpop.f32.mrf.mxu0
        %v4296 = vadd.f32 %v4201, %v4295
        %v4297 = vpop.f32.mrf.mxu0
        %4298 = vdwg.mxu0
        %4299 = vmatprep.subr.mxu0 0.0
        %4300 = vmatpush1.msra.mxu0 0.0
        %4301 = vmatprep.subr.mxu0 0.0
        %4302 = vmatpush1.msra.mxu0 0.0
        %4303 = vmatprep.subr.mxu0 0.0
        %4304 = vmatpush1.msra.mxu0 0.0
        %4305 = vmatprep.subr.mxu0 0.0
        %4306 = vmatpush1.msra.mxu0 0.0
        %4307 = vmatprep.subr.mxu0 0.0
        %4308 = vmatpush1.msra.mxu0 0.0
        %4309 = vmatprep.subr.mxu0 0.0
        %4310 = vmatpush1.msra.mxu0 0.0
        %4311 = vmatprep.subr.mxu0 0.0
        %4312 = vmatpush1.msra.mxu0 0.0
        %4313 = vmatprep.subr.mxu0 0.0
        %4314 = vmatpush1.msra.mxu0 0.0
        %4315 = vmatprep.subr.mxu0 0.0
        %4316 = vmatpush1.msra.mxu0 0.0
        %4317 = vmatprep.subr.mxu0 0.0
        %4318 = vmatpush1.msra.mxu0 0.0
        %4319 = vmatprep.subr.mxu0 0.0
        %4320 = vmatpush1.msra.mxu0 0.0
        %4321 = vmatprep.subr.mxu0 0.0
        %4322 = vmatpush1.msra.mxu0 0.0
        %4323 = vmatprep.subr.mxu0 0.0
        %4324 = vmatpush1.msra.mxu0 0.0
        %4325 = vmatprep.subr.mxu0 0.0
        %4326 = vmatpush1.msra.mxu0 0.0
        %4327 = vmatprep.subr.mxu0 0.0
        %v4328 = vand.u32 %v3784, 4294901760
        %4329 = vmatpush1.msra.mxu0 %v4328
        %4330 = vmatprep.subr.mxu0 0.0
        %v4331 = vand.u32 %v3783, 4294901760
        %4332 = vmatpush1.msra.mxu0 %v4331
        %4333 = vmatprep.subr.mxu0 0.0
        %4334 = vmatpush2.msra.mxu0 0.0
        %4335 = vmatprep.subr.mxu0 0.0
        %4336 = vmatpush2.msra.mxu0 0.0
        %4337 = vmatprep.subr.mxu0 0.0
        %4338 = vmatpush2.msra.mxu0 0.0
        %4339 = vmatprep.subr.mxu0 0.0
        %4340 = vmatpush2.msra.mxu0 0.0
        %4341 = vmatprep.subr.mxu0 0.0
        %4342 = vmatpush2.msra.mxu0 0.0
        %4343 = vmatprep.subr.mxu0 0.0
        %4344 = vmatpush2.msra.mxu0 0.0
        %4345 = vmatprep.subr.mxu0 0.0
        %4346 = vmatpush2.msra.mxu0 0.0
        %4347 = vmatprep.subr.mxu0 0.0
        %4348 = vmatpush2.msra.mxu0 0.0
        %4349 = vmatprep.subr.mxu0 0.0
        %4350 = vmatpush2.msra.mxu0 0.0
        %4351 = vmatprep.subr.mxu0 0.0
        %4352 = vmatpush2.msra.mxu0 0.0
        %4353 = vmatprep.subr.mxu0 0.0
        %4354 = vmatpush2.msra.mxu0 0.0
        %4355 = vmatprep.subr.mxu0 0.0
        %4356 = vmatpush2.msra.mxu0 0.0
        %4357 = vmatprep.subr.mxu0 0.0
        %4358 = vmatpush2.msra.mxu0 0.0
        %4359 = vmatprep.subr.mxu0 0.0
        %4360 = vmatpush2.msra.mxu0 0.0
        %4361 = vmatprep.subr.mxu0 0.0
        %4362 = vmatpush2.msra.mxu0 0.0
        %4363 = vmatprep.subr.mxu0 0.0
        %4364 = vmatpush2.msra.mxu0 0.0
        %4365 = vmatprep.mubr.f32.mxu0 0.0
        %v4366 = vand.u32 %v3791, 4294901760
        %4367 = vmatmul.mubr.f32.gmra.mxu0 %v4366
        %v4368 = vpop.f32.mrf.mxu0
        %v4369 = vadd.f32 %v4278, %v4368
        %v4370 = vpop.f32.mrf.mxu0
        %4371 = vmatprep.mubr.f32.mxu0 0.0
        %v4372 = vand.u32 %v3794, 4294901760
        %4373 = vmatmul.mubr.f32.gmra.mxu0 %v4372
        %v4374 = vpop.f32.mrf.mxu0
        %v4375 = vadd.f32 %v4284, %v4374
        %v4376 = vpop.f32.mrf.mxu0
        %4377 = vmatprep.mubr.f32.mxu0 0.0
        %v4378 = vand.u32 %v3797, 4294901760
        %4379 = vmatmul.mubr.f32.gmra.mxu0 %v4378
        %v4380 = vpop.f32.mrf.mxu0
        %v4381 = vadd.f32 %v4290, %v4380
        %v4382 = vpop.f32.mrf.mxu0
        %4383 = vmatprep.mubr.f32.mxu0 0.0
        %v4384 = vand.u32 %v3800, 4294901760
        %4385 = vmatmul.mubr.f32.gmra.mxu0 %v4384
        %v4386 = vpop.f32.mrf.mxu0
        %v4387 = vadd.f32 %v4296, %v4386
        %v4388 = vpop.f32.mrf.mxu0
        %4389 = vdwg.mxu0
        %v4391 = vsel %vm174, %v2012, 0
        %v4394 = vsel %vm174, %v2013, 0
        %v4397 = vsel %vm174, %v2014, 0
        %v4400 = vsel %vm174, %v2015, 0
        %4402 = vmatprep.subr.mxu0 0.0
        %4403 = vmatpush1.msra.mxu0 0.0
        %4404 = vmatprep.subr.mxu0 0.0
        %4405 = vmatpush1.msra.mxu0 0.0
        %4406 = vmatprep.subr.mxu0 0.0
        %4407 = vmatpush1.msra.mxu0 0.0
        %4408 = vmatprep.subr.mxu0 0.0
        %4409 = vmatpush1.msra.mxu0 0.0
        %4410 = vmatprep.subr.mxu0 0.0
        %4411 = vmatpush1.msra.mxu0 0.0
        %4412 = vmatprep.subr.mxu0 0.0
        %4413 = vmatpush1.msra.mxu0 0.0
        %4414 = vmatprep.subr.mxu0 0.0
        %4415 = vmatpush1.msra.mxu0 0.0
        %4416 = vmatprep.subr.mxu0 0.0
        %4417 = vmatpush1.msra.mxu0 0.0
        %4418 = vmatprep.subr.mxu0 0.0
        %4419 = vmatpush1.msra.mxu0 0.0
        %4420 = vmatprep.subr.mxu0 0.0
        %4421 = vmatpush1.msra.mxu0 0.0
        %4422 = vmatprep.subr.mxu0 0.0
        %4423 = vmatpush1.msra.mxu0 0.0
        %4424 = vmatprep.subr.mxu0 0.0
        %4425 = vmatpush1.msra.mxu0 0.0
        %4426 = vmatprep.subr.mxu0 0.0
        %4427 = vmatpush1.msra.mxu0 0.0
        %4428 = vmatprep.subr.mxu0 0.0
        %4429 = vmatpush1.msra.mxu0 0.0
        %4430 = vmatprep.subr.mxu0 0.0
        %v4431 = vand.u32 %v2011, 4294901760
        %4432 = vmatpush1.msra.mxu0 %v4431
        %4433 = vmatprep.subr.mxu0 0.0
        %v4434 = vand.u32 %v2010, 4294901760
        %4435 = vmatpush1.msra.mxu0 %v4434
        %4436 = vmatprep.subr.mxu0 0.0
        %4437 = vmatpush2.msra.mxu0 0.0
        %4438 = vmatprep.subr.mxu0 0.0
        %4439 = vmatpush2.msra.mxu0 0.0
        %4440 = vmatprep.subr.mxu0 0.0
        %4441 = vmatpush2.msra.mxu0 0.0
        %4442 = vmatprep.subr.mxu0 0.0
        %4443 = vmatpush2.msra.mxu0 0.0
        %4444 = vmatprep.subr.mxu0 0.0
        %4445 = vmatpush2.msra.mxu0 0.0
        %4446 = vmatprep.subr.mxu0 0.0
        %4447 = vmatpush2.msra.mxu0 0.0
        %4448 = vmatprep.subr.mxu0 0.0
        %4449 = vmatpush2.msra.mxu0 0.0
        %4450 = vmatprep.subr.mxu0 0.0
        %4451 = vmatpush2.msra.mxu0 0.0
        %4452 = vmatprep.subr.mxu0 0.0
        %4453 = vmatpush2.msra.mxu0 0.0
        %4454 = vmatprep.subr.mxu0 0.0
        %4455 = vmatpush2.msra.mxu0 0.0
        %4456 = vmatprep.subr.mxu0 0.0
        %4457 = vmatpush2.msra.mxu0 0.0
        %4458 = vmatprep.subr.mxu0 0.0
        %4459 = vmatpush2.msra.mxu0 0.0
        %4460 = vmatprep.subr.mxu0 0.0
        %4461 = vmatpush2.msra.mxu0 0.0
        %4462 = vmatprep.subr.mxu0 0.0
        %4463 = vmatpush2.msra.mxu0 0.0
        %4464 = vmatprep.subr.mxu0 0.0
        %4465 = vmatpush2.msra.mxu0 0.0
        %4466 = vmatprep.subr.mxu0 0.0
        %4467 = vmatpush2.msra.mxu0 0.0
        %4468 = vmatprep.mubr.f32.mxu0 0.0
        %v4469 = vand.u32 %v4391, 4294901760
        %v4470 = vsub.f32 %v4391, %v4469
        %v4471 = vand.u32 %v4470, 4294901760
        %v4472 = vsub.f32 %v4470, %v4471
        %v4473 = vand.u32 %v4472, 4294901760
        %4474 = vmatmul.mubr.f32.gmra.mxu0 %v4473
        %v4475 = vpop.f32.mrf.mxu0
        %v4476 = vadd.f32 %v4369, %v4475
        %v4477 = vpop.f32.mrf.mxu0
        %4478 = vmatprep.mubr.f32.mxu0 0.0
        %v4479 = vand.u32 %v4394, 4294901760
        %v4480 = vsub.f32 %v4394, %v4479
        %v4481 = vand.u32 %v4480, 4294901760
        %v4482 = vsub.f32 %v4480, %v4481
        %v4483 = vand.u32 %v4482, 4294901760
        %4484 = vmatmul.mubr.f32.gmra.mxu0 %v4483
        %v4485 = vpop.f32.mrf.mxu0
        %v4486 = vadd.f32 %v4375, %v4485
        %v4487 = vpop.f32.mrf.mxu0
        %4488 = vmatprep.mubr.f32.mxu0 0.0
        %v4489 = vand.u32 %v4397, 4294901760
        %v4490 = vsub.f32 %v4397, %v4489
        %v4491 = vand.u32 %v4490, 4294901760
        %v4492 = vsub.f32 %v4490, %v4491
        %v4493 = vand.u32 %v4492, 4294901760
        %4494 = vmatmul.mubr.f32.gmra.mxu0 %v4493
        %v4495 = vpop.f32.mrf.mxu0
        %v4496 = vadd.f32 %v4381, %v4495
        %v4497 = vpop.f32.mrf.mxu0
        %4498 = vmatprep.mubr.f32.mxu0 0.0
        %v4499 = vand.u32 %v4400, 4294901760
        %v4500 = vsub.f32 %v4400, %v4499
        %v4501 = vand.u32 %v4500, 4294901760
        %v4502 = vsub.f32 %v4500, %v4501
        %v4503 = vand.u32 %v4502, 4294901760
        %4504 = vmatmul.mubr.f32.gmra.mxu0 %v4503
        %v4505 = vpop.f32.mrf.mxu0
        %v4506 = vadd.f32 %v4387, %v4505
        %v4507 = vpop.f32.mrf.mxu0
        %4508 = vdwg.mxu0
        %4509 = vmatprep.subr.mxu0 0.0
        %4510 = vmatpush1.msra.mxu0 0.0
        %4511 = vmatprep.subr.mxu0 0.0
        %4512 = vmatpush1.msra.mxu0 0.0
        %4513 = vmatprep.subr.mxu0 0.0
        %4514 = vmatpush1.msra.mxu0 0.0
        %4515 = vmatprep.subr.mxu0 0.0
        %4516 = vmatpush1.msra.mxu0 0.0
        %4517 = vmatprep.subr.mxu0 0.0
        %4518 = vmatpush1.msra.mxu0 0.0
        %4519 = vmatprep.subr.mxu0 0.0
        %4520 = vmatpush1.msra.mxu0 0.0
        %4521 = vmatprep.subr.mxu0 0.0
        %4522 = vmatpush1.msra.mxu0 0.0
        %4523 = vmatprep.subr.mxu0 0.0
        %4524 = vmatpush1.msra.mxu0 0.0
        %4525 = vmatprep.subr.mxu0 0.0
        %4526 = vmatpush1.msra.mxu0 0.0
        %4527 = vmatprep.subr.mxu0 0.0
        %4528 = vmatpush1.msra.mxu0 0.0
        %4529 = vmatprep.subr.mxu0 0.0
        %4530 = vmatpush1.msra.mxu0 0.0
        %4531 = vmatprep.subr.mxu0 0.0
        %4532 = vmatpush1.msra.mxu0 0.0
        %4533 = vmatprep.subr.mxu0 0.0
        %4534 = vmatpush1.msra.mxu0 0.0
        %4535 = vmatprep.subr.mxu0 0.0
        %4536 = vmatpush1.msra.mxu0 0.0
        %4537 = vmatprep.subr.mxu0 0.0
        %v4538 = vand.u32 %v2011, 4294901760
        %v4539 = vsub.f32 %v2011, %v4538
        %v4540 = vand.u32 %v4539, 4294901760
        %v4541 = vsub.f32 %v4539, %v4540
        %v4542 = vand.u32 %v4541, 4294901760
        %4543 = vmatpush1.msra.mxu0 %v4542
        %4544 = vmatprep.subr.mxu0 0.0
        %v4545 = vand.u32 %v2010, 4294901760
        %v4546 = vsub.f32 %v2010, %v4545
        %v4547 = vand.u32 %v4546, 4294901760
        %v4548 = vsub.f32 %v4546, %v4547
        %v4549 = vand.u32 %v4548, 4294901760
        %4550 = vmatpush1.msra.mxu0 %v4549
        %4551 = vmatprep.subr.mxu0 0.0
        %4552 = vmatpush2.msra.mxu0 0.0
        %4553 = vmatprep.subr.mxu0 0.0
        %4554 = vmatpush2.msra.mxu0 0.0
        %4555 = vmatprep.subr.mxu0 0.0
        %4556 = vmatpush2.msra.mxu0 0.0
        %4557 = vmatprep.subr.mxu0 0.0
        %4558 = vmatpush2.msra.mxu0 0.0
        %4559 = vmatprep.subr.mxu0 0.0
        %4560 = vmatpush2.msra.mxu0 0.0
        %4561 = vmatprep.subr.mxu0 0.0
        %4562 = vmatpush2.msra.mxu0 0.0
        %4563 = vmatprep.subr.mxu0 0.0
        %4564 = vmatpush2.msra.mxu0 0.0
        %4565 = vmatprep.subr.mxu0 0.0
        %4566 = vmatpush2.msra.mxu0 0.0
        %4567 = vmatprep.subr.mxu0 0.0
        %4568 = vmatpush2.msra.mxu0 0.0
        %4569 = vmatprep.subr.mxu0 0.0
        %4570 = vmatpush2.msra.mxu0 0.0
        %4571 = vmatprep.subr.mxu0 0.0
        %4572 = vmatpush2.msra.mxu0 0.0
        %4573 = vmatprep.subr.mxu0 0.0
        %4574 = vmatpush2.msra.mxu0 0.0
        %4575 = vmatprep.subr.mxu0 0.0
        %4576 = vmatpush2.msra.mxu0 0.0
        %4577 = vmatprep.subr.mxu0 0.0
        %4578 = vmatpush2.msra.mxu0 0.0
        %4579 = vmatprep.subr.mxu0 0.0
        %4580 = vmatpush2.msra.mxu0 0.0
        %4581 = vmatprep.subr.mxu0 0.0
        %4582 = vmatpush2.msra.mxu0 0.0
        %4583 = vmatprep.mubr.f32.mxu0 0.0
        %v4584 = vand.u32 %v4391, 4294901760
        %4585 = vmatmul.mubr.f32.gmra.mxu0 %v4584
        %v4586 = vpop.f32.mrf.mxu0
        %v4587 = vadd.f32 %v4476, %v4586
        %v4588 = vpop.f32.mrf.mxu0
        %4589 = vmatprep.mubr.f32.mxu0 0.0
        %v4590 = vand.u32 %v4394, 4294901760
        %4591 = vmatmul.mubr.f32.gmra.mxu0 %v4590
        %v4592 = vpop.f32.mrf.mxu0
        %v4593 = vadd.f32 %v4486, %v4592
        %v4594 = vpop.f32.mrf.mxu0
        %4595 = vmatprep.mubr.f32.mxu0 0.0
        %v4596 = vand.u32 %v4397, 4294901760
        %4597 = vmatmul.mubr.f32.gmra.mxu0 %v4596
        %v4598 = vpop.f32.mrf.mxu0
        %v4599 = vadd.f32 %v4496, %v4598
        %v4600 = vpop.f32.mrf.mxu0
        %4601 = vmatprep.mubr.f32.mxu0 0.0
        %v4602 = vand.u32 %v4400, 4294901760
        %4603 = vmatmul.mubr.f32.gmra.mxu0 %v4602
        %v4604 = vpop.f32.mrf.mxu0
        %v4605 = vadd.f32 %v4506, %v4604
        %v4606 = vpop.f32.mrf.mxu0
        %4607 = vdwg.mxu0
        %4608 = vmatprep.subr.mxu0 0.0
        %4609 = vmatpush1.msra.mxu0 0.0
        %4610 = vmatprep.subr.mxu0 0.0
        %4611 = vmatpush1.msra.mxu0 0.0
        %4612 = vmatprep.subr.mxu0 0.0
        %4613 = vmatpush1.msra.mxu0 0.0
        %4614 = vmatprep.subr.mxu0 0.0
        %4615 = vmatpush1.msra.mxu0 0.0
        %4616 = vmatprep.subr.mxu0 0.0
        %4617 = vmatpush1.msra.mxu0 0.0
        %4618 = vmatprep.subr.mxu0 0.0
        %4619 = vmatpush1.msra.mxu0 0.0
        %4620 = vmatprep.subr.mxu0 0.0
        %4621 = vmatpush1.msra.mxu0 0.0
        %4622 = vmatprep.subr.mxu0 0.0
        %4623 = vmatpush1.msra.mxu0 0.0
        %4624 = vmatprep.subr.mxu0 0.0
        %4625 = vmatpush1.msra.mxu0 0.0
        %4626 = vmatprep.subr.mxu0 0.0
        %4627 = vmatpush1.msra.mxu0 0.0
        %4628 = vmatprep.subr.mxu0 0.0
        %4629 = vmatpush1.msra.mxu0 0.0
        %4630 = vmatprep.subr.mxu0 0.0
        %4631 = vmatpush1.msra.mxu0 0.0
        %4632 = vmatprep.subr.mxu0 0.0
        %4633 = vmatpush1.msra.mxu0 0.0
        %4634 = vmatprep.subr.mxu0 0.0
        %4635 = vmatpush1.msra.mxu0 0.0
        %4636 = vmatprep.subr.mxu0 0.0
        %v4637 = vand.u32 %v2011, 4294901760
        %v4638 = vsub.f32 %v2011, %v4637
        %4639 = vmatpush1.msra.mxu0 %v4638
        %4640 = vmatprep.subr.mxu0 0.0
        %v4641 = vand.u32 %v2010, 4294901760
        %v4642 = vsub.f32 %v2010, %v4641
        %4643 = vmatpush1.msra.mxu0 %v4642
        %4644 = vmatprep.subr.mxu0 0.0
        %4645 = vmatpush2.msra.mxu0 0.0
        %4646 = vmatprep.subr.mxu0 0.0
        %4647 = vmatpush2.msra.mxu0 0.0
        %4648 = vmatprep.subr.mxu0 0.0
        %4649 = vmatpush2.msra.mxu0 0.0
        %4650 = vmatprep.subr.mxu0 0.0
        %4651 = vmatpush2.msra.mxu0 0.0
        %4652 = vmatprep.subr.mxu0 0.0
        %4653 = vmatpush2.msra.mxu0 0.0
        %4654 = vmatprep.subr.mxu0 0.0
        %4655 = vmatpush2.msra.mxu0 0.0
        %4656 = vmatprep.subr.mxu0 0.0
        %4657 = vmatpush2.msra.mxu0 0.0
        %4658 = vmatprep.subr.mxu0 0.0
        %4659 = vmatpush2.msra.mxu0 0.0
        %4660 = vmatprep.subr.mxu0 0.0
        %4661 = vmatpush2.msra.mxu0 0.0
        %4662 = vmatprep.subr.mxu0 0.0
        %4663 = vmatpush2.msra.mxu0 0.0
        %4664 = vmatprep.subr.mxu0 0.0
        %4665 = vmatpush2.msra.mxu0 0.0
        %4666 = vmatprep.subr.mxu0 0.0
        %4667 = vmatpush2.msra.mxu0 0.0
        %4668 = vmatprep.subr.mxu0 0.0
        %4669 = vmatpush2.msra.mxu0 0.0
        %4670 = vmatprep.subr.mxu0 0.0
        %4671 = vmatpush2.msra.mxu0 0.0
        %4672 = vmatprep.subr.mxu0 0.0
        %4673 = vmatpush2.msra.mxu0 0.0
        %4674 = vmatprep.subr.mxu0 0.0
        %4675 = vmatpush2.msra.mxu0 0.0
        %4676 = vmatprep.mubr.f32.mxu0 0.0
        %v4677 = vand.u32 %v4391, 4294901760
        %v4678 = vsub.f32 %v4391, %v4677
        %4679 = vmatmul.mubr.f32.gmra.mxu0 %v4678
        %v4680 = vpop.f32.mrf.mxu0
        %v4681 = vadd.f32 %v4587, %v4680
        %v4682 = vpop.f32.mrf.mxu0
        %4683 = vmatprep.mubr.f32.mxu0 0.0
        %v4684 = vand.u32 %v4394, 4294901760
        %v4685 = vsub.f32 %v4394, %v4684
        %4686 = vmatmul.mubr.f32.gmra.mxu0 %v4685
        %v4687 = vpop.f32.mrf.mxu0
        %v4688 = vadd.f32 %v4593, %v4687
        %v4689 = vpop.f32.mrf.mxu0
        %4690 = vmatprep.mubr.f32.mxu0 0.0
        %v4691 = vand.u32 %v4397, 4294901760
        %v4692 = vsub.f32 %v4397, %v4691
        %4693 = vmatmul.mubr.f32.gmra.mxu0 %v4692
        %v4694 = vpop.f32.mrf.mxu0
        %v4695 = vadd.f32 %v4599, %v4694
        %v4696 = vpop.f32.mrf.mxu0
        %4697 = vmatprep.mubr.f32.mxu0 0.0
        %v4698 = vand.u32 %v4400, 4294901760
        %v4699 = vsub.f32 %v4400, %v4698
        %4700 = vmatmul.mubr.f32.gmra.mxu0 %v4699
        %v4701 = vpop.f32.mrf.mxu0
        %v4702 = vadd.f32 %v4605, %v4701
        %v4703 = vpop.f32.mrf.mxu0
        %4704 = vdwg.mxu0
        %4705 = vmatprep.subr.mxu0 0.0
        %4706 = vmatpush1.msra.mxu0 0.0
        %4707 = vmatprep.subr.mxu0 0.0
        %4708 = vmatpush1.msra.mxu0 0.0
        %4709 = vmatprep.subr.mxu0 0.0
        %4710 = vmatpush1.msra.mxu0 0.0
        %4711 = vmatprep.subr.mxu0 0.0
        %4712 = vmatpush1.msra.mxu0 0.0
        %4713 = vmatprep.subr.mxu0 0.0
        %4714 = vmatpush1.msra.mxu0 0.0
        %4715 = vmatprep.subr.mxu0 0.0
        %4716 = vmatpush1.msra.mxu0 0.0
        %4717 = vmatprep.subr.mxu0 0.0
        %4718 = vmatpush1.msra.mxu0 0.0
        %4719 = vmatprep.subr.mxu0 0.0
        %4720 = vmatpush1.msra.mxu0 0.0
        %4721 = vmatprep.subr.mxu0 0.0
        %4722 = vmatpush1.msra.mxu0 0.0
        %4723 = vmatprep.subr.mxu0 0.0
        %4724 = vmatpush1.msra.mxu0 0.0
        %4725 = vmatprep.subr.mxu0 0.0
        %4726 = vmatpush1.msra.mxu0 0.0
        %4727 = vmatprep.subr.mxu0 0.0
        %4728 = vmatpush1.msra.mxu0 0.0
        %4729 = vmatprep.subr.mxu0 0.0
        %4730 = vmatpush1.msra.mxu0 0.0
        %4731 = vmatprep.subr.mxu0 0.0
        %4732 = vmatpush1.msra.mxu0 0.0
        %4733 = vmatprep.subr.mxu0 0.0
        %v4734 = vand.u32 %v2011, 4294901760
        %4735 = vmatpush1.msra.mxu0 %v4734
        %4736 = vmatprep.subr.mxu0 0.0
        %v4737 = vand.u32 %v2010, 4294901760
        %4738 = vmatpush1.msra.mxu0 %v4737
        %4739 = vmatprep.subr.mxu0 0.0
        %4740 = vmatpush2.msra.mxu0 0.0
        %4741 = vmatprep.subr.mxu0 0.0
        %4742 = vmatpush2.msra.mxu0 0.0
        %4743 = vmatprep.subr.mxu0 0.0
        %4744 = vmatpush2.msra.mxu0 0.0
        %4745 = vmatprep.subr.mxu0 0.0
        %4746 = vmatpush2.msra.mxu0 0.0
        %4747 = vmatprep.subr.mxu0 0.0
        %4748 = vmatpush2.msra.mxu0 0.0
        %4749 = vmatprep.subr.mxu0 0.0
        %4750 = vmatpush2.msra.mxu0 0.0
        %4751 = vmatprep.subr.mxu0 0.0
        %4752 = vmatpush2.msra.mxu0 0.0
        %4753 = vmatprep.subr.mxu0 0.0
        %4754 = vmatpush2.msra.mxu0 0.0
        %4755 = vmatprep.subr.mxu0 0.0
        %4756 = vmatpush2.msra.mxu0 0.0
        %4757 = vmatprep.subr.mxu0 0.0
        %4758 = vmatpush2.msra.mxu0 0.0
        %4759 = vmatprep.subr.mxu0 0.0
        %4760 = vmatpush2.msra.mxu0 0.0
        %4761 = vmatprep.subr.mxu0 0.0
        %4762 = vmatpush2.msra.mxu0 0.0
        %4763 = vmatprep.subr.mxu0 0.0
        %4764 = vmatpush2.msra.mxu0 0.0
        %4765 = vmatprep.subr.mxu0 0.0
        %4766 = vmatpush2.msra.mxu0 0.0
        %4767 = vmatprep.subr.mxu0 0.0
        %4768 = vmatpush2.msra.mxu0 0.0
        %4769 = vmatprep.subr.mxu0 0.0
        %4770 = vmatpush2.msra.mxu0 0.0
        %4771 = vmatprep.mubr.f32.mxu0 0.0
        %v4772 = vand.u32 %v4391, 4294901760
        %v4773 = vsub.f32 %v4391, %v4772
        %v4774 = vand.u32 %v4773, 4294901760
        %4775 = vmatmul.mubr.f32.gmra.mxu0 %v4774
        %v4776 = vpop.f32.mrf.mxu0
        %v4777 = vadd.f32 %v4681, %v4776
        %v4778 = vpop.f32.mrf.mxu0
        %4779 = vmatprep.mubr.f32.mxu0 0.0
        %v4780 = vand.u32 %v4394, 4294901760
        %v4781 = vsub.f32 %v4394, %v4780
        %v4782 = vand.u32 %v4781, 4294901760
        %4783 = vmatmul.mubr.f32.gmra.mxu0 %v4782
        %v4784 = vpop.f32.mrf.mxu0
        %v4785 = vadd.f32 %v4688, %v4784
        %v4786 = vpop.f32.mrf.mxu0
        %4787 = vmatprep.mubr.f32.mxu0 0.0
        %v4788 = vand.u32 %v4397, 4294901760
        %v4789 = vsub.f32 %v4397, %v4788
        %v4790 = vand.u32 %v4789, 4294901760
        %4791 = vmatmul.mubr.f32.gmra.mxu0 %v4790
        %v4792 = vpop.f32.mrf.mxu0
        %v4793 = vadd.f32 %v4695, %v4792
        %v4794 = vpop.f32.mrf.mxu0
        %4795 = vmatprep.mubr.f32.mxu0 0.0
        %v4796 = vand.u32 %v4400, 4294901760
        %v4797 = vsub.f32 %v4400, %v4796
        %v4798 = vand.u32 %v4797, 4294901760
        %4799 = vmatmul.mubr.f32.gmra.mxu0 %v4798
        %v4800 = vpop.f32.mrf.mxu0
        %v4801 = vadd.f32 %v4702, %v4800
        %v4802 = vpop.f32.mrf.mxu0
        %4803 = vdwg.mxu0
        %4804 = vmatprep.subr.mxu0 0.0
        %4805 = vmatpush1.msra.mxu0 0.0
        %4806 = vmatprep.subr.mxu0 0.0
        %4807 = vmatpush1.msra.mxu0 0.0
        %4808 = vmatprep.subr.mxu0 0.0
        %4809 = vmatpush1.msra.mxu0 0.0
        %4810 = vmatprep.subr.mxu0 0.0
        %4811 = vmatpush1.msra.mxu0 0.0
        %4812 = vmatprep.subr.mxu0 0.0
        %4813 = vmatpush1.msra.mxu0 0.0
        %4814 = vmatprep.subr.mxu0 0.0
        %4815 = vmatpush1.msra.mxu0 0.0
        %4816 = vmatprep.subr.mxu0 0.0
        %4817 = vmatpush1.msra.mxu0 0.0
        %4818 = vmatprep.subr.mxu0 0.0
        %4819 = vmatpush1.msra.mxu0 0.0
        %4820 = vmatprep.subr.mxu0 0.0
        %4821 = vmatpush1.msra.mxu0 0.0
        %4822 = vmatprep.subr.mxu0 0.0
        %4823 = vmatpush1.msra.mxu0 0.0
        %4824 = vmatprep.subr.mxu0 0.0
        %4825 = vmatpush1.msra.mxu0 0.0
        %4826 = vmatprep.subr.mxu0 0.0
        %4827 = vmatpush1.msra.mxu0 0.0
        %4828 = vmatprep.subr.mxu0 0.0
        %4829 = vmatpush1.msra.mxu0 0.0
        %4830 = vmatprep.subr.mxu0 0.0
        %4831 = vmatpush1.msra.mxu0 0.0
        %4832 = vmatprep.subr.mxu0 0.0
        %v4833 = vand.u32 %v2011, 4294901760
        %v4834 = vsub.f32 %v2011, %v4833
        %v4835 = vand.u32 %v4834, 4294901760
        %4836 = vmatpush1.msra.mxu0 %v4835
        %4837 = vmatprep.subr.mxu0 0.0
        %v4838 = vand.u32 %v2010, 4294901760
        %v4839 = vsub.f32 %v2010, %v4838
        %v4840 = vand.u32 %v4839, 4294901760
        %4841 = vmatpush1.msra.mxu0 %v4840
        %4842 = vmatprep.subr.mxu0 0.0
        %4843 = vmatpush2.msra.mxu0 0.0
        %4844 = vmatprep.subr.mxu0 0.0
        %4845 = vmatpush2.msra.mxu0 0.0
        %4846 = vmatprep.subr.mxu0 0.0
        %4847 = vmatpush2.msra.mxu0 0.0
        %4848 = vmatprep.subr.mxu0 0.0
        %4849 = vmatpush2.msra.mxu0 0.0
        %4850 = vmatprep.subr.mxu0 0.0
        %4851 = vmatpush2.msra.mxu0 0.0
        %4852 = vmatprep.subr.mxu0 0.0
        %4853 = vmatpush2.msra.mxu0 0.0
        %4854 = vmatprep.subr.mxu0 0.0
        %4855 = vmatpush2.msra.mxu0 0.0
        %4856 = vmatprep.subr.mxu0 0.0
        %4857 = vmatpush2.msra.mxu0 0.0
        %4858 = vmatprep.subr.mxu0 0.0
        %4859 = vmatpush2.msra.mxu0 0.0
        %4860 = vmatprep.subr.mxu0 0.0
        %4861 = vmatpush2.msra.mxu0 0.0
        %4862 = vmatprep.subr.mxu0 0.0
        %4863 = vmatpush2.msra.mxu0 0.0
        %4864 = vmatprep.subr.mxu0 0.0
        %4865 = vmatpush2.msra.mxu0 0.0
        %4866 = vmatprep.subr.mxu0 0.0
        %4867 = vmatpush2.msra.mxu0 0.0
        %4868 = vmatprep.subr.mxu0 0.0
        %4869 = vmatpush2.msra.mxu0 0.0
        %4870 = vmatprep.subr.mxu0 0.0
        %4871 = vmatpush2.msra.mxu0 0.0
        %4872 = vmatprep.subr.mxu0 0.0
        %4873 = vmatpush2.msra.mxu0 0.0
        %4874 = vmatprep.mubr.f32.mxu0 0.0
        %v4875 = vand.u32 %v4391, 4294901760
        %4876 = vmatmul.mubr.f32.gmra.mxu0 %v4875
        %v4877 = vpop.f32.mrf.mxu0
        %v4878 = vadd.f32 %v4777, %v4877
        %v4879 = vpop.f32.mrf.mxu0
        %4880 = vmatprep.mubr.f32.mxu0 0.0
        %v4881 = vand.u32 %v4394, 4294901760
        %4882 = vmatmul.mubr.f32.gmra.mxu0 %v4881
        %v4883 = vpop.f32.mrf.mxu0
        %v4884 = vadd.f32 %v4785, %v4883
        %v4885 = vpop.f32.mrf.mxu0
        %4886 = vmatprep.mubr.f32.mxu0 0.0
        %v4887 = vand.u32 %v4397, 4294901760
        %4888 = vmatmul.mubr.f32.gmra.mxu0 %v4887
        %v4889 = vpop.f32.mrf.mxu0
        %v4890 = vadd.f32 %v4793, %v4889
        %v4891 = vpop.f32.mrf.mxu0
        %4892 = vmatprep.mubr.f32.mxu0 0.0
        %v4893 = vand.u32 %v4400, 4294901760
        %4894 = vmatmul.mubr.f32.gmra.mxu0 %v4893
        %v4895 = vpop.f32.mrf.mxu0
        %v4896 = vadd.f32 %v4801, %v4895
        %v4897 = vpop.f32.mrf.mxu0
        %4898 = vdwg.mxu0
        %4899 = vmatprep.subr.mxu0 0.0
        %4900 = vmatpush1.msra.mxu0 0.0
        %4901 = vmatprep.subr.mxu0 0.0
        %4902 = vmatpush1.msra.mxu0 0.0
        %4903 = vmatprep.subr.mxu0 0.0
        %4904 = vmatpush1.msra.mxu0 0.0
        %4905 = vmatprep.subr.mxu0 0.0
        %4906 = vmatpush1.msra.mxu0 0.0
        %4907 = vmatprep.subr.mxu0 0.0
        %4908 = vmatpush1.msra.mxu0 0.0
        %4909 = vmatprep.subr.mxu0 0.0
        %4910 = vmatpush1.msra.mxu0 0.0
        %4911 = vmatprep.subr.mxu0 0.0
        %4912 = vmatpush1.msra.mxu0 0.0
        %4913 = vmatprep.subr.mxu0 0.0
        %4914 = vmatpush1.msra.mxu0 0.0
        %4915 = vmatprep.subr.mxu0 0.0
        %4916 = vmatpush1.msra.mxu0 0.0
        %4917 = vmatprep.subr.mxu0 0.0
        %4918 = vmatpush1.msra.mxu0 0.0
        %4919 = vmatprep.subr.mxu0 0.0
        %4920 = vmatpush1.msra.mxu0 0.0
        %4921 = vmatprep.subr.mxu0 0.0
        %4922 = vmatpush1.msra.mxu0 0.0
        %4923 = vmatprep.subr.mxu0 0.0
        %4924 = vmatpush1.msra.mxu0 0.0
        %4925 = vmatprep.subr.mxu0 0.0
        %4926 = vmatpush1.msra.mxu0 0.0
        %4927 = vmatprep.subr.mxu0 0.0
        %v4928 = vand.u32 %v2011, 4294901760
        %4929 = vmatpush1.msra.mxu0 %v4928
        %4930 = vmatprep.subr.mxu0 0.0
        %v4931 = vand.u32 %v2010, 4294901760
        %4932 = vmatpush1.msra.mxu0 %v4931
        %4933 = vmatprep.subr.mxu0 0.0
        %4934 = vmatpush2.msra.mxu0 0.0
        %4935 = vmatprep.subr.mxu0 0.0
        %4936 = vmatpush2.msra.mxu0 0.0
        %4937 = vmatprep.subr.mxu0 0.0
        %4938 = vmatpush2.msra.mxu0 0.0
        %4939 = vmatprep.subr.mxu0 0.0
        %4940 = vmatpush2.msra.mxu0 0.0
        %4941 = vmatprep.subr.mxu0 0.0
        %4942 = vmatpush2.msra.mxu0 0.0
        %4943 = vmatprep.subr.mxu0 0.0
        %4944 = vmatpush2.msra.mxu0 0.0
        %4945 = vmatprep.subr.mxu0 0.0
        %4946 = vmatpush2.msra.mxu0 0.0
        %4947 = vmatprep.subr.mxu0 0.0
        %4948 = vmatpush2.msra.mxu0 0.0
        %4949 = vmatprep.subr.mxu0 0.0
        %4950 = vmatpush2.msra.mxu0 0.0
        %4951 = vmatprep.subr.mxu0 0.0
        %4952 = vmatpush2.msra.mxu0 0.0
        %4953 = vmatprep.subr.mxu0 0.0
        %4954 = vmatpush2.msra.mxu0 0.0
        %4955 = vmatprep.subr.mxu0 0.0
        %4956 = vmatpush2.msra.mxu0 0.0
        %4957 = vmatprep.subr.mxu0 0.0
        %4958 = vmatpush2.msra.mxu0 0.0
        %4959 = vmatprep.subr.mxu0 0.0
        %4960 = vmatpush2.msra.mxu0 0.0
        %4961 = vmatprep.subr.mxu0 0.0
        %4962 = vmatpush2.msra.mxu0 0.0
        %4963 = vmatprep.subr.mxu0 0.0
        %4964 = vmatpush2.msra.mxu0 0.0
        %4965 = vmatprep.mubr.f32.mxu0 0.0
        %v4966 = vand.u32 %v4391, 4294901760
        %4967 = vmatmul.mubr.f32.gmra.mxu0 %v4966
        %v4968 = vpop.f32.mrf.mxu0
        %v4969 = vadd.f32 %v4878, %v4968
        %v4970 = vpop.f32.mrf.mxu0
        %4971 = vmatprep.mubr.f32.mxu0 0.0
        %v4972 = vand.u32 %v4394, 4294901760
        %4973 = vmatmul.mubr.f32.gmra.mxu0 %v4972
        %v4974 = vpop.f32.mrf.mxu0
        %v4975 = vadd.f32 %v4884, %v4974
        %v4976 = vpop.f32.mrf.mxu0
        %4977 = vmatprep.mubr.f32.mxu0 0.0
        %v4978 = vand.u32 %v4397, 4294901760
        %4979 = vmatmul.mubr.f32.gmra.mxu0 %v4978
        %v4980 = vpop.f32.mrf.mxu0
        %v4981 = vadd.f32 %v4890, %v4980
        %v4982 = vpop.f32.mrf.mxu0
        %4983 = vmatprep.mubr.f32.mxu0 0.0
        %v4984 = vand.u32 %v4400, 4294901760
        %4985 = vmatmul.mubr.f32.gmra.mxu0 %v4984
        %v4986 = vpop.f32.mrf.mxu0
        %v4987 = vadd.f32 %v4896, %v4986
        %v4988 = vpop.f32.mrf.mxu0
        %4989 = vdwg.mxu0
        %vm4990 = vcmask 261120
        %4991 = vst.msk [vmem:[%s163] sm:$0xff] %vm4990, %v4969
        %4992 = vst.msk [vmem:[%s163 + $0x8] sm:$0xff] %vm4990, %v4975
        %4993 = vst.msk [vmem:[%s163 + $0x10] sm:$0xff] %vm4990, %v4981
        %4994 = vst.msk [vmem:[%s163 + $0x18] sm:$0xff] %vm4990, %v4987
        %s4995 = sand.u32 %s93, 1
        %s4996 = scalar_lea.sflag [#allocation4], %s4995
        %s4997 = sand.u32 %s93, 1
        %s4998 = smul.addr %s4997, 32
        %s4999 = scalar_lea.vmem [#allocation3], %s4998
        // Predicated region
        $region33: #{tpu_custom_call.1} parent=31 // pred_check
          %p5000 = pneg %p103
        $region34: #{tpu_custom_call.1} parent=31 // pred_check_branch
          %5002 = sbr.rel (%p5000) target = $region36
        $region35: #{tpu_custom_call.1} parent=31 // pred_region
          %s5004 = ssub.s32 512, 512
          %5005 = vsyncadd %s4996, %s5004
          %s5006 = smul.addr %s17, 4
          %s5007 = smul.addr %s5006, 128
          %s5008 = scalar_lea.hbm %s3, %s5007
          %s5009 = sshll.u32 %s4999, 4
          %s5010 = int_to_ptr.vmem [resolvable:$true] %s5009
          %5015 = dma.vmem_to_hbm [thread:$0]  %s5010, 512, %s5008, %s4996, 128, 128, 8
        $region36: #{tpu_custom_call.1} parent=31 // pred_fallthru
          _
      $region32: #{tpu_custom_call.1} parent=5 // pred_fallthru
        _
      %p5016 = scmp.le.s32.totalorder 2, %s12
      // Predicated region
      $region37: #{tpu_custom_call.1} parent=5 // pred_check
        %p5017 = pneg %p5016
      $region38: #{tpu_custom_call.1} parent=5 // pred_check_branch
        %5019 = sbr.rel (%p5017) target = $region40
      $region39: #{tpu_custom_call.1} parent=5 // pred_region
        %s5020 = ssub.s32 %s12, 2
        // Predicated region
        $region41: #{tpu_custom_call.1} parent=39 // pred_check
          %p5021 = pneg %p109
        $region42: #{tpu_custom_call.1} parent=39 // pred_check_branch
          %5023 = sbr.rel (%p5021) target = $region44
        $region43: #{tpu_custom_call.1} parent=39 // pred_region
          %s5024 = sand.u32 %s94, 1
          %s5025 = scalar_lea.sflag [#allocation4], %s5024
          %s5026 = sand.u32 %s94, 1
          %s5027 = smul.addr %s5026, 32
          %s5028 = scalar_lea.vmem [#allocation3], %s5027
          %5029 = dma.done %s5025, 512
        $region44: #{tpu_custom_call.1} parent=39 // pred_fallthru
          _
      $region40: #{tpu_custom_call.1} parent=5 // pred_fallthru
        _
    $region6: #{tpu_custom_call.1} parent=1 // loop_footer
      %s16 = sadd.s32 1, %s12
    $region7: #{tpu_custom_call.1} parent=1 // loop_footer_branch
      %11 = sbr.rel target = $region3
    $region8: #{tpu_custom_call.1} parent=1 // loop_exit
      _
    %5030 = vsyncpa [#allocation4], 1
    %s5031 = scalar_lea.sflag [#allocation4], 1
    %5032 = vsyncpa %s5031, 1

</llo_original>
